<compile_context>
chip_gen: v5e
topology: v5e:2x2
jax: 0.10.0
libtpu: 0.0.40
codegen_flags: <defaults>
</compile_context>

<pallas_src>
import jax
import jax.numpy as jnp
from jax import lax
from jax.experimental import pallas as pl
from jax.experimental.pallas import tpu as pltpu

K_NSAMPLE = 4  # nsample=4 in the module


def _zr_kernel(feats_ref, pct_ref, wzr_ref, wzrx_ref, z_ref, r_ref, sels_ref):
    """Per (batch, center-tile): kNN selection + z/r gates."""
    f32 = jnp.float32
    feats = feats_ref[0].astype(f32)       # [Cin1, N]   rows = [h; x; pc; ones]
    pct = pct_ref[0].astype(f32)           # [T, 3]      this tile's center coords
    wzr = wzr_ref[...].astype(f32)         # [2C, Cin1]  bias folded; z rows then r rows
    wzrx = wzrx_ref[...].astype(f32)       # [2C, 3]     xyz part of the stacked weights

    Cin1, N = feats.shape
    T = pct.shape[0]
    Chid = wzr.shape[0] // 2

    pc_all = feats[Cin1 - 4:Cin1 - 1, :]                               # [3, N]

    # Project every source point ONCE; each neighbor is a column gather of p_zr.
    # (preferred_element_type pins the f32 accumulator; one-hots are exact.)
    p_zr = jnp.dot(wzr, feats, preferred_element_type=f32)             # [2C, N]
    cen_zr = lax.dot_general(wzrx, pct, (((1,), (1,)), ((), ())),
                             preferred_element_type=f32)               # [2C, T]

    # kNN scores for this tile's centers.  The per-row constant |p_i|^2 is
    # dropped (does not change per-row ordering).
    gram = lax.dot_general(pct, pc_all, (((1,), (0,)), ((), ())),
                           preferred_element_type=f32)                 # [T, N]
    norms = jnp.sum(pc_all * pc_all, axis=0, keepdims=True)            # [1, N]
    score = norms - 2.0 * gram                                         # [T, N]

    col = lax.broadcasted_iota(jnp.int32, (1, N), 1)                   # [1, N]
    col0 = pl.program_id(1) * T
    self_idx = col0 + lax.broadcasted_iota(jnp.int32, (T, 1), 0)       # [T, 1]
    INF = jnp.float32(jnp.inf)

    # k = 0 is the point itself (rel_xyz = 0); exclude it from the selection.
    remaining = jnp.where(col == self_idx, INF, score)
    sels = []
    for _ in range(K_NSAMPLE - 1):
        minval = jnp.min(remaining, axis=1, keepdims=True)             # [T, 1]
        cand = jnp.where(remaining <= minval, col, N)                  # lowest-index ties
        sel = jnp.min(cand, axis=1, keepdims=True)                     # [T, 1]
        remaining = jnp.where(col == sel, INF, remaining)
        sels.append(sel)

    # One fused gather matmul for all 4 neighbors (self + 3 selected).
    sel_all = jnp.concatenate([self_idx] + sels, axis=0)               # [4T, 1]
    onehot = (col == sel_all).astype(f32)                              # [4T, N]
    g = lax.dot_general(p_zr, onehot, (((1,), (1,)), ((), ())),
                        preferred_element_type=f32)                    # [2C, 4T]
    zr_max = jnp.maximum(jnp.maximum(g[:, :T], g[:, T:2 * T]),
                         jnp.maximum(g[:, 2 * T:3 * T], g[:, 3 * T:]))
    zr_pre = zr_max - cen_zr                                           # bias inside p_zr
    z_ref[0] = jax.nn.sigmoid(zr_pre[:Chid]).astype(z_ref.dtype)
    r_ref[0] = jax.nn.sigmoid(zr_pre[Chid:]).astype(r_ref.dtype)
    sels_ref[0] = jnp.concatenate(sels, axis=1)                        # [T, 3] int32


def _q_kernel(feats_ref, r_ref, z_ref, sels_ref, pct_ref, h_ref,
              wq_ref, wqx_ref, wqh_ref, o_ref):
    """Per (batch, center-tile): q gate (needs r over the full cloud) + GRU combine."""
    f32 = jnp.float32
    feats = feats_ref[0].astype(f32)       # [Cin1, N]
    r_full = r_ref[0].astype(f32)          # [Chid, N]
    z = z_ref[0].astype(f32)               # [Chid, T]
    sels = sels_ref[0]                     # [T, 3] int32
    pct = pct_ref[0].astype(f32)           # [T, 3]
    h_tile = h_ref[0].astype(f32)          # [Chid, T]
    wq = wq_ref[...].astype(f32)           # [Chid, Cin1]
    wqx = wqx_ref[...].astype(f32)         # [Chid, 3]
    wqh = wqh_ref[...].astype(f32)         # [Chid, Ch]

    Cin1, N = feats.shape
    T = pct.shape[0]
    Ch = wqh.shape[1]

    h_full = feats[:Ch, :]                                             # [Ch, N]
    # Linearity: W_q @ [r*h; x; pc; 1] == W_q @ [h; x; pc; 1] + W_q_h @ ((r-1)*h)
    p_q = (jnp.dot(wq, feats, preferred_element_type=f32)
           + jnp.dot(wqh, (r_full - 1.0) * h_full,
                     preferred_element_type=f32))                      # [Chid, N]
    cen_q = lax.dot_general(wqx, pct, (((1,), (1,)), ((), ())),
                            preferred_element_type=f32)                # [Chid, T]

    col = lax.broadcasted_iota(jnp.int32, (1, N), 1)
    col0 = pl.program_id(1) * T
    self_idx = col0 + lax.broadcasted_iota(jnp.int32, (T, 1), 0)
    sel_all = jnp.concatenate(
        [self_idx, sels[:, 0:1], sels[:, 1:2], sels[:, 2:3]], axis=0)  # [4T, 1]
    onehot = (col == sel_all).astype(f32)                              # [4T, N]
    g = lax.dot_general(p_q, onehot, (((1,), (1,)), ((), ())),
                        preferred_element_type=f32)                    # [Chid, 4T]
    q_max = jnp.maximum(jnp.maximum(g[:, :T], g[:, T:2 * T]),
                        jnp.maximum(g[:, 2 * T:3 * T], g[:, 3 * T:]))
    q = jnp.tanh(q_max - cen_q)

    o_ref[0] = ((1.0 - z) * h_tile + z * q).astype(o_ref.dtype)


def gru_forward(pc, h, x, params, tile=128):
    B, Ch, N = h.shape
    Cx = x.shape[1]
    Chid, fan_in = params["wz"].shape
    assert fan_in == 3 + Ch + Cx and Chid == Ch
    # TODO(synk): N < nsample would need neighbor repetition (as PyTorch does); guarded.
    assert N >= K_NSAMPLE, "need at least nsample points per cloud"
    tile = min(tile, N)
    assert tile % 128 == 0 and N % tile == 0, "center tile must be lane-dense"
    n_tiles = N // tile
    Cin1 = Ch + Cx + 3 + 1

    f32 = jnp.float32
    pc = pc.astype(f32)
    h = h.astype(f32)
    x = x.astype(f32)

    # feats = [h; x; pc; ones]  (h starts at sublane 0; bias folded via ones row).
    feats = jnp.concatenate([h, x, pc, jnp.ones((B, 1, N), f32)], axis=1)  # [B,Cin1,N]
    pct = jnp.transpose(pc, (0, 2, 1))                                     # [B, N, 3]

    def reorder(w, b):  # original cols [xyz | h | x] -> [h | x | xyz | bias]
        return jnp.concatenate([w[:, 3:3 + Ch], w[:, 3 + Ch:], w[:, :3], b], axis=1)

    wzr = jnp.concatenate([reorder(params["wz"], params["bz"]),
                           reorder(params["wr"], params["br"])], axis=0)   # [2C, Cin1]
    wzr_xyz = jnp.concatenate([params["wz"][:, :3], params["wr"][:, :3]], axis=0)
    wq = reorder(params["wq"], params["bq"])                               # [C, Cin1]
    wq_xyz = params["wq"][:, :3]
    wq_h = params["wq"][:, 3:3 + Ch]

    grid = (B, n_tiles)
    sem = ("parallel", "parallel")
    # Rough live-value estimate: projections + score/remaining + fused one-hot + feats.
    est = 4 * N * (2 * Chid + 7 * tile + 2 * Cin1 + 4 * Chid) + (2 << 20)
    # 48 MiB cap is safe on v7x (64 MiB physical / TC); v5e/v6e could go higher.
    vmem_limit = int(min(48 * 1024 * 1024, max(32 * 1024 * 1024, est)))

    cost_a = pl.CostEstimate(
        flops=int(B * n_tiles * (2 * (2 * Chid) * Cin1 * N + 2 * tile * 3 * N
                                 + 2 * (2 * Chid) * N * 4 * tile)),
        transcendentals=int(B * N * 2 * Chid),
        bytes_accessed=int(4 * B * (Cin1 * N + 2 * Chid * N + 6 * N)))
    z, r, sels = pl.pallas_call(
        _zr_kernel,
        out_shape=(jax.ShapeDtypeStruct((B, Chid, N), f32),
                   jax.ShapeDtypeStruct((B, Chid, N), f32),
                   jax.ShapeDtypeStruct((B, N, 3), jnp.int32)),
        grid_spec=pltpu.PrefetchScalarGridSpec(
            num_scalar_prefetch=0,
            grid=grid,
            in_specs=[
                pl.BlockSpec((1, Cin1, N), lambda b, t: (b, 0, 0)),     # full feats / batch
                pl.BlockSpec((1, tile, 3), lambda b, t: (b, t, 0)),     # center tile coords
                pl.BlockSpec((2 * Chid, Cin1), lambda b, t: (0, 0)),
                pl.BlockSpec((2 * Chid, 3), lambda b, t: (0, 0)),
            ],
            out_specs=[
                pl.BlockSpec((1, Chid, tile), lambda b, t: (b, 0, t)),
                pl.BlockSpec((1, Chid, tile), lambda b, t: (b, 0, t)),
                pl.BlockSpec((1, tile, 3), lambda b, t: (b, t, 0)),
            ]),
        compiler_params=pltpu.CompilerParams(
            dimension_semantics=sem, vmem_limit_bytes=vmem_limit),
        cost_estimate=cost_a,
    )(feats, pct, wzr, wzr_xyz)

    cost_b = pl.CostEstimate(
        flops=int(B * n_tiles * (2 * Chid * Cin1 * N + 2 * Chid * Ch * N
                                 + 2 * Chid * N * 4 * tile)),
        transcendentals=int(B * N * Chid),
        bytes_accessed=int(4 * B * (Cin1 * N + 3 * Chid * N + 7 * N)))
    out = pl.pallas_call(
        _q_kernel,
        out_shape=jax.ShapeDtypeStruct((B, Chid, N), f32),
        grid_spec=pltpu.PrefetchScalarGridSpec(
            num_scalar_prefetch=0,
            grid=grid,
            in_specs=[
                pl.BlockSpec((1, Cin1, N), lambda b, t: (b, 0, 0)),     # full feats / batch
                pl.BlockSpec((1, Chid, N), lambda b, t: (b, 0, 0)),     # full r / batch
                pl.BlockSpec((1, Chid, tile), lambda b, t: (b, 0, t)),  # z tile
                pl.BlockSpec((1, tile, 3), lambda b, t: (b, t, 0)),     # sels tile
                pl.BlockSpec((1, tile, 3), lambda b, t: (b, t, 0)),     # center coords
                pl.BlockSpec((1, Chid, tile), lambda b, t: (b, 0, t)),  # h tile (combine)
                pl.BlockSpec((Chid, Cin1), lambda b, t: (0, 0)),
                pl.BlockSpec((Chid, 3), lambda b, t: (0, 0)),
                pl.BlockSpec((Chid, Ch), lambda b, t: (0, 0)),
            ],
            out_specs=pl.BlockSpec((1, Chid, tile), lambda b, t: (b, 0, t))),
        compiler_params=pltpu.CompilerParams(
            dimension_semantics=sem, vmem_limit_bytes=vmem_limit),
        cost_estimate=cost_b,
    )(feats, r, z, sels, pct, h, wq, wq_xyz, wq_h)
    return out


def gru_reference(pc, h, x, params):
    """Pure-JAX reference of the same semantics."""
    def sa(pcb, feats, w, b):
        p = pcb.T                                                     # [N, 3]
        d2 = jnp.sum((p[:, None, :] - p[None, :, :]) ** 2, axis=-1)   # [N, N]
        idx = lax.top_k(-d2, K_NSAMPLE)[1]                            # [N, K]
        rel = p[idx] - p[:, None, :]                                  # [N, K, 3]
        g = feats.T[idx]                                              # [N, K, C]
        cat = jnp.concatenate([rel, g], axis=-1)                      # [N, K, 3+C]
        pre = jnp.einsum("nkc,oc->nko", cat, w) + b[:, 0]             # [N, K, O]
        return jnp.max(pre, axis=1).T                                 # [O, N]

    def one(pcb, hb, xb):
        hx = jnp.concatenate([hb, xb], axis=0)
        z = jax.nn.sigmoid(sa(pcb, hx, params["wz"], params["bz"]))
        r = jax.nn.sigmoid(sa(pcb, hx, params["wr"], params["br"]))
        q = jnp.tanh(sa(pcb, jnp.concatenate([r * hb, xb], axis=0),
                        params["wq"], params["bq"]))
        return (1.0 - z) * hb + z * q

    return jax.vmap(one)(pc, h, x)


if __name__ == "__main__":
    B, N = 2, 256                        # N = 2 lane-dense center tiles of 128
    hidden_dim, input_dim = 32, 16
    in_ch = hidden_dim + input_dim       # GRU: in_ch = hidden_dim + input_dim
    fan_in = 3 + in_ch                   # SA conv sees [rel_xyz | features]

    key = jax.random.PRNGKey(0)
    k_pc, k_h, k_x, k_wz, k_bz, k_wr, k_br, k_wq, k_bq = jax.random.split(key, 9)

    pc = jax.random.normal(k_pc, (B, 3, N), jnp.float32)
    h = jax.random.normal(k_h, (B, hidden_dim, N), jnp.float32)
    x = jax.random.normal(k_x, (B, input_dim, N), jnp.float32)

    bound = fan_in ** -0.5
    def u(k, shape):
        return jax.random.uniform(k, shape, jnp.float32, -bound, bound)

    params = dict(
        wz=u(k_wz, (hidden_dim, fan_in)), bz=u(k_bz, (hidden_dim, 1)),
        wr=u(k_wr, (hidden_dim, fan_in)), br=u(k_br, (hidden_dim, 1)),
        wq=u(k_wq, (hidden_dim, fan_in)), bq=u(k_bq, (hidden_dim, 1)),
    )

    out = jax.block_until_ready(gru_forward(pc, h, x, params, tile=128))

    ref = gru_reference(pc, h, x, params)
    err = float(jnp.max(jnp.abs(out - ref)))
    assert jnp.allclose(out, ref, atol=2e-3, rtol=2e-3), f"max abs err = {err}"
    print("KERNEL_OK")
</pallas_src>

<mosaic_0001>
module attributes {stable_mosaic.version = 11 : i64} {
  func.func @_zr_kernel(%arg0: i32, %arg1: i32, %arg2: memref<1x52x256xf32, #tpu.memory_space<vmem>>, %arg3: memref<1x128x3xf32, #tpu.memory_space<vmem>>, %arg4: memref<64x52xf32, #tpu.memory_space<vmem>>, %arg5: memref<64x3xf32, #tpu.memory_space<vmem>>, %arg6: memref<1x32x128xf32, #tpu.memory_space<vmem>>, %arg7: memref<1x32x128xf32, #tpu.memory_space<vmem>>, %arg8: memref<1x128x3xi32, #tpu.memory_space<vmem>>) attributes {dimension_semantics = [#tpu.dimension_semantics<parallel>, #tpu.dimension_semantics<parallel>], iteration_bounds = array<i64: 2, 2>, scalar_prefetch = 0 : i64, scratch_operands = 0 : i64, tpu.core_type = #tpu.core_type<tc>, window_params = [{transform_indices = @transform_0, window_bounds = array<i64: 1, 52, 256>}, {transform_indices = @transform_1, window_bounds = array<i64: 1, 128, 3>}, {pipeline_mode = #tpu.pipeline_mode<synchronous>, transform_indices = @transform_2, window_bounds = array<i64: 64, 52>}, {pipeline_mode = #tpu.pipeline_mode<synchronous>, transform_indices = @transform_3, window_bounds = array<i64: 64, 3>}, {transform_indices = @transform_4, window_bounds = array<i64: 1, 32, 128>}, {transform_indices = @transform_5, window_bounds = array<i64: 1, 32, 128>}, {transform_indices = @transform_6, window_bounds = array<i64: 1, 128, 3>}]} {
    %c0 = arith.constant 0 : index
    %c0_0 = arith.constant 0 : index
    %c0_1 = arith.constant 0 : index
    %0 = vector.load %arg2[%c0, %c0_0, %c0_1] : memref<1x52x256xf32, #tpu.memory_space<vmem>>, vector<1x52x256xf32>
    %1 = vector.shape_cast %0 : vector<1x52x256xf32> to vector<52x256xf32>
    %c0_2 = arith.constant 0 : index
    %c0_3 = arith.constant 0 : index
    %c0_4 = arith.constant 0 : index
    %2 = vector.load %arg3[%c0_2, %c0_3, %c0_4] : memref<1x128x3xf32, #tpu.memory_space<vmem>>, vector<1x128x3xf32>
    %3 = vector.shape_cast %2 : vector<1x128x3xf32> to vector<128x3xf32>
    %c0_5 = arith.constant 0 : index
    %c0_6 = arith.constant 0 : index
    %4 = vector.load %arg4[%c0_5, %c0_6] : memref<64x52xf32, #tpu.memory_space<vmem>>, vector<64x52xf32>
    %c0_7 = arith.constant 0 : index
    %c0_8 = arith.constant 0 : index
    %5 = vector.load %arg5[%c0_7, %c0_8] : memref<64x3xf32, #tpu.memory_space<vmem>>, vector<64x3xf32>
    %6 = vector.extract_strided_slice %1 {offsets = [48, 0], sizes = [3, 256], strides = [1, 1]} : vector<52x256xf32> to vector<3x256xf32>
    %cst = arith.constant dense<0.000000e+00> : vector<64x256xf32>
    %7 = tpu.matmul %4, %1, %cst {dimension_numbers = #tpu.dot_dimension_numbers<[1], [0], [0], [1], [0, 0, 1, 1], [], []>} : vector<64x52xf32>, vector<52x256xf32>, vector<64x256xf32> -> vector<64x256xf32>
    %cst_9 = arith.constant dense<0.000000e+00> : vector<64x128xf32>
    %8 = tpu.matmul %5, %3, %cst_9 {dimension_numbers = #tpu.dot_dimension_numbers<[1], [1], [0], [0], [0, 0, 1, 0], [], []>} : vector<64x3xf32>, vector<128x3xf32>, vector<64x128xf32> -> vector<64x128xf32>
    %cst_10 = arith.constant dense<0.000000e+00> : vector<128x256xf32>
    %9 = tpu.matmul %3, %6, %cst_10 {dimension_numbers = #tpu.dot_dimension_numbers<[1], [0], [0], [1], [0, 0, 1, 1], [], []>} : vector<128x3xf32>, vector<3x256xf32>, vector<128x256xf32> -> vector<128x256xf32>
    %10 = arith.mulf %6, %6 : vector<3x256xf32>
    %cst_11 = arith.constant dense<0.000000e+00> : vector<256xf32>
    %11 = vector.multi_reduction <add>, %10, %cst_11 [0] : vector<3x256xf32> to vector<256xf32>
    %12 = vector.shape_cast %11 : vector<256xf32> to vector<1x256xf32>
    %cst_12 = arith.constant 2.000000e+00 : f32
    %13 = vector.broadcast %cst_12 : f32 to vector<128x256xf32>
    %14 = arith.mulf %13, %9 : vector<128x256xf32>
    %15 = vector.broadcast %12 : vector<1x256xf32> to vector<128x256xf32>
    %16 = arith.subf %15, %14 : vector<128x256xf32>
    %17 = tpu.iota {dimensions = array<i32: 1>} : vector<1x256xi32>
    %c128_i32 = arith.constant 128 : i32
    %18 = arith.muli %arg1, %c128_i32 : i32
    %19 = tpu.iota {dimensions = array<i32: 0>} : vector<128x1xi32>
    %20 = vector.broadcast %18 : i32 to vector<128x1xi32>
    %21 = arith.addi %20, %19 : vector<128x1xi32>
    %22 = vector.broadcast %17 : vector<1x256xi32> to vector<128x256xi32>
    %23 = vector.broadcast %21 : vector<128x1xi32> to vector<128x256xi32>
    %24 = arith.cmpi eq, %22, %23 : vector<128x256xi32>
    %cst_13 = arith.constant 0x7F800000 : f32
    %25 = vector.broadcast %cst_13 : f32 to vector<128x256xf32>
    %26 = arith.select %24, %25, %16 : vector<128x256xi1>, vector<128x256xf32>
    %cst_14 = arith.constant dense<0x7F800000> : vector<128xf32>
    %27 = vector.multi_reduction <minimumf>, %26, %cst_14 [1] : vector<128x256xf32> to vector<128xf32>
    %28 = vector.shape_cast %27 : vector<128xf32> to vector<128x1xf32>
    %29 = vector.broadcast %28 : vector<128x1xf32> to vector<128x256xf32>
    %30 = arith.cmpf ole, %26, %29 : vector<128x256xf32>
    %c256_i32 = arith.constant 256 : i32
    %31 = vector.shape_cast %17 : vector<1x256xi32> to vector<1x256xi32>
    %32 = vector.broadcast %31 : vector<1x256xi32> to vector<128x256xi32>
    %33 = vector.broadcast %c256_i32 : i32 to vector<128x256xi32>
    %34 = arith.select %30, %32, %33 : vector<128x256xi1>, vector<128x256xi32>
    %cst_15 = arith.constant dense<2147483647> : vector<128xi32>
    %35 = vector.multi_reduction <minsi>, %34, %cst_15 [1] : vector<128x256xi32> to vector<128xi32>
    %36 = vector.shape_cast %35 : vector<128xi32> to vector<128x1xi32>
    %37 = vector.broadcast %17 : vector<1x256xi32> to vector<128x256xi32>
    %38 = vector.broadcast %36 : vector<128x1xi32> to vector<128x256xi32>
    %39 = arith.cmpi eq, %37, %38 : vector<128x256xi32>
    %cst_16 = arith.constant 0x7F800000 : f32
    %40 = vector.broadcast %cst_16 : f32 to vector<128x256xf32>
    %41 = arith.select %39, %40, %26 : vector<128x256xi1>, vector<128x256xf32>
    %cst_17 = arith.constant dense<0x7F800000> : vector<128xf32>
    %42 = vector.multi_reduction <minimumf>, %41, %cst_17 [1] : vector<128x256xf32> to vector<128xf32>
    %43 = vector.shape_cast %42 : vector<128xf32> to vector<128x1xf32>
    %44 = vector.broadcast %43 : vector<128x1xf32> to vector<128x256xf32>
    %45 = arith.cmpf ole, %41, %44 : vector<128x256xf32>
    %c256_i32_18 = arith.constant 256 : i32
    %46 = vector.shape_cast %17 : vector<1x256xi32> to vector<1x256xi32>
    %47 = vector.broadcast %46 : vector<1x256xi32> to vector<128x256xi32>
    %48 = vector.broadcast %c256_i32_18 : i32 to vector<128x256xi32>
    %49 = arith.select %45, %47, %48 : vector<128x256xi1>, vector<128x256xi32>
    %cst_19 = arith.constant dense<2147483647> : vector<128xi32>
    %50 = vector.multi_reduction <minsi>, %49, %cst_19 [1] : vector<128x256xi32> to vector<128xi32>
    %51 = vector.shape_cast %50 : vector<128xi32> to vector<128x1xi32>
    %52 = vector.broadcast %17 : vector<1x256xi32> to vector<128x256xi32>
    %53 = vector.broadcast %51 : vector<128x1xi32> to vector<128x256xi32>
    %54 = arith.cmpi eq, %52, %53 : vector<128x256xi32>
    %cst_20 = arith.constant 0x7F800000 : f32
    %55 = vector.broadcast %cst_20 : f32 to vector<128x256xf32>
    %56 = arith.select %54, %55, %41 : vector<128x256xi1>, vector<128x256xf32>
    %cst_21 = arith.constant dense<0x7F800000> : vector<128xf32>
    %57 = vector.multi_reduction <minimumf>, %56, %cst_21 [1] : vector<128x256xf32> to vector<128xf32>
    %58 = vector.shape_cast %57 : vector<128xf32> to vector<128x1xf32>
    %59 = vector.broadcast %58 : vector<128x1xf32> to vector<128x256xf32>
    %60 = arith.cmpf ole, %56, %59 : vector<128x256xf32>
    %c256_i32_22 = arith.constant 256 : i32
    %61 = vector.shape_cast %17 : vector<1x256xi32> to vector<1x256xi32>
    %62 = vector.broadcast %61 : vector<1x256xi32> to vector<128x256xi32>
    %63 = vector.broadcast %c256_i32_22 : i32 to vector<128x256xi32>
    %64 = arith.select %60, %62, %63 : vector<128x256xi1>, vector<128x256xi32>
    %cst_23 = arith.constant dense<2147483647> : vector<128xi32>
    %65 = vector.multi_reduction <minsi>, %64, %cst_23 [1] : vector<128x256xi32> to vector<128xi32>
    %66 = vector.shape_cast %65 : vector<128xi32> to vector<128x1xi32>
    %67 = tpu.concatenate %21, %36, %51, %66 in 0 : vector<128x1xi32>, vector<128x1xi32>, vector<128x1xi32>, vector<128x1xi32> -> vector<512x1xi32>
    %68 = vector.broadcast %17 : vector<1x256xi32> to vector<512x256xi32>
    %69 = vector.broadcast %67 : vector<512x1xi32> to vector<512x256xi32>
    %70 = arith.cmpi eq, %68, %69 : vector<512x256xi32>
    %71 = arith.extui %70 : vector<512x256xi1> to vector<512x256xi32>
    %72 = arith.sitofp %71 : vector<512x256xi32> to vector<512x256xf32>
    %cst_24 = arith.constant dense<0.000000e+00> : vector<64x512xf32>
    %73 = tpu.matmul %7, %72, %cst_24 {dimension_numbers = #tpu.dot_dimension_numbers<[1], [1], [0], [0], [0, 0, 1, 0], [], []>} : vector<64x256xf32>, vector<512x256xf32>, vector<64x512xf32> -> vector<64x512xf32>
    %74 = vector.extract_strided_slice %73 {offsets = [0, 0], sizes = [64, 128], strides = [1, 1]} : vector<64x512xf32> to vector<64x128xf32>
    %75 = vector.extract_strided_slice %73 {offsets = [0, 128], sizes = [64, 128], strides = [1, 1]} : vector<64x512xf32> to vector<64x128xf32>
    %76 = arith.maximumf %74, %75 : vector<64x128xf32>
    %77 = vector.extract_strided_slice %73 {offsets = [0, 256], sizes = [64, 128], strides = [1, 1]} : vector<64x512xf32> to vector<64x128xf32>
    %78 = vector.extract_strided_slice %73 {offsets = [0, 384], sizes = [64, 128], strides = [1, 1]} : vector<64x512xf32> to vector<64x128xf32>
    %79 = arith.maximumf %77, %78 : vector<64x128xf32>
    %80 = arith.maximumf %76, %79 : vector<64x128xf32>
    %81 = arith.subf %80, %8 : vector<64x128xf32>
    %82 = vector.extract_strided_slice %81 {offsets = [0, 0], sizes = [32, 128], strides = [1, 1]} : vector<64x128xf32> to vector<32x128xf32>
    %83 = arith.negf %82 : vector<32x128xf32>
    %84 = math.exp %83 : vector<32x128xf32>
    %cst_25 = arith.constant 1.000000e+00 : f32
    %85 = vector.broadcast %cst_25 : f32 to vector<32x128xf32>
    %86 = arith.addf %85, %84 : vector<32x128xf32>
    %87 = arith.divf %85, %86 : vector<32x128xf32>
    %c0_26 = arith.constant 0 : index
    %c0_27 = arith.constant 0 : index
    %c0_28 = arith.constant 0 : index
    %88 = vector.load %arg6[%c0_26, %c0_27, %c0_28] : memref<1x32x128xf32, #tpu.memory_space<vmem>>, vector<1x32x128xf32>
    %89 = vector.shape_cast %88 : vector<1x32x128xf32> to vector<32x128xf32>
    %90 = vector.shape_cast %87 : vector<32x128xf32> to vector<1x32x128xf32>
    tpu.vector_store %arg6[%c0_26, %c0_27, %c0_28], %90 {strides = array<i32>} : memref<1x32x128xf32, #tpu.memory_space<vmem>>, vector<1x32x128xf32>,
    %91 = vector.extract_strided_slice %81 {offsets = [32, 0], sizes = [32, 128], strides = [1, 1]} : vector<64x128xf32> to vector<32x128xf32>
    %92 = arith.negf %91 : vector<32x128xf32>
    %93 = math.exp %92 : vector<32x128xf32>
    %cst_29 = arith.constant 1.000000e+00 : f32
    %94 = vector.broadcast %cst_29 : f32 to vector<32x128xf32>
    %95 = arith.addf %94, %93 : vector<32x128xf32>
    %96 = arith.divf %94, %95 : vector<32x128xf32>
    %c0_30 = arith.constant 0 : index
    %c0_31 = arith.constant 0 : index
    %c0_32 = arith.constant 0 : index
    %97 = vector.load %arg7[%c0_30, %c0_31, %c0_32] : memref<1x32x128xf32, #tpu.memory_space<vmem>>, vector<1x32x128xf32>
    %98 = vector.shape_cast %97 : vector<1x32x128xf32> to vector<32x128xf32>
    %99 = vector.shape_cast %96 : vector<32x128xf32> to vector<1x32x128xf32>
    tpu.vector_store %arg7[%c0_30, %c0_31, %c0_32], %99 {strides = array<i32>} : memref<1x32x128xf32, #tpu.memory_space<vmem>>, vector<1x32x128xf32>,
    %100 = tpu.concatenate %36, %51, %66 in 1 : vector<128x1xi32>, vector<128x1xi32>, vector<128x1xi32> -> vector<128x3xi32>
    %c0_33 = arith.constant 0 : index
    %c0_34 = arith.constant 0 : index
    %c0_35 = arith.constant 0 : index
    %101 = vector.load %arg8[%c0_33, %c0_34, %c0_35] : memref<1x128x3xi32, #tpu.memory_space<vmem>>, vector<1x128x3xi32>
    %102 = vector.shape_cast %101 : vector<1x128x3xi32> to vector<128x3xi32>
    %103 = vector.shape_cast %100 : vector<128x3xi32> to vector<1x128x3xi32>
    tpu.vector_store %arg8[%c0_33, %c0_34, %c0_35], %103 {strides = array<i32>} : memref<1x128x3xi32, #tpu.memory_space<vmem>>, vector<1x128x3xi32>,
    return
  }
  func.func @transform_0(%arg0: i32, %arg1: i32) -> (i32, i32, i32) {
    %c0_i32 = arith.constant 0 : i32
    %c0_i32_0 = arith.constant 0 : i32
    %c0_i32_1 = arith.constant 0 : i32
    return %arg0, %c0_i32, %c0_i32_0 : i32, i32, i32
  }
  func.func @transform_1(%arg0: i32, %arg1: i32) -> (i32, i32, i32) {
    %c0_i32 = arith.constant 0 : i32
    %c0_i32_0 = arith.constant 0 : i32
    return %arg0, %arg1, %c0_i32 : i32, i32, i32
  }
  func.func @transform_2(%arg0: i32, %arg1: i32) -> (i32, i32) {
    %c0_i32 = arith.constant 0 : i32
    %c0_i32_0 = arith.constant 0 : i32
    %c0_i32_1 = arith.constant 0 : i32
    return %c0_i32, %c0_i32_0 : i32, i32
  }
  func.func @transform_3(%arg0: i32, %arg1: i32) -> (i32, i32) {
    %c0_i32 = arith.constant 0 : i32
    %c0_i32_0 = arith.constant 0 : i32
    %c0_i32_1 = arith.constant 0 : i32
    return %c0_i32, %c0_i32_0 : i32, i32
  }
  func.func @transform_4(%arg0: i32, %arg1: i32) -> (i32, i32, i32) {
    %c0_i32 = arith.constant 0 : i32
    %c0_i32_0 = arith.constant 0 : i32
    return %arg0, %c0_i32, %arg1 : i32, i32, i32
  }
  func.func @transform_5(%arg0: i32, %arg1: i32) -> (i32, i32, i32) {
    %c0_i32 = arith.constant 0 : i32
    %c0_i32_0 = arith.constant 0 : i32
    return %arg0, %c0_i32, %arg1 : i32, i32, i32
  }
  func.func @transform_6(%arg0: i32, %arg1: i32) -> (i32, i32, i32) {
    %c0_i32 = arith.constant 0 : i32
    %c0_i32_0 = arith.constant 0 : i32
    return %arg0, %arg1, %c0_i32 : i32, i32, i32
  }
}

</mosaic_0001>

<llo_original>
// kernel: tpu_custom_call.1
$region0: #{tpu_custom_call.1}
  #allocation0 [shape = 'u32[]', space=smem, size = 0x4, offset = 0x4, fixed_abs, tag = 'smem constant byte address 0x4 - core index']
  #allocation1 [shape = 'u32[72,128]{1,0:T(1,128)}', space=vmem, size = 0x9000, scoped, tag = 'internal scratch']
  %s0 = inlined_call_operand.vmem [shape: f32[2,52,256], index: 0, kind: input, shape index: {}]
  %s1 = inlined_call_operand.vmem [shape: f32[2,256,3], index: 1, kind: input, shape index: {}]
  %s2 = inlined_call_operand.vmem [shape: f32[64,52], index: 2, kind: input, shape index: {}]
  %s3 = inlined_call_operand.vmem [shape: f32[64,3], index: 3, kind: input, shape index: {}]
  %s4 = inlined_call_operand.hbm [shape: f32[2,32,256], index: 4, kind: output, shape index: {0}]
  %s5 = inlined_call_operand.hbm [shape: f32[2,32,256], index: 5, kind: output, shape index: {1}]
  %s6 = inlined_call_operand.vmem [shape: s32[2,256,3], index: 6, kind: output, shape index: {2}]
  %7 = xla_tuple %s4, %s5, %s6
  %s8 = sld [smem:[#allocation0]]
  $region65: #{tpu_custom_call.1} parent=0
    _
  %s10 = ssub.s32 1, %s8
  %s11 = scalar_select 0, %s10, %s8
  $region1: #{tpu_custom_call.1} parent=0
    #allocation2 [shape = 'u8[32768]{0}', space=vmem, size = 0x8000, scoped, tag = 'output window, operand 0']
    #allocation3 [shape = 's32[2]{0}', space=sflag, size = 0x8, scoped, tag = 'scoped memory for tpu_custom_call.1']
    #allocation4 [shape = 'u8[32768]{0}', space=vmem, size = 0x8000, scoped, tag = 'output window, operand 1']
    #allocation5 [shape = 's32[2]{0}', space=sflag, size = 0x8, scoped, tag = 'scoped memory for tpu_custom_call.1']
    %12 = vsyncpa [#allocation3], 0
    %s13 = scalar_lea.sflag [#allocation3], 1
    %14 = vsyncpa %s13, 0
    %15 = vsyncpa [#allocation5], 0
    %s16 = scalar_lea.sflag [#allocation5], 1
    %17 = vsyncpa %s16, 0
    loop: start=0, step=1, limit=6
    $region2: #{tpu_custom_call.1} parent=1 // loop_pre_header
      _
    $region3: #{tpu_custom_call.1} parent=1 // loop_header
      %s19 = sphi 0, %s23
      %p20 = scmp.ge.s32.totalorder %s19, 6
      %s26 = sphi 0, %s38
      %s27 = sphi 0, %s34
      %s28 = sphi 0, %s26
      %s29 = sphi 0, %s27
      %s30 = sphi 0, %s28
      %s31 = sphi 0, %s29
      %s41 = sphi 0, %s43
      %s44 = sphi 0, %s41
      %s45 = sphi 0, %s44
      %s61 = sphi 0, %s45
      %s69 = sphi 0, %s71
      %s72 = sphi 0, %s69
      %s73 = sphi 0, %s72
      %s89 = sphi 0, %s73
      %s93 = sphi 0, %s93
      %s95 = sphi 0, %s93
      %s96 = sphi 0, %s95
      %s110 = sphi 0, %s96
      %s114 = sphi 0, %s114
      %s116 = sphi 0, %s114
      %s117 = sphi 0, %s116
      %s131 = sphi 0, %s117
      %s139 = sphi 0, %s141
      %s142 = sphi 0, %s139
      %s143 = sphi 0, %s142
      %s159 = sphi 0, %s143
      %s167 = sphi 0, %s169
      %s170 = sphi 0, %s167
      %s171 = sphi 0, %s170
      %s187 = sphi 0, %s171
      %s195 = sphi 0, %s197
      %s198 = sphi 0, %s195
      %s199 = sphi 0, %s198
      %s215 = sphi 0, %s199
    $region4: #{tpu_custom_call.1} parent=1 // loop_header_branch
      %22 = sbr.rel (%p20) target = $region8
    $region5: #{tpu_custom_call.1} parent=1 // loop_body
      %s24 = ssub.s32 %s19, 1
      %s25 = ssub.s32 %s19, 2
      %s32 = sadd.s32 1, %s27
      %p33 = scmp.ge.s32.totalorder %s32, 2
      %s34 = scalar_select %p33, 0, %s32
      %s35 = sadd.s32 1, %s26
      %s36 = scalar_select %p33, %s35, %s26
      %p37 = scmp.ge.s32.totalorder %s36, 2
      %s38 = scalar_select %p37, 0, %s36
      %s39 = ssub.s32 %s26, %s38
      %p40 = scmp.eq.s32.totalorder %s39, 0
      %s42 = sadd.s32 %s41, 1
      %s43 = scalar_select %p40, %s41, %s42
      %p46 = pneg %p40
      %p47 = scmp.eq.s32.totalorder %s19, 3
      %p48 = por %p46, %p47
      %p49 = scmp.ne.s32.totalorder %s41, %s44
      %p50 = scmp.eq.s32.totalorder %s19, 0
      %p51 = por %p49, %p50
      %p52 = scmp.ne.s32.totalorder %s41, %s44
      %p53 = scmp.eq.s32.totalorder %s24, 3
      %p54 = por %p52, %p53
      %p55 = scmp.ne.s32.totalorder %s44, %s45
      %p56 = scmp.eq.s32.totalorder %s24, 0
      %p57 = por %p55, %p56
      %p58 = scmp.ne.s32.totalorder %s44, %s45
      %p59 = scmp.eq.s32.totalorder %s25, 3
      %p60 = por %p58, %p59
      %p62 = scmp.ne.s32.totalorder %s45, %s61
      %p63 = scmp.eq.s32.totalorder %s25, 0
      %p64 = por %p62, %p63
      %s65 = ssub.s32 %s26, %s38
      %s66 = ssub.s32 %s27, %s34
      %s67 = sor.u32 %s65, %s66
      %p68 = scmp.eq.s32.totalorder %s67, 0
      %s70 = sadd.s32 %s69, 1
      %s71 = scalar_select %p68, %s69, %s70
      %p74 = pneg %p68
      %p75 = scmp.eq.s32.totalorder %s19, 3
      %p76 = por %p74, %p75
      %p77 = scmp.ne.s32.totalorder %s69, %s72
      %p78 = scmp.eq.s32.totalorder %s19, 0
      %p79 = por %p77, %p78
      %p80 = scmp.ne.s32.totalorder %s69, %s72
      %p81 = scmp.eq.s32.totalorder %s24, 3
      %p82 = por %p80, %p81
      %p83 = scmp.ne.s32.totalorder %s72, %s73
      %p84 = scmp.eq.s32.totalorder %s24, 0
      %p85 = por %p83, %p84
      %p86 = scmp.ne.s32.totalorder %s72, %s73
      %p87 = scmp.eq.s32.totalorder %s25, 3
      %p88 = por %p86, %p87
      %p90 = scmp.ne.s32.totalorder %s73, %s89
      %p91 = scmp.eq.s32.totalorder %s25, 0
      %p92 = por %p90, %p91
      %s94 = sadd.s32 %s93, 1
      %p97 = scmp.eq.s32.totalorder %s19, 3
      %p98 = scmp.ne.s32.totalorder %s93, %s95
      %p99 = scmp.eq.s32.totalorder %s19, 0
      %p100 = por %p98, %p99
      %p101 = scmp.ne.s32.totalorder %s93, %s95
      %p102 = scmp.eq.s32.totalorder %s24, 3
      %p103 = por %p101, %p102
      %p104 = scmp.ne.s32.totalorder %s95, %s96
      %p105 = scmp.eq.s32.totalorder %s24, 0
      %p106 = por %p104, %p105
      %p107 = scmp.ne.s32.totalorder %s95, %s96
      %p108 = scmp.eq.s32.totalorder %s25, 3
      %p109 = por %p107, %p108
      %p111 = scmp.ne.s32.totalorder %s96, %s110
      %p112 = scmp.eq.s32.totalorder %s25, 0
      %p113 = por %p111, %p112
      %s115 = sadd.s32 %s114, 1
      %p118 = scmp.eq.s32.totalorder %s19, 3
      %p119 = scmp.ne.s32.totalorder %s114, %s116
      %p120 = scmp.eq.s32.totalorder %s19, 0
      %p121 = por %p119, %p120
      %p122 = scmp.ne.s32.totalorder %s114, %s116
      %p123 = scmp.eq.s32.totalorder %s24, 3
      %p124 = por %p122, %p123
      %p125 = scmp.ne.s32.totalorder %s116, %s117
      %p126 = scmp.eq.s32.totalorder %s24, 0
      %p127 = por %p125, %p126
      %p128 = scmp.ne.s32.totalorder %s116, %s117
      %p129 = scmp.eq.s32.totalorder %s25, 3
      %p130 = por %p128, %p129
      %p132 = scmp.ne.s32.totalorder %s117, %s131
      %p133 = scmp.eq.s32.totalorder %s25, 0
      %p134 = por %p132, %p133
      %s135 = ssub.s32 %s26, %s38
      %s136 = ssub.s32 %s27, %s34
      %s137 = sor.u32 %s135, %s136
      %p138 = scmp.eq.s32.totalorder %s137, 0
      %s140 = sadd.s32 %s139, 1
      %s141 = scalar_select %p138, %s139, %s140
      %p144 = pneg %p138
      %p145 = scmp.eq.s32.totalorder %s19, 3
      %p146 = por %p144, %p145
      %p147 = scmp.ne.s32.totalorder %s139, %s142
      %p148 = scmp.eq.s32.totalorder %s19, 0
      %p149 = por %p147, %p148
      %p150 = scmp.ne.s32.totalorder %s139, %s142
      %p151 = scmp.eq.s32.totalorder %s24, 3
      %p152 = por %p150, %p151
      %p153 = scmp.ne.s32.totalorder %s142, %s143
      %p154 = scmp.eq.s32.totalorder %s24, 0
      %p155 = por %p153, %p154
      %p156 = scmp.ne.s32.totalorder %s142, %s143
      %p157 = scmp.eq.s32.totalorder %s25, 3
      %p158 = por %p156, %p157
      %p160 = scmp.ne.s32.totalorder %s143, %s159
      %p161 = scmp.eq.s32.totalorder %s25, 0
      %p162 = por %p160, %p161
      %s163 = ssub.s32 %s26, %s38
      %s164 = ssub.s32 %s27, %s34
      %s165 = sor.u32 %s163, %s164
      %p166 = scmp.eq.s32.totalorder %s165, 0
      %s168 = sadd.s32 %s167, 1
      %s169 = scalar_select %p166, %s167, %s168
      %p172 = pneg %p166
      %p173 = scmp.eq.s32.totalorder %s19, 3
      %p174 = por %p172, %p173
      %p175 = scmp.ne.s32.totalorder %s167, %s170
      %p176 = scmp.eq.s32.totalorder %s19, 0
      %p177 = por %p175, %p176
      %p178 = scmp.ne.s32.totalorder %s167, %s170
      %p179 = scmp.eq.s32.totalorder %s24, 3
      %p180 = por %p178, %p179
      %p181 = scmp.ne.s32.totalorder %s170, %s171
      %p182 = scmp.eq.s32.totalorder %s24, 0
      %p183 = por %p181, %p182
      %p184 = scmp.ne.s32.totalorder %s170, %s171
      %p185 = scmp.eq.s32.totalorder %s25, 3
      %p186 = por %p184, %p185
      %p188 = scmp.ne.s32.totalorder %s171, %s187
      %p189 = scmp.eq.s32.totalorder %s25, 0
      %p190 = por %p188, %p189
      %s191 = ssub.s32 %s26, %s38
      %s192 = ssub.s32 %s27, %s34
      %s193 = sor.u32 %s191, %s192
      %p194 = scmp.eq.s32.totalorder %s193, 0
      %s196 = sadd.s32 %s195, 1
      %s197 = scalar_select %p194, %s195, %s196
      %p200 = pneg %p194
      %p201 = scmp.eq.s32.totalorder %s19, 3
      %p202 = por %p200, %p201
      %p203 = scmp.ne.s32.totalorder %s195, %s198
      %p204 = scmp.eq.s32.totalorder %s19, 0
      %p205 = por %p203, %p204
      %p206 = scmp.ne.s32.totalorder %s195, %s198
      %p207 = scmp.eq.s32.totalorder %s24, 3
      %p208 = por %p206, %p207
      %p209 = scmp.ne.s32.totalorder %s198, %s199
      %p210 = scmp.eq.s32.totalorder %s24, 0
      %p211 = por %p209, %p210
      %p212 = scmp.ne.s32.totalorder %s198, %s199
      %p213 = scmp.eq.s32.totalorder %s25, 3
      %p214 = por %p212, %p213
      %p216 = scmp.ne.s32.totalorder %s199, %s215
      %p217 = scmp.eq.s32.totalorder %s25, 0
      %p218 = por %p216, %p217
      %p219 = scmp.le.s32.totalorder 1, %s19
      %p220 = scmp.lt.s32.totalorder %s19, 5
      %p221 = pnand %p219, %p220
      %p222 = pneg %p221
      // Predicated region
      $region9: #{tpu_custom_call.1} parent=5 // pred_check
        _
      $region10: #{tpu_custom_call.1} parent=5 // pred_check_branch
        %224 = sbr.rel (%p221) target = $region12
      $region11: #{tpu_custom_call.1} parent=5 // pred_region
        %s225 = ssub.s32 %s19, 1
        // Predicated region
        $region13: #{tpu_custom_call.1} parent=11 // pred_check
          %p226 = pneg %p106
        $region14: #{tpu_custom_call.1} parent=11 // pred_check_branch
          %228 = sbr.rel (%p226) target = $region16
        $region15: #{tpu_custom_call.1} parent=11 // pred_region
          _
        $region16: #{tpu_custom_call.1} parent=11 // pred_fallthru
          _
        // Predicated region
        $region17: #{tpu_custom_call.1} parent=11 // pred_check
          %p229 = pneg %p127
        $region18: #{tpu_custom_call.1} parent=11 // pred_check_branch
          %231 = sbr.rel (%p229) target = $region20
        $region19: #{tpu_custom_call.1} parent=11 // pred_region
          _
        $region20: #{tpu_custom_call.1} parent=11 // pred_fallthru
          _
      $region12: #{tpu_custom_call.1} parent=5 // pred_fallthru
        _
      %p232 = scmp.lt.s32.totalorder %s19, 4
      // Predicated region
      $region21: #{tpu_custom_call.1} parent=5 // pred_check
        %p233 = pneg %p232
      $region22: #{tpu_custom_call.1} parent=5 // pred_check_branch
        %235 = sbr.rel (%p233) target = $region24
      $region23: #{tpu_custom_call.1} parent=5 // pred_region
        // Predicated region
        $region25: #{tpu_custom_call.1} parent=23 // pred_check
          %p236 = pneg %p51
        $region26: #{tpu_custom_call.1} parent=23 // pred_check_branch
          %238 = sbr.rel (%p236) target = $region28
        $region27: #{tpu_custom_call.1} parent=23 // pred_region
          %p239 = scmp.lt.s32.totalorder %s26, 1
          %s240 = scalar_select %p239, %s26, 1
          %s241 = smul.addr %s240, 14
          %s242 = smul.addr %s241, 8
          %s243 = scalar_lea.vmem %s0, %s242
        $region28: #{tpu_custom_call.1} parent=23 // pred_fallthru
          _
        // Predicated region
        $region29: #{tpu_custom_call.1} parent=23 // pred_check
          %p244 = pneg %p79
        $region30: #{tpu_custom_call.1} parent=23 // pred_check_branch
          %246 = sbr.rel (%p244) target = $region32
        $region31: #{tpu_custom_call.1} parent=23 // pred_region
          %s247 = smul.u32 16, %s27
          %p248 = scmp.lt.s32.totalorder %s26, 1
          %s249 = scalar_select %p248, %s26, 1
          %p250 = scmp.lt.s32.totalorder %s247, 31
          %s251 = scalar_select %p250, %s247, 31
          %s252 = smul.addr %s249, 32
          %s253 = sadd.s32 %s251, %s252
          %s254 = smul.addr %s253, 8
          %s255 = scalar_lea.vmem %s1, %s254
          %s256 = smul.u32 16, %s27
        $region32: #{tpu_custom_call.1} parent=23 // pred_fallthru
          _
      $region24: #{tpu_custom_call.1} parent=5 // pred_fallthru
        _
      %p257 = scmp.le.s32.totalorder 1, %s19
      %p258 = scmp.lt.s32.totalorder %s19, 5
      %p259 = pnand %p257, %p258
      %p260 = pneg %p259
      // Predicated region
      $region33: #{tpu_custom_call.1} parent=5 // pred_check
        _
      $region34: #{tpu_custom_call.1} parent=5 // pred_check_branch
        %262 = sbr.rel (%p259) target = $region36
      $region35: #{tpu_custom_call.1} parent=5 // pred_region
        %s263 = ssub.s32 %s19, 1
        %p264 = scmp.lt.s32.totalorder %s28, 1
        %s265 = scalar_select %p264, %s28, 1
        %s266 = smul.addr %s265, 14
        %s267 = smul.addr %s266, 8
        %s268 = scalar_lea.vmem %s0, %s267
        %p269 = pneg %p57
        %p270 = pneg %p54
        %s271 = smul.u32 16, %s29
        %p272 = scmp.lt.s32.totalorder %s28, 1
        %s273 = scalar_select %p272, %s28, 1
        %p274 = scmp.lt.s32.totalorder %s271, 31
        %s275 = scalar_select %p274, %s271, 31
        %s276 = smul.addr %s273, 32
        %s277 = sadd.s32 %s275, %s276
        %s278 = smul.addr %s277, 8
        %s279 = scalar_lea.vmem %s1, %s278
        %p280 = pneg %p85
        %p281 = pneg %p82
        %p282 = pneg %p106
        %p283 = pneg %p103
        %p284 = pneg %p127
        %p285 = pneg %p124
        %p286 = pneg %p155
        %p287 = pneg %p152
        %s288 = sand.u32 %s142, 1
        %s289 = scalar_lea.sflag [#allocation3], %s288
        %s290 = sand.u32 %s142, 1
        %s291 = smul.addr %s290, 32
        %s292 = scalar_lea.vmem [#allocation2], %s291
        %p293 = pneg %p183
        %p294 = pneg %p180
        %s295 = sand.u32 %s170, 1
        %s296 = scalar_lea.sflag [#allocation5], %s295
        %s297 = sand.u32 %s170, 1
        %s298 = smul.addr %s297, 32
        %s299 = scalar_lea.vmem [#allocation4], %s298
        %p300 = pneg %p211
        %p301 = pneg %p208
        %s302 = smul.u32 16, %s29
        %p303 = scmp.lt.s32.totalorder %s28, 1
        %s304 = scalar_select %p303, %s28, 1
        %p305 = scmp.lt.s32.totalorder %s302, 31
        %s306 = scalar_select %p305, %s302, 31
        %s307 = smul.addr %s304, 32
        %s308 = sadd.s32 %s306, %s307
        %s309 = smul.addr %s308, 8
        %s310 = scalar_lea.vmem %s6, %s309
        %p311 = scmp.lt.s32.totalorder %s28, 1
        %s312 = scalar_select %p311, %s28, 1
        %s313 = smul.addr %s312, 14
        %s314 = smul.addr %s313, 8
        %s315 = scalar_lea.vmem %s0, %s314
        %s316 = smul.u32 16, %s29
        %p317 = scmp.lt.s32.totalorder %s28, 1
        %s318 = scalar_select %p317, %s28, 1
        %p319 = scmp.lt.s32.totalorder %s316, 31
        %s320 = scalar_select %p319, %s316, 31
        %s321 = smul.addr %s318, 32
        %s322 = sadd.s32 %s320, %s321
        %s323 = smul.addr %s322, 8
        %s324 = scalar_lea.vmem %s1, %s323
        %s325 = smul.u32 16, %s29
        %s326 = smul.u32 16, %s29
        %p327 = scmp.lt.s32.totalorder %s28, 1
        %s328 = scalar_select %p327, %s28, 1
        %p329 = scmp.lt.s32.totalorder %s326, 31
        %s330 = scalar_select %p329, %s326, 31
        %s331 = smul.addr %s328, 32
        %s332 = sadd.s32 %s330, %s331
        %s333 = smul.addr %s332, 8
        %s334 = scalar_lea.vmem %s6, %s333
        %s335 = smul.u32 16, %s29
        %v336 = vld [vmem:[%s315] sm:$0xff]
        %v337 = vld [vmem:[%s315 + $0x8] sm:$0xff]
        %v338 = vld [vmem:[%s315 + $0x10] sm:$0xff]
        %v339 = vld [vmem:[%s315 + $0x18] sm:$0xff]
        %v340 = vld [vmem:[%s315 + $0x20] sm:$0xff]
        %v341 = vld [vmem:[%s315 + $0x28] sm:$0xff]
        %v342 = vld [vmem:[%s315 + $0x30] sm:$0xff]
        %v343 = vld [vmem:[%s315 + $0x38] sm:$0xff]
        %v344 = vld [vmem:[%s315 + $0x40] sm:$0xff]
        %v345 = vld [vmem:[%s315 + $0x48] sm:$0xff]
        %v346 = vld [vmem:[%s315 + $0x50] sm:$0xff]
        %v347 = vld [vmem:[%s315 + $0x58] sm:$0xff]
        %v348 = vld [vmem:[%s315 + $0x60] sm:$0xf]
        %v349 = vld [vmem:[%s315 + $0x68] sm:$0xf]
        %v350 = vld [vmem:[%s324] sm:$0xff]
        %v351 = vld [vmem:[%s324 + $0x8] sm:$0xff]
        %v352 = vld [vmem:[%s324 + $0x10] sm:$0xff]
        %v353 = vld [vmem:[%s324 + $0x18] sm:$0xff]
        %v354 = vld [vmem:[%s324 + $0x20] sm:$0xff]
        %v355 = vld [vmem:[%s324 + $0x28] sm:$0xff]
        %v356 = vld [vmem:[%s324 + $0x30] sm:$0xff]
        %v357 = vld [vmem:[%s324 + $0x38] sm:$0xff]
        %v358 = vld [vmem:[%s324 + $0x40] sm:$0xff]
        %v359 = vld [vmem:[%s324 + $0x48] sm:$0xff]
        %v360 = vld [vmem:[%s324 + $0x50] sm:$0xff]
        %v361 = vld [vmem:[%s324 + $0x58] sm:$0xff]
        %v362 = vld [vmem:[%s324 + $0x60] sm:$0xff]
        %v363 = vld [vmem:[%s324 + $0x68] sm:$0xff]
        %v364 = vld [vmem:[%s324 + $0x70] sm:$0xff]
        %v365 = vld [vmem:[%s324 + $0x78] sm:$0xff]
        %v366 = vld [vmem:[%s2] sm:$0xff]
        %v367 = vld [vmem:[%s2 + $0x8] sm:$0xff]
        %v368 = vld [vmem:[%s2 + $0x10] sm:$0xff]
        %v369 = vld [vmem:[%s2 + $0x18] sm:$0xff]
        %v370 = vld [vmem:[%s2 + $0x20] sm:$0xff]
        %v371 = vld [vmem:[%s2 + $0x28] sm:$0xff]
        %v372 = vld [vmem:[%s2 + $0x30] sm:$0xff]
        %v373 = vld [vmem:[%s2 + $0x38] sm:$0xff]
        %v374 = vld [vmem:[%s3] sm:$0xff]
        %v375 = vld [vmem:[%s3 + $0x8] sm:$0xff]
        %v376 = vld [vmem:[%s3 + $0x10] sm:$0xff]
        %v377 = vld [vmem:[%s3 + $0x18] sm:$0xff]
        %v378 = vld [vmem:[%s3 + $0x20] sm:$0xff]
        %v379 = vld [vmem:[%s3 + $0x28] sm:$0xff]
        %v380 = vld [vmem:[%s3 + $0x30] sm:$0xff]
        %v381 = vld [vmem:[%s3 + $0x38] sm:$0xff]
        %vm382 = vcmask 424960
        %v384 = vsel %vm382, %v366, 0
        %v387 = vsel %vm382, %v367, 0
        %v390 = vsel %vm382, %v368, 0
        %v393 = vsel %vm382, %v369, 0
        %v396 = vsel %vm382, %v370, 0
        %v399 = vsel %vm382, %v371, 0
        %v402 = vsel %vm382, %v372, 0
        %v405 = vsel %vm382, %v373, 0
        %vm407 = vcmask 1043456
        %v409 = vsel %vm407, %v348, 0
        %v412 = vsel %vm407, %v349, 0
        %414 = vmatpush.msra.mxu0 0.0
        %415 = vmatpush.msra.mxu0 0.0
        %416 = vmatpush.msra.mxu0 0.0
        %417 = vmatpush.msra.mxu0 0.0
        %418 = vmatpush.msra.mxu0 0.0
        %419 = vmatpush.msra.mxu0 0.0
        %420 = vmatpush.msra.mxu0 0.0
        %421 = vmatpush.msra.mxu0 0.0
        %422 = vmatpush.msra.mxu0 0.0
        %423 = vmatpush.msra.mxu0 %v409
        %424 = vmatpush.msra.mxu0 %v346
        %425 = vmatpush.msra.mxu0 %v344
        %426 = vmatpush.msra.mxu0 %v342
        %427 = vmatpush.msra.mxu0 %v340
        %428 = vmatpush.msra.mxu0 %v338
        %429 = vmatpush.msra.mxu0 %v336
        %430 = vmatmul.f32.gmra.mxu0 %v384
        %v431 = vpop.f32.mrf.mxu0
        %v432 = vadd.f32 0.0, %v431
        %433 = vmatmul.f32.gmra.mxu0 %v387
        %v434 = vpop.f32.mrf.mxu0
        %v435 = vadd.f32 0.0, %v434
        %436 = vmatmul.f32.gmra.mxu0 %v390
        %v437 = vpop.f32.mrf.mxu0
        %v438 = vadd.f32 0.0, %v437
        %439 = vmatmul.f32.gmra.mxu0 %v393
        %v440 = vpop.f32.mrf.mxu0
        %v441 = vadd.f32 0.0, %v440
        %442 = vmatmul.f32.gmra.mxu0 %v396
        %v443 = vpop.f32.mrf.mxu0
        %v444 = vadd.f32 0.0, %v443
        %445 = vmatmul.f32.gmra.mxu0 %v399
        %v446 = vpop.f32.mrf.mxu0
        %v447 = vadd.f32 0.0, %v446
        %448 = vmatmul.f32.gmra.mxu0 %v402
        %v449 = vpop.f32.mrf.mxu0
        %v450 = vadd.f32 0.0, %v449
        %451 = vmatmul.f32.gmra.mxu0 %v405
        %v452 = vpop.f32.mrf.mxu0
        %v453 = vadd.f32 0.0, %v452
        %454 = vdwg.mxu0
        %455 = vmatpush.msra.mxu0 0.0
        %456 = vmatpush.msra.mxu0 0.0
        %457 = vmatpush.msra.mxu0 0.0
        %458 = vmatpush.msra.mxu0 0.0
        %459 = vmatpush.msra.mxu0 0.0
        %460 = vmatpush.msra.mxu0 0.0
        %461 = vmatpush.msra.mxu0 0.0
        %462 = vmatpush.msra.mxu0 0.0
        %463 = vmatpush.msra.mxu0 0.0
        %464 = vmatpush.msra.mxu0 %v412
        %465 = vmatpush.msra.mxu0 %v347
        %466 = vmatpush.msra.mxu0 %v345
        %467 = vmatpush.msra.mxu0 %v343
        %468 = vmatpush.msra.mxu0 %v341
        %469 = vmatpush.msra.mxu0 %v339
        %470 = vmatpush.msra.mxu0 %v337
        %471 = vmatmul.f32.gmra.mxu0 %v384
        %v472 = vpop.f32.mrf.mxu0
        %v473 = vadd.f32 0.0, %v472
        %474 = vmatmul.f32.gmra.mxu0 %v387
        %v475 = vpop.f32.mrf.mxu0
        %v476 = vadd.f32 0.0, %v475
        %477 = vmatmul.f32.gmra.mxu0 %v390
        %v478 = vpop.f32.mrf.mxu0
        %v479 = vadd.f32 0.0, %v478
        %480 = vmatmul.f32.gmra.mxu0 %v393
        %v481 = vpop.f32.mrf.mxu0
        %v482 = vadd.f32 0.0, %v481
        %483 = vmatmul.f32.gmra.mxu0 %v396
        %v484 = vpop.f32.mrf.mxu0
        %v485 = vadd.f32 0.0, %v484
        %486 = vmatmul.f32.gmra.mxu0 %v399
        %v487 = vpop.f32.mrf.mxu0
        %v488 = vadd.f32 0.0, %v487
        %489 = vmatmul.f32.gmra.mxu0 %v402
        %v490 = vpop.f32.mrf.mxu0
        %v491 = vadd.f32 0.0, %v490
        %492 = vmatmul.f32.gmra.mxu0 %v405
        %v493 = vpop.f32.mrf.mxu0
        %v494 = vadd.f32 0.0, %v493
        %495 = vdwg.mxu0
        %vm496 = vcmask 23552
        %v498 = vsel %vm496, %v374, 0
        %v501 = vsel %vm496, %v375, 0
        %v504 = vsel %vm496, %v376, 0
        %v507 = vsel %vm496, %v377, 0
        %v510 = vsel %vm496, %v378, 0
        %v513 = vsel %vm496, %v379, 0
        %v516 = vsel %vm496, %v380, 0
        %v519 = vsel %vm496, %v381, 0
        %v522 = vsel %vm496, %v350, 0
        %v525 = vsel %vm496, %v351, 0
        %v528 = vsel %vm496, %v352, 0
        %v531 = vsel %vm496, %v353, 0
        %v534 = vsel %vm496, %v354, 0
        %v537 = vsel %vm496, %v355, 0
        %v540 = vsel %vm496, %v356, 0
        %v543 = vsel %vm496, %v357, 0
        %v546 = vsel %vm496, %v358, 0
        %v549 = vsel %vm496, %v359, 0
        %v552 = vsel %vm496, %v360, 0
        %v555 = vsel %vm496, %v361, 0
        %v558 = vsel %vm496, %v362, 0
        %v561 = vsel %vm496, %v363, 0
        %v564 = vsel %vm496, %v364, 0
        %v567 = vsel %vm496, %v365, 0
        %569 = vmatpush.xpose.msra.mxu0 %v567
        %570 = vmatpush.xpose.msra.mxu0 %v564
        %571 = vmatpush.xpose.msra.mxu0 %v561
        %572 = vmatpush.xpose.msra.mxu0 %v558
        %573 = vmatpush.xpose.msra.mxu0 %v555
        %574 = vmatpush.xpose.msra.mxu0 %v552
        %575 = vmatpush.xpose.msra.mxu0 %v549
        %576 = vmatpush.xpose.msra.mxu0 %v546
        %577 = vmatpush.xpose.msra.mxu0 %v543
        %578 = vmatpush.xpose.msra.mxu0 %v540
        %579 = vmatpush.xpose.msra.mxu0 %v537
        %580 = vmatpush.xpose.msra.mxu0 %v534
        %581 = vmatpush.xpose.msra.mxu0 %v531
        %582 = vmatpush.xpose.msra.mxu0 %v528
        %583 = vmatpush.xpose.msra.mxu0 %v525
        %584 = vmatpush.xpose.msra.mxu0 %v522
        %585 = vmatmul.f32.gmra.mxu0 %v498
        %v586 = vpop.f32.mrf.mxu0
        %v587 = vadd.f32 0.0, %v586
        %588 = vmatmul.f32.gmra.mxu0 %v501
        %v589 = vpop.f32.mrf.mxu0
        %v590 = vadd.f32 0.0, %v589
        %591 = vmatmul.f32.gmra.mxu0 %v504
        %v592 = vpop.f32.mrf.mxu0
        %v593 = vadd.f32 0.0, %v592
        %594 = vmatmul.f32.gmra.mxu0 %v507
        %v595 = vpop.f32.mrf.mxu0
        %v596 = vadd.f32 0.0, %v595
        %597 = vmatmul.f32.gmra.mxu0 %v510
        %v598 = vpop.f32.mrf.mxu0
        %v599 = vadd.f32 0.0, %v598
        %600 = vmatmul.f32.gmra.mxu0 %v513
        %v601 = vpop.f32.mrf.mxu0
        %v602 = vadd.f32 0.0, %v601
        %603 = vmatmul.f32.gmra.mxu0 %v516
        %v604 = vpop.f32.mrf.mxu0
        %v605 = vadd.f32 0.0, %v604
        %606 = vmatmul.f32.gmra.mxu0 %v519
        %v607 = vpop.f32.mrf.mxu0
        %v608 = vadd.f32 0.0, %v607
        %609 = vdwg.mxu0
        %vm610 = vcmask 1042432
        %v611 = vsel %vm610, %v348, 0
        %v613 = vsel %vm610, %v349, 0
        %615 = vmatpush.msra.mxu0 0.0
        %616 = vmatpush.msra.mxu0 0.0
        %617 = vmatpush.msra.mxu0 0.0
        %618 = vmatpush.msra.mxu0 0.0
        %619 = vmatpush.msra.mxu0 0.0
        %620 = vmatpush.msra.mxu0 0.0
        %621 = vmatpush.msra.mxu0 0.0
        %622 = vmatpush.msra.mxu0 0.0
        %623 = vmatpush.msra.mxu0 0.0
        %624 = vmatpush.msra.mxu0 0.0
        %625 = vmatpush.msra.mxu0 0.0
        %626 = vmatpush.msra.mxu0 0.0
        %627 = vmatpush.msra.mxu0 0.0
        %628 = vmatpush.msra.mxu0 0.0
        %629 = vmatpush.msra.mxu0 0.0
        %630 = vmatpush.msra.mxu0 %v611
        %631 = vmatmul.f32.gmra.mxu0 %v522
        %v632 = vpop.f32.mrf.mxu0
        %v633 = vadd.f32 0.0, %v632
        %634 = vmatmul.f32.gmra.mxu0 %v525
        %v635 = vpop.f32.mrf.mxu0
        %v636 = vadd.f32 0.0, %v635
        %637 = vmatmul.f32.gmra.mxu0 %v528
        %v638 = vpop.f32.mrf.mxu0
        %v639 = vadd.f32 0.0, %v638
        %640 = vmatmul.f32.gmra.mxu0 %v531
        %v641 = vpop.f32.mrf.mxu0
        %v642 = vadd.f32 0.0, %v641
        %643 = vmatmul.f32.gmra.mxu0 %v534
        %v644 = vpop.f32.mrf.mxu0
        %v645 = vadd.f32 0.0, %v644
        %646 = vmatmul.f32.gmra.mxu0 %v537
        %v647 = vpop.f32.mrf.mxu0
        %v648 = vadd.f32 0.0, %v647
        %649 = vmatmul.f32.gmra.mxu0 %v540
        %v650 = vpop.f32.mrf.mxu0
        %v651 = vadd.f32 0.0, %v650
        %652 = vmatmul.f32.gmra.mxu0 %v543
        %v653 = vpop.f32.mrf.mxu0
        %v654 = vadd.f32 0.0, %v653
        %655 = vmatmul.f32.gmra.mxu0 %v546
        %v656 = vpop.f32.mrf.mxu0
        %v657 = vadd.f32 0.0, %v656
        %658 = vmatmul.f32.gmra.mxu0 %v549
        %v659 = vpop.f32.mrf.mxu0
        %v660 = vadd.f32 0.0, %v659
        %661 = vmatmul.f32.gmra.mxu0 %v552
        %v662 = vpop.f32.mrf.mxu0
        %v663 = vadd.f32 0.0, %v662
        %664 = vmatmul.f32.gmra.mxu0 %v555
        %v665 = vpop.f32.mrf.mxu0
        %v666 = vadd.f32 0.0, %v665
        %667 = vmatmul.f32.gmra.mxu0 %v558
        %v668 = vpop.f32.mrf.mxu0
        %v669 = vadd.f32 0.0, %v668
        %670 = vmatmul.f32.gmra.mxu0 %v561
        %v671 = vpop.f32.mrf.mxu0
        %v672 = vadd.f32 0.0, %v671
        %673 = vmatmul.f32.gmra.mxu0 %v564
        %v674 = vpop.f32.mrf.mxu0
        %v675 = vadd.f32 0.0, %v674
        %676 = vmatmul.f32.gmra.mxu0 %v567
        %v677 = vpop.f32.mrf.mxu0
        %v678 = vadd.f32 0.0, %v677
        %679 = vdwg.mxu0
        %680 = vmatpush.msra.mxu0 0.0
        %681 = vmatpush.msra.mxu0 0.0
        %682 = vmatpush.msra.mxu0 0.0
        %683 = vmatpush.msra.mxu0 0.0
        %684 = vmatpush.msra.mxu0 0.0
        %685 = vmatpush.msra.mxu0 0.0
        %686 = vmatpush.msra.mxu0 0.0
        %687 = vmatpush.msra.mxu0 0.0
        %688 = vmatpush.msra.mxu0 0.0
        %689 = vmatpush.msra.mxu0 0.0
        %690 = vmatpush.msra.mxu0 0.0
        %691 = vmatpush.msra.mxu0 0.0
        %692 = vmatpush.msra.mxu0 0.0
        %693 = vmatpush.msra.mxu0 0.0
        %694 = vmatpush.msra.mxu0 0.0
        %695 = vmatpush.msra.mxu0 %v613
        %696 = vmatmul.f32.gmra.mxu0 %v522
        %v697 = vpop.f32.mrf.mxu0
        %v698 = vadd.f32 0.0, %v697
        %699 = vmatmul.f32.gmra.mxu0 %v525
        %v700 = vpop.f32.mrf.mxu0
        %v701 = vadd.f32 0.0, %v700
        %702 = vmatmul.f32.gmra.mxu0 %v528
        %v703 = vpop.f32.mrf.mxu0
        %v704 = vadd.f32 0.0, %v703
        %705 = vmatmul.f32.gmra.mxu0 %v531
        %v706 = vpop.f32.mrf.mxu0
        %v707 = vadd.f32 0.0, %v706
        %708 = vmatmul.f32.gmra.mxu0 %v534
        %v709 = vpop.f32.mrf.mxu0
        %v710 = vadd.f32 0.0, %v709
        %711 = vmatmul.f32.gmra.mxu0 %v537
        %v712 = vpop.f32.mrf.mxu0
        %v713 = vadd.f32 0.0, %v712
        %714 = vmatmul.f32.gmra.mxu0 %v540
        %v715 = vpop.f32.mrf.mxu0
        %v716 = vadd.f32 0.0, %v715
        %717 = vmatmul.f32.gmra.mxu0 %v543
        %v718 = vpop.f32.mrf.mxu0
        %v719 = vadd.f32 0.0, %v718
        %720 = vmatmul.f32.gmra.mxu0 %v546
        %v721 = vpop.f32.mrf.mxu0
        %v722 = vadd.f32 0.0, %v721
        %723 = vmatmul.f32.gmra.mxu0 %v549
        %v724 = vpop.f32.mrf.mxu0
        %v725 = vadd.f32 0.0, %v724
        %726 = vmatmul.f32.gmra.mxu0 %v552
        %v727 = vpop.f32.mrf.mxu0
        %v728 = vadd.f32 0.0, %v727
        %729 = vmatmul.f32.gmra.mxu0 %v555
        %v730 = vpop.f32.mrf.mxu0
        %v731 = vadd.f32 0.0, %v730
        %732 = vmatmul.f32.gmra.mxu0 %v558
        %v733 = vpop.f32.mrf.mxu0
        %v734 = vadd.f32 0.0, %v733
        %735 = vmatmul.f32.gmra.mxu0 %v561
        %v736 = vpop.f32.mrf.mxu0
        %v737 = vadd.f32 0.0, %v736
        %738 = vmatmul.f32.gmra.mxu0 %v564
        %v739 = vpop.f32.mrf.mxu0
        %v740 = vadd.f32 0.0, %v739
        %741 = vmatmul.f32.gmra.mxu0 %v567
        %v742 = vpop.f32.mrf.mxu0
        %v743 = vadd.f32 0.0, %v742
        %744 = vdwg.mxu0
        %v745 = vmul.f32 %v348, %v348
        %v746 = vmul.f32 %v349, %v349
        %v747 = vsel %vm610, %v745, 0.0
        %v748 = vrot.slane %v747, 4
        %v749 = vadd.f32 %v747, %v748
        %v750 = vrot.slane %v749, 2
        %v751 = vadd.f32 %v749, %v750
        %v752 = vrot.slane %v751, 1
        %v753 = vadd.f32 %v751, %v752
        %v754 = vsel %vm610, %v746, 0.0
        %v755 = vrot.slane %v754, 4
        %v756 = vadd.f32 %v754, %v755
        %v757 = vrot.slane %v756, 2
        %v758 = vadd.f32 %v756, %v757
        %v759 = vrot.slane %v758, 1
        %v760 = vadd.f32 %v758, %v759
        %v761 = vmul.f32 %v633, 2.0
        %v762 = vmul.f32 %v698, 2.0
        %v763 = vmul.f32 %v636, 2.0
        %v764 = vmul.f32 %v701, 2.0
        %v765 = vmul.f32 %v639, 2.0
        %v766 = vmul.f32 %v704, 2.0
        %v767 = vmul.f32 %v642, 2.0
        %v768 = vmul.f32 %v707, 2.0
        %v769 = vmul.f32 %v645, 2.0
        %v770 = vmul.f32 %v710, 2.0
        %v771 = vmul.f32 %v648, 2.0
        %v772 = vmul.f32 %v713, 2.0
        %v773 = vmul.f32 %v651, 2.0
        %v774 = vmul.f32 %v716, 2.0
        %v775 = vmul.f32 %v654, 2.0
        %v776 = vmul.f32 %v719, 2.0
        %v777 = vmul.f32 %v657, 2.0
        %v778 = vmul.f32 %v722, 2.0
        %v779 = vmul.f32 %v660, 2.0
        %v780 = vmul.f32 %v725, 2.0
        %v781 = vmul.f32 %v663, 2.0
        %v782 = vmul.f32 %v728, 2.0
        %v783 = vmul.f32 %v666, 2.0
        %v784 = vmul.f32 %v731, 2.0
        %v785 = vmul.f32 %v669, 2.0
        %v786 = vmul.f32 %v734, 2.0
        %v787 = vmul.f32 %v672, 2.0
        %v788 = vmul.f32 %v737, 2.0
        %v789 = vmul.f32 %v675, 2.0
        %v790 = vmul.f32 %v740, 2.0
        %v791 = vmul.f32 %v678, 2.0
        %v792 = vmul.f32 %v743, 2.0
        %v793 = vsub.f32 %v753, %v761
        %v794 = vsub.f32 %v760, %v762
        %v795 = vsub.f32 %v753, %v763
        %v796 = vsub.f32 %v760, %v764
        %v797 = vsub.f32 %v753, %v765
        %v798 = vsub.f32 %v760, %v766
        %v799 = vsub.f32 %v753, %v767
        %v800 = vsub.f32 %v760, %v768
        %v801 = vsub.f32 %v753, %v769
        %v802 = vsub.f32 %v760, %v770
        %v803 = vsub.f32 %v753, %v771
        %v804 = vsub.f32 %v760, %v772
        %v805 = vsub.f32 %v753, %v773
        %v806 = vsub.f32 %v760, %v774
        %v807 = vsub.f32 %v753, %v775
        %v808 = vsub.f32 %v760, %v776
        %v809 = vsub.f32 %v753, %v777
        %v810 = vsub.f32 %v760, %v778
        %v811 = vsub.f32 %v753, %v779
        %v812 = vsub.f32 %v760, %v780
        %v813 = vsub.f32 %v753, %v781
        %v814 = vsub.f32 %v760, %v782
        %v815 = vsub.f32 %v753, %v783
        %v816 = vsub.f32 %v760, %v784
        %v817 = vsub.f32 %v753, %v785
        %v818 = vsub.f32 %v760, %v786
        %v819 = vsub.f32 %v753, %v787
        %v820 = vsub.f32 %v760, %v788
        %v821 = vsub.f32 %v753, %v789
        %v822 = vsub.f32 %v760, %v790
        %v823 = vsub.f32 %v753, %v791
        %v824 = vsub.f32 %v760, %v792
        %v825 = vlaneseq
        %v826 = vand.u32 %v825, 127
        %v827 = vadd.s32 %v826, 128
        %s828 = smul.u32 %s29, 128
        %v829 = vlaneseq
        %v830 = vshrl.u32 %v829, 7
        %v831 = vadd.s32 %v830, 8
        %v832 = vadd.s32 %v830, 16
        %v833 = vadd.s32 %v830, 24
        %v834 = vadd.s32 %v830, 32
        %v835 = vadd.s32 %v830, 40
        %v836 = vadd.s32 %v830, 48
        %v837 = vadd.s32 %v830, 56
        %v838 = vadd.s32 %v830, 64
        %v839 = vadd.s32 %v830, 72
        %v840 = vadd.s32 %v830, 80
        %v841 = vadd.s32 %v830, 88
        %v842 = vadd.s32 %v830, 96
        %v843 = vadd.s32 %v830, 104
        %v844 = vadd.s32 %v830, 112
        %v845 = vadd.s32 %v830, 120
        %v846 = vstv %s828
        %v847 = vadd.s32 %v846, %v830
        %v848 = vadd.s32 %v846, %v831
        %v849 = vadd.s32 %v846, %v832
        %v850 = vadd.s32 %v846, %v833
        %v851 = vadd.s32 %v846, %v834
        %v852 = vadd.s32 %v846, %v835
        %v853 = vadd.s32 %v846, %v836
        %v854 = vadd.s32 %v846, %v837
        %v855 = vadd.s32 %v846, %v838
        %v856 = vadd.s32 %v846, %v839
        %v857 = vadd.s32 %v846, %v840
        %v858 = vadd.s32 %v846, %v841
        %v859 = vadd.s32 %v846, %v842
        %v860 = vadd.s32 %v846, %v843
        %v861 = vadd.s32 %v846, %v844
        %v862 = vadd.s32 %v846, %v845
        %vm863 = vcmp.eq.s32.totalorder %v826, %v847
        %vm864 = vcmp.eq.s32.totalorder %v827, %v847
        %vm865 = vcmp.eq.s32.totalorder %v826, %v848
        %vm866 = vcmp.eq.s32.totalorder %v827, %v848
        %vm867 = vcmp.eq.s32.totalorder %v826, %v849
        %vm868 = vcmp.eq.s32.totalorder %v827, %v849
        %vm869 = vcmp.eq.s32.totalorder %v826, %v850
        %vm870 = vcmp.eq.s32.totalorder %v827, %v850
        %vm871 = vcmp.eq.s32.totalorder %v826, %v851
        %vm872 = vcmp.eq.s32.totalorder %v827, %v851
        %vm873 = vcmp.eq.s32.totalorder %v826, %v852
        %vm874 = vcmp.eq.s32.totalorder %v827, %v852
        %vm875 = vcmp.eq.s32.totalorder %v826, %v853
        %vm876 = vcmp.eq.s32.totalorder %v827, %v853
        %vm877 = vcmp.eq.s32.totalorder %v826, %v854
        %vm878 = vcmp.eq.s32.totalorder %v827, %v854
        %vm879 = vcmp.eq.s32.totalorder %v826, %v855
        %vm880 = vcmp.eq.s32.totalorder %v827, %v855
        %vm881 = vcmp.eq.s32.totalorder %v826, %v856
        %vm882 = vcmp.eq.s32.totalorder %v827, %v856
        %vm883 = vcmp.eq.s32.totalorder %v826, %v857
        %vm884 = vcmp.eq.s32.totalorder %v827, %v857
        %vm885 = vcmp.eq.s32.totalorder %v826, %v858
        %vm886 = vcmp.eq.s32.totalorder %v827, %v858
        %vm887 = vcmp.eq.s32.totalorder %v826, %v859
        %vm888 = vcmp.eq.s32.totalorder %v827, %v859
        %vm889 = vcmp.eq.s32.totalorder %v826, %v860
        %vm890 = vcmp.eq.s32.totalorder %v827, %v860
        %vm891 = vcmp.eq.s32.totalorder %v826, %v861
        %vm892 = vcmp.eq.s32.totalorder %v827, %v861
        %vm893 = vcmp.eq.s32.totalorder %v826, %v862
        %vm894 = vcmp.eq.s32.totalorder %v827, %v862
        %v895 = vsel %vm863, inf, %v793
        %v896 = vsel %vm864, inf, %v794
        %v897 = vsel %vm865, inf, %v795
        %v898 = vsel %vm866, inf, %v796
        %v899 = vsel %vm867, inf, %v797
        %v900 = vsel %vm868, inf, %v798
        %v901 = vsel %vm869, inf, %v799
        %v902 = vsel %vm870, inf, %v800
        %v903 = vsel %vm871, inf, %v801
        %v904 = vsel %vm872, inf, %v802
        %v905 = vsel %vm873, inf, %v803
        %v906 = vsel %vm874, inf, %v804
        %v907 = vsel %vm875, inf, %v805
        %v908 = vsel %vm876, inf, %v806
        %v909 = vsel %vm877, inf, %v807
        %v910 = vsel %vm878, inf, %v808
        %v911 = vsel %vm879, inf, %v809
        %v912 = vsel %vm880, inf, %v810
        %v913 = vsel %vm881, inf, %v811
        %v914 = vsel %vm882, inf, %v812
        %v915 = vsel %vm883, inf, %v813
        %v916 = vsel %vm884, inf, %v814
        %v917 = vsel %vm885, inf, %v815
        %v918 = vsel %vm886, inf, %v816
        %v919 = vsel %vm887, inf, %v817
        %v920 = vsel %vm888, inf, %v818
        %v921 = vsel %vm889, inf, %v819
        %v922 = vsel %vm890, inf, %v820
        %v923 = vsel %vm891, inf, %v821
        %v924 = vsel %vm892, inf, %v822
        %v925 = vsel %vm893, inf, %v823
        %v926 = vsel %vm894, inf, %v824
        %v927 = vmin.f32 %v895, %v896
        %928 = vmin.xlane.f32.xlu0 %v927
        %v929 = vpop.xlane.xlu0 %928
        %v930 = vmin.f32 %v897, %v898
        %931 = vmin.xlane.f32.xlu0 %v930
        %v932 = vpop.xlane.xlu0 %931
        %v933 = vmin.f32 %v899, %v900
        %934 = vmin.xlane.f32.xlu0 %v933
        %v935 = vpop.xlane.xlu0 %934
        %v936 = vmin.f32 %v901, %v902
        %937 = vmin.xlane.f32.xlu0 %v936
        %v938 = vpop.xlane.xlu0 %937
        %v939 = vmin.f32 %v903, %v904
        %940 = vmin.xlane.f32.xlu0 %v939
        %v941 = vpop.xlane.xlu0 %940
        %v942 = vmin.f32 %v905, %v906
        %943 = vmin.xlane.f32.xlu0 %v942
        %v944 = vpop.xlane.xlu0 %943
        %v945 = vmin.f32 %v907, %v908
        %946 = vmin.xlane.f32.xlu0 %v945
        %v947 = vpop.xlane.xlu0 %946
        %v948 = vmin.f32 %v909, %v910
        %949 = vmin.xlane.f32.xlu0 %v948
        %v950 = vpop.xlane.xlu0 %949
        %v951 = vmin.f32 %v911, %v912
        %952 = vmin.xlane.f32.xlu0 %v951
        %v953 = vpop.xlane.xlu0 %952
        %v954 = vmin.f32 %v913, %v914
        %955 = vmin.xlane.f32.xlu0 %v954
        %v956 = vpop.xlane.xlu0 %955
        %v957 = vmin.f32 %v915, %v916
        %958 = vmin.xlane.f32.xlu0 %v957
        %v959 = vpop.xlane.xlu0 %958
        %v960 = vmin.f32 %v917, %v918
        %961 = vmin.xlane.f32.xlu0 %v960
        %v962 = vpop.xlane.xlu0 %961
        %v963 = vmin.f32 %v919, %v920
        %964 = vmin.xlane.f32.xlu0 %v963
        %v965 = vpop.xlane.xlu0 %964
        %v966 = vmin.f32 %v921, %v922
        %967 = vmin.xlane.f32.xlu0 %v966
        %v968 = vpop.xlane.xlu0 %967
        %v969 = vmin.f32 %v923, %v924
        %970 = vmin.xlane.f32.xlu0 %v969
        %v971 = vpop.xlane.xlu0 %970
        %v972 = vmin.f32 %v925, %v926
        %973 = vmin.xlane.f32.xlu0 %v972
        %v974 = vpop.xlane.xlu0 %973
        %vm975 = vcmp.le.f32.partialorder %v895, %v929
        %vm976 = vcmp.le.f32.partialorder %v896, %v929
        %vm977 = vcmp.le.f32.partialorder %v897, %v932
        %vm978 = vcmp.le.f32.partialorder %v898, %v932
        %vm979 = vcmp.le.f32.partialorder %v899, %v935
        %vm980 = vcmp.le.f32.partialorder %v900, %v935
        %vm981 = vcmp.le.f32.partialorder %v901, %v938
        %vm982 = vcmp.le.f32.partialorder %v902, %v938
        %vm983 = vcmp.le.f32.partialorder %v903, %v941
        %vm984 = vcmp.le.f32.partialorder %v904, %v941
        %vm985 = vcmp.le.f32.partialorder %v905, %v944
        %vm986 = vcmp.le.f32.partialorder %v906, %v944
        %vm987 = vcmp.le.f32.partialorder %v907, %v947
        %vm988 = vcmp.le.f32.partialorder %v908, %v947
        %vm989 = vcmp.le.f32.partialorder %v909, %v950
        %vm990 = vcmp.le.f32.partialorder %v910, %v950
        %vm991 = vcmp.le.f32.partialorder %v911, %v953
        %vm992 = vcmp.le.f32.partialorder %v912, %v953
        %vm993 = vcmp.le.f32.partialorder %v913, %v956
        %vm994 = vcmp.le.f32.partialorder %v914, %v956
        %vm995 = vcmp.le.f32.partialorder %v915, %v959
        %vm996 = vcmp.le.f32.partialorder %v916, %v959
        %vm997 = vcmp.le.f32.partialorder %v917, %v962
        %vm998 = vcmp.le.f32.partialorder %v918, %v962
        %vm999 = vcmp.le.f32.partialorder %v919, %v965
        %vm1000 = vcmp.le.f32.partialorder %v920, %v965
        %vm1001 = vcmp.le.f32.partialorder %v921, %v968
        %vm1002 = vcmp.le.f32.partialorder %v922, %v968
        %vm1003 = vcmp.le.f32.partialorder %v923, %v971
        %vm1004 = vcmp.le.f32.partialorder %v924, %v971
        %vm1005 = vcmp.le.f32.partialorder %v925, %v974
        %vm1006 = vcmp.le.f32.partialorder %v926, %v974
        %v1007 = vsel %vm975, %v826, 256
        %v1008 = vsel %vm976, %v827, 256
        %v1009 = vsel %vm977, %v826, 256
        %v1010 = vsel %vm978, %v827, 256
        %v1011 = vsel %vm979, %v826, 256
        %v1012 = vsel %vm980, %v827, 256
        %v1013 = vsel %vm981, %v826, 256
        %v1014 = vsel %vm982, %v827, 256
        %v1015 = vsel %vm983, %v826, 256
        %v1016 = vsel %vm984, %v827, 256
        %v1017 = vsel %vm985, %v826, 256
        %v1018 = vsel %vm986, %v827, 256
        %v1019 = vsel %vm987, %v826, 256
        %v1020 = vsel %vm988, %v827, 256
        %v1021 = vsel %vm989, %v826, 256
        %v1022 = vsel %vm990, %v827, 256
        %v1023 = vsel %vm991, %v826, 256
        %v1024 = vsel %vm992, %v827, 256
        %v1025 = vsel %vm993, %v826, 256
        %v1026 = vsel %vm994, %v827, 256
        %v1027 = vsel %vm995, %v826, 256
        %v1028 = vsel %vm996, %v827, 256
        %v1029 = vsel %vm997, %v826, 256
        %v1030 = vsel %vm998, %v827, 256
        %v1031 = vsel %vm999, %v826, 256
        %v1032 = vsel %vm1000, %v827, 256
        %v1033 = vsel %vm1001, %v826, 256
        %v1034 = vsel %vm1002, %v827, 256
        %v1035 = vsel %vm1003, %v826, 256
        %v1036 = vsel %vm1004, %v827, 256
        %v1037 = vsel %vm1005, %v826, 256
        %v1038 = vsel %vm1006, %v827, 256
        %vm1039 = vcmp.lt.s32.totalorder %v1007, %v1008
        %v1040 = vsel %vm1039, %v1007, %v1008
        %v1041 = vand.u32 %v1040, 65535
        %v1042 = vshra.s32 %v1040, 16
        %v1043 = vcvt.s32.f32 %v1041
        %v1044 = vcvt.s32.f32 %v1042
        %1045 = vmin.xlane.f32.xlu0 %v1044
        %v1046 = vpop.xlane.xlu0 %1045
        %vm1047 = vcmp.eq.f32.partialorder %v1044, %v1046
        %v1048 = vsel %vm1047, %v1043, inf
        %1049 = vmin.xlane.f32.xlu0 %v1048
        %v1050 = vpop.xlane.xlu0 %1049
        %v1051 = vcvt.f32.s32 %v1050
        %v1052 = vcvt.f32.s32 %v1046
        %v1053 = vshll.u32 %v1052, 16
        %v1054 = vadd.s32 %v1053, %v1051
        %vm1055 = vcmp.lt.s32.totalorder %v1009, %v1010
        %v1056 = vsel %vm1055, %v1009, %v1010
        %v1057 = vand.u32 %v1056, 65535
        %v1058 = vshra.s32 %v1056, 16
        %v1059 = vcvt.s32.f32 %v1057
        %v1060 = vcvt.s32.f32 %v1058
        %1061 = vmin.xlane.f32.xlu0 %v1060
        %v1062 = vpop.xlane.xlu0 %1061
        %vm1063 = vcmp.eq.f32.partialorder %v1060, %v1062
        %v1064 = vsel %vm1063, %v1059, inf
        %1065 = vmin.xlane.f32.xlu0 %v1064
        %v1066 = vpop.xlane.xlu0 %1065
        %v1067 = vcvt.f32.s32 %v1066
        %v1068 = vcvt.f32.s32 %v1062
        %v1069 = vshll.u32 %v1068, 16
        %v1070 = vadd.s32 %v1069, %v1067
        %vm1071 = vcmp.lt.s32.totalorder %v1011, %v1012
        %v1072 = vsel %vm1071, %v1011, %v1012
        %v1073 = vand.u32 %v1072, 65535
        %v1074 = vshra.s32 %v1072, 16
        %v1075 = vcvt.s32.f32 %v1073
        %v1076 = vcvt.s32.f32 %v1074
        %1077 = vmin.xlane.f32.xlu0 %v1076
        %v1078 = vpop.xlane.xlu0 %1077
        %vm1079 = vcmp.eq.f32.partialorder %v1076, %v1078
        %v1080 = vsel %vm1079, %v1075, inf
        %1081 = vmin.xlane.f32.xlu0 %v1080
        %v1082 = vpop.xlane.xlu0 %1081
        %v1083 = vcvt.f32.s32 %v1082
        %v1084 = vcvt.f32.s32 %v1078
        %v1085 = vshll.u32 %v1084, 16
        %v1086 = vadd.s32 %v1085, %v1083
        %vm1087 = vcmp.lt.s32.totalorder %v1013, %v1014
        %v1088 = vsel %vm1087, %v1013, %v1014
        %v1089 = vand.u32 %v1088, 65535
        %v1090 = vshra.s32 %v1088, 16
        %v1091 = vcvt.s32.f32 %v1089
        %v1092 = vcvt.s32.f32 %v1090
        %1093 = vmin.xlane.f32.xlu0 %v1092
        %v1094 = vpop.xlane.xlu0 %1093
        %vm1095 = vcmp.eq.f32.partialorder %v1092, %v1094
        %v1096 = vsel %vm1095, %v1091, inf
        %1097 = vmin.xlane.f32.xlu0 %v1096
        %v1098 = vpop.xlane.xlu0 %1097
        %v1099 = vcvt.f32.s32 %v1098
        %v1100 = vcvt.f32.s32 %v1094
        %v1101 = vshll.u32 %v1100, 16
        %v1102 = vadd.s32 %v1101, %v1099
        %vm1103 = vcmp.lt.s32.totalorder %v1015, %v1016
        %v1104 = vsel %vm1103, %v1015, %v1016
        %v1105 = vand.u32 %v1104, 65535
        %v1106 = vshra.s32 %v1104, 16
        %v1107 = vcvt.s32.f32 %v1105
        %v1108 = vcvt.s32.f32 %v1106
        %1109 = vmin.xlane.f32.xlu0 %v1108
        %v1110 = vpop.xlane.xlu0 %1109
        %vm1111 = vcmp.eq.f32.partialorder %v1108, %v1110
        %v1112 = vsel %vm1111, %v1107, inf
        %1113 = vmin.xlane.f32.xlu0 %v1112
        %v1114 = vpop.xlane.xlu0 %1113
        %v1115 = vcvt.f32.s32 %v1114
        %v1116 = vcvt.f32.s32 %v1110
        %v1117 = vshll.u32 %v1116, 16
        %v1118 = vadd.s32 %v1117, %v1115
        %vm1119 = vcmp.lt.s32.totalorder %v1017, %v1018
        %v1120 = vsel %vm1119, %v1017, %v1018
        %v1121 = vand.u32 %v1120, 65535
        %v1122 = vshra.s32 %v1120, 16
        %v1123 = vcvt.s32.f32 %v1121
        %v1124 = vcvt.s32.f32 %v1122
        %1125 = vmin.xlane.f32.xlu0 %v1124
        %v1126 = vpop.xlane.xlu0 %1125
        %vm1127 = vcmp.eq.f32.partialorder %v1124, %v1126
        %v1128 = vsel %vm1127, %v1123, inf
        %1129 = vmin.xlane.f32.xlu0 %v1128
        %v1130 = vpop.xlane.xlu0 %1129
        %v1131 = vcvt.f32.s32 %v1130
        %v1132 = vcvt.f32.s32 %v1126
        %v1133 = vshll.u32 %v1132, 16
        %v1134 = vadd.s32 %v1133, %v1131
        %vm1135 = vcmp.lt.s32.totalorder %v1019, %v1020
        %v1136 = vsel %vm1135, %v1019, %v1020
        %v1137 = vand.u32 %v1136, 65535
        %v1138 = vshra.s32 %v1136, 16
        %v1139 = vcvt.s32.f32 %v1137
        %v1140 = vcvt.s32.f32 %v1138
        %1141 = vmin.xlane.f32.xlu0 %v1140
        %v1142 = vpop.xlane.xlu0 %1141
        %vm1143 = vcmp.eq.f32.partialorder %v1140, %v1142
        %v1144 = vsel %vm1143, %v1139, inf
        %1145 = vmin.xlane.f32.xlu0 %v1144
        %v1146 = vpop.xlane.xlu0 %1145
        %v1147 = vcvt.f32.s32 %v1146
        %v1148 = vcvt.f32.s32 %v1142
        %v1149 = vshll.u32 %v1148, 16
        %v1150 = vadd.s32 %v1149, %v1147
        %vm1151 = vcmp.lt.s32.totalorder %v1021, %v1022
        %v1152 = vsel %vm1151, %v1021, %v1022
        %v1153 = vand.u32 %v1152, 65535
        %v1154 = vshra.s32 %v1152, 16
        %v1155 = vcvt.s32.f32 %v1153
        %v1156 = vcvt.s32.f32 %v1154
        %1157 = vmin.xlane.f32.xlu0 %v1156
        %v1158 = vpop.xlane.xlu0 %1157
        %vm1159 = vcmp.eq.f32.partialorder %v1156, %v1158
        %v1160 = vsel %vm1159, %v1155, inf
        %1161 = vmin.xlane.f32.xlu0 %v1160
        %v1162 = vpop.xlane.xlu0 %1161
        %v1163 = vcvt.f32.s32 %v1162
        %v1164 = vcvt.f32.s32 %v1158
        %v1165 = vshll.u32 %v1164, 16
        %v1166 = vadd.s32 %v1165, %v1163
        %vm1167 = vcmp.lt.s32.totalorder %v1023, %v1024
        %v1168 = vsel %vm1167, %v1023, %v1024
        %v1169 = vand.u32 %v1168, 65535
        %v1170 = vshra.s32 %v1168, 16
        %v1171 = vcvt.s32.f32 %v1169
        %v1172 = vcvt.s32.f32 %v1170
        %1173 = vmin.xlane.f32.xlu0 %v1172
        %v1174 = vpop.xlane.xlu0 %1173
        %vm1175 = vcmp.eq.f32.partialorder %v1172, %v1174
        %v1176 = vsel %vm1175, %v1171, inf
        %1177 = vmin.xlane.f32.xlu0 %v1176
        %v1178 = vpop.xlane.xlu0 %1177
        %v1179 = vcvt.f32.s32 %v1178
        %v1180 = vcvt.f32.s32 %v1174
        %v1181 = vshll.u32 %v1180, 16
        %v1182 = vadd.s32 %v1181, %v1179
        %vm1183 = vcmp.lt.s32.totalorder %v1025, %v1026
        %v1184 = vsel %vm1183, %v1025, %v1026
        %v1185 = vand.u32 %v1184, 65535
        %v1186 = vshra.s32 %v1184, 16
        %v1187 = vcvt.s32.f32 %v1185
        %v1188 = vcvt.s32.f32 %v1186
        %1189 = vmin.xlane.f32.xlu0 %v1188
        %v1190 = vpop.xlane.xlu0 %1189
        %vm1191 = vcmp.eq.f32.partialorder %v1188, %v1190
        %v1192 = vsel %vm1191, %v1187, inf
        %1193 = vmin.xlane.f32.xlu0 %v1192
        %v1194 = vpop.xlane.xlu0 %1193
        %v1195 = vcvt.f32.s32 %v1194
        %v1196 = vcvt.f32.s32 %v1190
        %v1197 = vshll.u32 %v1196, 16
        %v1198 = vadd.s32 %v1197, %v1195
        %vm1199 = vcmp.lt.s32.totalorder %v1027, %v1028
        %v1200 = vsel %vm1199, %v1027, %v1028
        %v1201 = vand.u32 %v1200, 65535
        %v1202 = vshra.s32 %v1200, 16
        %v1203 = vcvt.s32.f32 %v1201
        %v1204 = vcvt.s32.f32 %v1202
        %1205 = vmin.xlane.f32.xlu0 %v1204
        %v1206 = vpop.xlane.xlu0 %1205
        %vm1207 = vcmp.eq.f32.partialorder %v1204, %v1206
        %v1208 = vsel %vm1207, %v1203, inf
        %1209 = vmin.xlane.f32.xlu0 %v1208
        %v1210 = vpop.xlane.xlu0 %1209
        %v1211 = vcvt.f32.s32 %v1210
        %v1212 = vcvt.f32.s32 %v1206
        %v1213 = vshll.u32 %v1212, 16
        %v1214 = vadd.s32 %v1213, %v1211
        %vm1215 = vcmp.lt.s32.totalorder %v1029, %v1030
        %v1216 = vsel %vm1215, %v1029, %v1030
        %v1217 = vand.u32 %v1216, 65535
        %v1218 = vshra.s32 %v1216, 16
        %v1219 = vcvt.s32.f32 %v1217
        %v1220 = vcvt.s32.f32 %v1218
        %1221 = vmin.xlane.f32.xlu0 %v1220
        %v1222 = vpop.xlane.xlu0 %1221
        %vm1223 = vcmp.eq.f32.partialorder %v1220, %v1222
        %v1224 = vsel %vm1223, %v1219, inf
        %1225 = vmin.xlane.f32.xlu0 %v1224
        %v1226 = vpop.xlane.xlu0 %1225
        %v1227 = vcvt.f32.s32 %v1226
        %v1228 = vcvt.f32.s32 %v1222
        %v1229 = vshll.u32 %v1228, 16
        %v1230 = vadd.s32 %v1229, %v1227
        %vm1231 = vcmp.lt.s32.totalorder %v1031, %v1032
        %v1232 = vsel %vm1231, %v1031, %v1032
        %v1233 = vand.u32 %v1232, 65535
        %v1234 = vshra.s32 %v1232, 16
        %v1235 = vcvt.s32.f32 %v1233
        %v1236 = vcvt.s32.f32 %v1234
        %1237 = vmin.xlane.f32.xlu0 %v1236
        %v1238 = vpop.xlane.xlu0 %1237
        %vm1239 = vcmp.eq.f32.partialorder %v1236, %v1238
        %v1240 = vsel %vm1239, %v1235, inf
        %1241 = vmin.xlane.f32.xlu0 %v1240
        %v1242 = vpop.xlane.xlu0 %1241
        %v1243 = vcvt.f32.s32 %v1242
        %v1244 = vcvt.f32.s32 %v1238
        %v1245 = vshll.u32 %v1244, 16
        %v1246 = vadd.s32 %v1245, %v1243
        %vm1247 = vcmp.lt.s32.totalorder %v1033, %v1034
        %v1248 = vsel %vm1247, %v1033, %v1034
        %v1249 = vand.u32 %v1248, 65535
        %v1250 = vshra.s32 %v1248, 16
        %v1251 = vcvt.s32.f32 %v1249
        %v1252 = vcvt.s32.f32 %v1250
        %1253 = vmin.xlane.f32.xlu0 %v1252
        %v1254 = vpop.xlane.xlu0 %1253
        %vm1255 = vcmp.eq.f32.partialorder %v1252, %v1254
        %v1256 = vsel %vm1255, %v1251, inf
        %1257 = vmin.xlane.f32.xlu0 %v1256
        %v1258 = vpop.xlane.xlu0 %1257
        %v1259 = vcvt.f32.s32 %v1258
        %v1260 = vcvt.f32.s32 %v1254
        %v1261 = vshll.u32 %v1260, 16
        %v1262 = vadd.s32 %v1261, %v1259
        %vm1263 = vcmp.lt.s32.totalorder %v1035, %v1036
        %v1264 = vsel %vm1263, %v1035, %v1036
        %v1265 = vand.u32 %v1264, 65535
        %v1266 = vshra.s32 %v1264, 16
        %v1267 = vcvt.s32.f32 %v1265
        %v1268 = vcvt.s32.f32 %v1266
        %1269 = vmin.xlane.f32.xlu0 %v1268
        %v1270 = vpop.xlane.xlu0 %1269
        %vm1271 = vcmp.eq.f32.partialorder %v1268, %v1270
        %v1272 = vsel %vm1271, %v1267, inf
        %1273 = vmin.xlane.f32.xlu0 %v1272
        %v1274 = vpop.xlane.xlu0 %1273
        %v1275 = vcvt.f32.s32 %v1274
        %v1276 = vcvt.f32.s32 %v1270
        %v1277 = vshll.u32 %v1276, 16
        %v1278 = vadd.s32 %v1277, %v1275
        %vm1279 = vcmp.lt.s32.totalorder %v1037, %v1038
        %v1280 = vsel %vm1279, %v1037, %v1038
        %v1281 = vand.u32 %v1280, 65535
        %v1282 = vshra.s32 %v1280, 16
        %v1283 = vcvt.s32.f32 %v1281
        %v1284 = vcvt.s32.f32 %v1282
        %1285 = vmin.xlane.f32.xlu0 %v1284
        %v1286 = vpop.xlane.xlu0 %1285
        %vm1287 = vcmp.eq.f32.partialorder %v1284, %v1286
        %v1288 = vsel %vm1287, %v1283, inf
        %1289 = vmin.xlane.f32.xlu0 %v1288
        %v1290 = vpop.xlane.xlu0 %1289
        %v1291 = vcvt.f32.s32 %v1290
        %v1292 = vcvt.f32.s32 %v1286
        %v1293 = vshll.u32 %v1292, 16
        %v1294 = vadd.s32 %v1293, %v1291
        %vm1295 = vcmp.eq.s32.totalorder %v826, %v1054
        %vm1296 = vcmp.eq.s32.totalorder %v827, %v1054
        %vm1297 = vcmp.eq.s32.totalorder %v826, %v1070
        %vm1298 = vcmp.eq.s32.totalorder %v827, %v1070
        %vm1299 = vcmp.eq.s32.totalorder %v826, %v1086
        %vm1300 = vcmp.eq.s32.totalorder %v827, %v1086
        %vm1301 = vcmp.eq.s32.totalorder %v826, %v1102
        %vm1302 = vcmp.eq.s32.totalorder %v827, %v1102
        %vm1303 = vcmp.eq.s32.totalorder %v826, %v1118
        %vm1304 = vcmp.eq.s32.totalorder %v827, %v1118
        %vm1305 = vcmp.eq.s32.totalorder %v826, %v1134
        %vm1306 = vcmp.eq.s32.totalorder %v827, %v1134
        %vm1307 = vcmp.eq.s32.totalorder %v826, %v1150
        %vm1308 = vcmp.eq.s32.totalorder %v827, %v1150
        %vm1309 = vcmp.eq.s32.totalorder %v826, %v1166
        %vm1310 = vcmp.eq.s32.totalorder %v827, %v1166
        %vm1311 = vcmp.eq.s32.totalorder %v826, %v1182
        %vm1312 = vcmp.eq.s32.totalorder %v827, %v1182
        %vm1313 = vcmp.eq.s32.totalorder %v826, %v1198
        %vm1314 = vcmp.eq.s32.totalorder %v827, %v1198
        %vm1315 = vcmp.eq.s32.totalorder %v826, %v1214
        %vm1316 = vcmp.eq.s32.totalorder %v827, %v1214
        %vm1317 = vcmp.eq.s32.totalorder %v826, %v1230
        %vm1318 = vcmp.eq.s32.totalorder %v827, %v1230
        %vm1319 = vcmp.eq.s32.totalorder %v826, %v1246
        %vm1320 = vcmp.eq.s32.totalorder %v827, %v1246
        %vm1321 = vcmp.eq.s32.totalorder %v826, %v1262
        %vm1322 = vcmp.eq.s32.totalorder %v827, %v1262
        %vm1323 = vcmp.eq.s32.totalorder %v826, %v1278
        %vm1324 = vcmp.eq.s32.totalorder %v827, %v1278
        %vm1325 = vcmp.eq.s32.totalorder %v826, %v1294
        %vm1326 = vcmp.eq.s32.totalorder %v827, %v1294
        %v1327 = vsel %vm1295, inf, %v895
        %v1328 = vsel %vm1296, inf, %v896
        %v1329 = vsel %vm1297, inf, %v897
        %v1330 = vsel %vm1298, inf, %v898
        %v1331 = vsel %vm1299, inf, %v899
        %v1332 = vsel %vm1300, inf, %v900
        %v1333 = vsel %vm1301, inf, %v901
        %v1334 = vsel %vm1302, inf, %v902
        %v1335 = vsel %vm1303, inf, %v903
        %v1336 = vsel %vm1304, inf, %v904
        %v1337 = vsel %vm1305, inf, %v905
        %v1338 = vsel %vm1306, inf, %v906
        %v1339 = vsel %vm1307, inf, %v907
        %v1340 = vsel %vm1308, inf, %v908
        %v1341 = vsel %vm1309, inf, %v909
        %v1342 = vsel %vm1310, inf, %v910
        %v1343 = vsel %vm1311, inf, %v911
        %v1344 = vsel %vm1312, inf, %v912
        %v1345 = vsel %vm1313, inf, %v913
        %v1346 = vsel %vm1314, inf, %v914
        %v1347 = vsel %vm1315, inf, %v915
        %v1348 = vsel %vm1316, inf, %v916
        %v1349 = vsel %vm1317, inf, %v917
        %v1350 = vsel %vm1318, inf, %v918
        %v1351 = vsel %vm1319, inf, %v919
        %v1352 = vsel %vm1320, inf, %v920
        %v1353 = vsel %vm1321, inf, %v921
        %v1354 = vsel %vm1322, inf, %v922
        %v1355 = vsel %vm1323, inf, %v923
        %v1356 = vsel %vm1324, inf, %v924
        %v1357 = vsel %vm1325, inf, %v925
        %v1358 = vsel %vm1326, inf, %v926
        %v1359 = vmin.f32 %v1327, %v1328
        %1360 = vmin.xlane.f32.xlu0 %v1359
        %v1361 = vpop.xlane.xlu0 %1360
        %v1362 = vmin.f32 %v1329, %v1330
        %1363 = vmin.xlane.f32.xlu0 %v1362
        %v1364 = vpop.xlane.xlu0 %1363
        %v1365 = vmin.f32 %v1331, %v1332
        %1366 = vmin.xlane.f32.xlu0 %v1365
        %v1367 = vpop.xlane.xlu0 %1366
        %v1368 = vmin.f32 %v1333, %v1334
        %1369 = vmin.xlane.f32.xlu0 %v1368
        %v1370 = vpop.xlane.xlu0 %1369
        %v1371 = vmin.f32 %v1335, %v1336
        %1372 = vmin.xlane.f32.xlu0 %v1371
        %v1373 = vpop.xlane.xlu0 %1372
        %v1374 = vmin.f32 %v1337, %v1338
        %1375 = vmin.xlane.f32.xlu0 %v1374
        %v1376 = vpop.xlane.xlu0 %1375
        %v1377 = vmin.f32 %v1339, %v1340
        %1378 = vmin.xlane.f32.xlu0 %v1377
        %v1379 = vpop.xlane.xlu0 %1378
        %v1380 = vmin.f32 %v1341, %v1342
        %1381 = vmin.xlane.f32.xlu0 %v1380
        %v1382 = vpop.xlane.xlu0 %1381
        %v1383 = vmin.f32 %v1343, %v1344
        %1384 = vmin.xlane.f32.xlu0 %v1383
        %v1385 = vpop.xlane.xlu0 %1384
        %v1386 = vmin.f32 %v1345, %v1346
        %1387 = vmin.xlane.f32.xlu0 %v1386
        %v1388 = vpop.xlane.xlu0 %1387
        %v1389 = vmin.f32 %v1347, %v1348
        %1390 = vmin.xlane.f32.xlu0 %v1389
        %v1391 = vpop.xlane.xlu0 %1390
        %v1392 = vmin.f32 %v1349, %v1350
        %1393 = vmin.xlane.f32.xlu0 %v1392
        %v1394 = vpop.xlane.xlu0 %1393
        %v1395 = vmin.f32 %v1351, %v1352
        %1396 = vmin.xlane.f32.xlu0 %v1395
        %v1397 = vpop.xlane.xlu0 %1396
        %v1398 = vmin.f32 %v1353, %v1354
        %1399 = vmin.xlane.f32.xlu0 %v1398
        %v1400 = vpop.xlane.xlu0 %1399
        %v1401 = vmin.f32 %v1355, %v1356
        %1402 = vmin.xlane.f32.xlu0 %v1401
        %v1403 = vpop.xlane.xlu0 %1402
        %v1404 = vmin.f32 %v1357, %v1358
        %1405 = vmin.xlane.f32.xlu0 %v1404
        %v1406 = vpop.xlane.xlu0 %1405
        %vm1407 = vcmp.le.f32.partialorder %v1327, %v1361
        %vm1408 = vcmp.le.f32.partialorder %v1328, %v1361
        %vm1409 = vcmp.le.f32.partialorder %v1329, %v1364
        %vm1410 = vcmp.le.f32.partialorder %v1330, %v1364
        %vm1411 = vcmp.le.f32.partialorder %v1331, %v1367
        %vm1412 = vcmp.le.f32.partialorder %v1332, %v1367
        %vm1413 = vcmp.le.f32.partialorder %v1333, %v1370
        %vm1414 = vcmp.le.f32.partialorder %v1334, %v1370
        %vm1415 = vcmp.le.f32.partialorder %v1335, %v1373
        %vm1416 = vcmp.le.f32.partialorder %v1336, %v1373
        %vm1417 = vcmp.le.f32.partialorder %v1337, %v1376
        %vm1418 = vcmp.le.f32.partialorder %v1338, %v1376
        %vm1419 = vcmp.le.f32.partialorder %v1339, %v1379
        %vm1420 = vcmp.le.f32.partialorder %v1340, %v1379
        %vm1421 = vcmp.le.f32.partialorder %v1341, %v1382
        %vm1422 = vcmp.le.f32.partialorder %v1342, %v1382
        %vm1423 = vcmp.le.f32.partialorder %v1343, %v1385
        %vm1424 = vcmp.le.f32.partialorder %v1344, %v1385
        %vm1425 = vcmp.le.f32.partialorder %v1345, %v1388
        %vm1426 = vcmp.le.f32.partialorder %v1346, %v1388
        %vm1427 = vcmp.le.f32.partialorder %v1347, %v1391
        %vm1428 = vcmp.le.f32.partialorder %v1348, %v1391
        %vm1429 = vcmp.le.f32.partialorder %v1349, %v1394
        %vm1430 = vcmp.le.f32.partialorder %v1350, %v1394
        %vm1431 = vcmp.le.f32.partialorder %v1351, %v1397
        %vm1432 = vcmp.le.f32.partialorder %v1352, %v1397
        %vm1433 = vcmp.le.f32.partialorder %v1353, %v1400
        %vm1434 = vcmp.le.f32.partialorder %v1354, %v1400
        %vm1435 = vcmp.le.f32.partialorder %v1355, %v1403
        %vm1436 = vcmp.le.f32.partialorder %v1356, %v1403
        %vm1437 = vcmp.le.f32.partialorder %v1357, %v1406
        %vm1438 = vcmp.le.f32.partialorder %v1358, %v1406
        %v1439 = vsel %vm1407, %v826, 256
        %v1440 = vsel %vm1408, %v827, 256
        %v1441 = vsel %vm1409, %v826, 256
        %v1442 = vsel %vm1410, %v827, 256
        %v1443 = vsel %vm1411, %v826, 256
        %v1444 = vsel %vm1412, %v827, 256
        %v1445 = vsel %vm1413, %v826, 256
        %v1446 = vsel %vm1414, %v827, 256
        %v1447 = vsel %vm1415, %v826, 256
        %v1448 = vsel %vm1416, %v827, 256
        %v1449 = vsel %vm1417, %v826, 256
        %v1450 = vsel %vm1418, %v827, 256
        %v1451 = vsel %vm1419, %v826, 256
        %v1452 = vsel %vm1420, %v827, 256
        %v1453 = vsel %vm1421, %v826, 256
        %v1454 = vsel %vm1422, %v827, 256
        %v1455 = vsel %vm1423, %v826, 256
        %v1456 = vsel %vm1424, %v827, 256
        %v1457 = vsel %vm1425, %v826, 256
        %v1458 = vsel %vm1426, %v827, 256
        %v1459 = vsel %vm1427, %v826, 256
        %v1460 = vsel %vm1428, %v827, 256
        %v1461 = vsel %vm1429, %v826, 256
        %v1462 = vsel %vm1430, %v827, 256
        %v1463 = vsel %vm1431, %v826, 256
        %v1464 = vsel %vm1432, %v827, 256
        %v1465 = vsel %vm1433, %v826, 256
        %v1466 = vsel %vm1434, %v827, 256
        %v1467 = vsel %vm1435, %v826, 256
        %v1468 = vsel %vm1436, %v827, 256
        %v1469 = vsel %vm1437, %v826, 256
        %v1470 = vsel %vm1438, %v827, 256
        %vm1471 = vcmp.lt.s32.totalorder %v1439, %v1440
        %v1472 = vsel %vm1471, %v1439, %v1440
        %v1473 = vand.u32 %v1472, 65535
        %v1474 = vshra.s32 %v1472, 16
        %v1475 = vcvt.s32.f32 %v1473
        %v1476 = vcvt.s32.f32 %v1474
        %1477 = vmin.xlane.f32.xlu0 %v1476
        %v1478 = vpop.xlane.xlu0 %1477
        %vm1479 = vcmp.eq.f32.partialorder %v1476, %v1478
        %v1480 = vsel %vm1479, %v1475, inf
        %1481 = vmin.xlane.f32.xlu0 %v1480
        %v1482 = vpop.xlane.xlu0 %1481
        %v1483 = vcvt.f32.s32 %v1482
        %v1484 = vcvt.f32.s32 %v1478
        %v1485 = vshll.u32 %v1484, 16
        %v1486 = vadd.s32 %v1485, %v1483
        %vm1487 = vcmp.lt.s32.totalorder %v1441, %v1442
        %v1488 = vsel %vm1487, %v1441, %v1442
        %v1489 = vand.u32 %v1488, 65535
        %v1490 = vshra.s32 %v1488, 16
        %v1491 = vcvt.s32.f32 %v1489
        %v1492 = vcvt.s32.f32 %v1490
        %1493 = vmin.xlane.f32.xlu0 %v1492
        %v1494 = vpop.xlane.xlu0 %1493
        %vm1495 = vcmp.eq.f32.partialorder %v1492, %v1494
        %v1496 = vsel %vm1495, %v1491, inf
        %1497 = vmin.xlane.f32.xlu0 %v1496
        %v1498 = vpop.xlane.xlu0 %1497
        %v1499 = vcvt.f32.s32 %v1498
        %v1500 = vcvt.f32.s32 %v1494
        %v1501 = vshll.u32 %v1500, 16
        %v1502 = vadd.s32 %v1501, %v1499
        %vm1503 = vcmp.lt.s32.totalorder %v1443, %v1444
        %v1504 = vsel %vm1503, %v1443, %v1444
        %v1505 = vand.u32 %v1504, 65535
        %v1506 = vshra.s32 %v1504, 16
        %v1507 = vcvt.s32.f32 %v1505
        %v1508 = vcvt.s32.f32 %v1506
        %1509 = vmin.xlane.f32.xlu0 %v1508
        %v1510 = vpop.xlane.xlu0 %1509
        %vm1511 = vcmp.eq.f32.partialorder %v1508, %v1510
        %v1512 = vsel %vm1511, %v1507, inf
        %1513 = vmin.xlane.f32.xlu0 %v1512
        %v1514 = vpop.xlane.xlu0 %1513
        %v1515 = vcvt.f32.s32 %v1514
        %v1516 = vcvt.f32.s32 %v1510
        %v1517 = vshll.u32 %v1516, 16
        %v1518 = vadd.s32 %v1517, %v1515
        %vm1519 = vcmp.lt.s32.totalorder %v1445, %v1446
        %v1520 = vsel %vm1519, %v1445, %v1446
        %v1521 = vand.u32 %v1520, 65535
        %v1522 = vshra.s32 %v1520, 16
        %v1523 = vcvt.s32.f32 %v1521
        %v1524 = vcvt.s32.f32 %v1522
        %1525 = vmin.xlane.f32.xlu0 %v1524
        %v1526 = vpop.xlane.xlu0 %1525
        %vm1527 = vcmp.eq.f32.partialorder %v1524, %v1526
        %v1528 = vsel %vm1527, %v1523, inf
        %1529 = vmin.xlane.f32.xlu0 %v1528
        %v1530 = vpop.xlane.xlu0 %1529
        %v1531 = vcvt.f32.s32 %v1530
        %v1532 = vcvt.f32.s32 %v1526
        %v1533 = vshll.u32 %v1532, 16
        %v1534 = vadd.s32 %v1533, %v1531
        %vm1535 = vcmp.lt.s32.totalorder %v1447, %v1448
        %v1536 = vsel %vm1535, %v1447, %v1448
        %v1537 = vand.u32 %v1536, 65535
        %v1538 = vshra.s32 %v1536, 16
        %v1539 = vcvt.s32.f32 %v1537
        %v1540 = vcvt.s32.f32 %v1538
        %1541 = vmin.xlane.f32.xlu0 %v1540
        %v1542 = vpop.xlane.xlu0 %1541
        %vm1543 = vcmp.eq.f32.partialorder %v1540, %v1542
        %v1544 = vsel %vm1543, %v1539, inf
        %1545 = vmin.xlane.f32.xlu0 %v1544
        %v1546 = vpop.xlane.xlu0 %1545
        %v1547 = vcvt.f32.s32 %v1546
        %v1548 = vcvt.f32.s32 %v1542
        %v1549 = vshll.u32 %v1548, 16
        %v1550 = vadd.s32 %v1549, %v1547
        %vm1551 = vcmp.lt.s32.totalorder %v1449, %v1450
        %v1552 = vsel %vm1551, %v1449, %v1450
        %v1553 = vand.u32 %v1552, 65535
        %v1554 = vshra.s32 %v1552, 16
        %v1555 = vcvt.s32.f32 %v1553
        %v1556 = vcvt.s32.f32 %v1554
        %1557 = vmin.xlane.f32.xlu0 %v1556
        %v1558 = vpop.xlane.xlu0 %1557
        %vm1559 = vcmp.eq.f32.partialorder %v1556, %v1558
        %v1560 = vsel %vm1559, %v1555, inf
        %1561 = vmin.xlane.f32.xlu0 %v1560
        %v1562 = vpop.xlane.xlu0 %1561
        %v1563 = vcvt.f32.s32 %v1562
        %v1564 = vcvt.f32.s32 %v1558
        %v1565 = vshll.u32 %v1564, 16
        %v1566 = vadd.s32 %v1565, %v1563
        %vm1567 = vcmp.lt.s32.totalorder %v1451, %v1452
        %v1568 = vsel %vm1567, %v1451, %v1452
        %v1569 = vand.u32 %v1568, 65535
        %v1570 = vshra.s32 %v1568, 16
        %v1571 = vcvt.s32.f32 %v1569
        %v1572 = vcvt.s32.f32 %v1570
        %1573 = vmin.xlane.f32.xlu0 %v1572
        %v1574 = vpop.xlane.xlu0 %1573
        %vm1575 = vcmp.eq.f32.partialorder %v1572, %v1574
        %v1576 = vsel %vm1575, %v1571, inf
        %1577 = vmin.xlane.f32.xlu0 %v1576
        %v1578 = vpop.xlane.xlu0 %1577
        %v1579 = vcvt.f32.s32 %v1578
        %v1580 = vcvt.f32.s32 %v1574
        %v1581 = vshll.u32 %v1580, 16
        %v1582 = vadd.s32 %v1581, %v1579
        %vm1583 = vcmp.lt.s32.totalorder %v1453, %v1454
        %v1584 = vsel %vm1583, %v1453, %v1454
        %v1585 = vand.u32 %v1584, 65535
        %v1586 = vshra.s32 %v1584, 16
        %v1587 = vcvt.s32.f32 %v1585
        %v1588 = vcvt.s32.f32 %v1586
        %1589 = vmin.xlane.f32.xlu0 %v1588
        %v1590 = vpop.xlane.xlu0 %1589
        %vm1591 = vcmp.eq.f32.partialorder %v1588, %v1590
        %v1592 = vsel %vm1591, %v1587, inf
        %1593 = vmin.xlane.f32.xlu0 %v1592
        %v1594 = vpop.xlane.xlu0 %1593
        %v1595 = vcvt.f32.s32 %v1594
        %v1596 = vcvt.f32.s32 %v1590
        %v1597 = vshll.u32 %v1596, 16
        %v1598 = vadd.s32 %v1597, %v1595
        %vm1599 = vcmp.lt.s32.totalorder %v1455, %v1456
        %v1600 = vsel %vm1599, %v1455, %v1456
        %v1601 = vand.u32 %v1600, 65535
        %v1602 = vshra.s32 %v1600, 16
        %v1603 = vcvt.s32.f32 %v1601
        %v1604 = vcvt.s32.f32 %v1602
        %1605 = vmin.xlane.f32.xlu0 %v1604
        %v1606 = vpop.xlane.xlu0 %1605
        %vm1607 = vcmp.eq.f32.partialorder %v1604, %v1606
        %v1608 = vsel %vm1607, %v1603, inf
        %1609 = vmin.xlane.f32.xlu0 %v1608
        %v1610 = vpop.xlane.xlu0 %1609
        %v1611 = vcvt.f32.s32 %v1610
        %v1612 = vcvt.f32.s32 %v1606
        %v1613 = vshll.u32 %v1612, 16
        %v1614 = vadd.s32 %v1613, %v1611
        %vm1615 = vcmp.lt.s32.totalorder %v1457, %v1458
        %v1616 = vsel %vm1615, %v1457, %v1458
        %v1617 = vand.u32 %v1616, 65535
        %v1618 = vshra.s32 %v1616, 16
        %v1619 = vcvt.s32.f32 %v1617
        %v1620 = vcvt.s32.f32 %v1618
        %1621 = vmin.xlane.f32.xlu0 %v1620
        %v1622 = vpop.xlane.xlu0 %1621
        %vm1623 = vcmp.eq.f32.partialorder %v1620, %v1622
        %v1624 = vsel %vm1623, %v1619, inf
        %1625 = vmin.xlane.f32.xlu0 %v1624
        %v1626 = vpop.xlane.xlu0 %1625
        %v1627 = vcvt.f32.s32 %v1626
        %v1628 = vcvt.f32.s32 %v1622
        %v1629 = vshll.u32 %v1628, 16
        %v1630 = vadd.s32 %v1629, %v1627
        %vm1631 = vcmp.lt.s32.totalorder %v1459, %v1460
        %v1632 = vsel %vm1631, %v1459, %v1460
        %v1633 = vand.u32 %v1632, 65535
        %v1634 = vshra.s32 %v1632, 16
        %v1635 = vcvt.s32.f32 %v1633
        %v1636 = vcvt.s32.f32 %v1634
        %1637 = vmin.xlane.f32.xlu0 %v1636
        %v1638 = vpop.xlane.xlu0 %1637
        %vm1639 = vcmp.eq.f32.partialorder %v1636, %v1638
        %v1640 = vsel %vm1639, %v1635, inf
        %1641 = vmin.xlane.f32.xlu0 %v1640
        %v1642 = vpop.xlane.xlu0 %1641
        %v1643 = vcvt.f32.s32 %v1642
        %v1644 = vcvt.f32.s32 %v1638
        %v1645 = vshll.u32 %v1644, 16
        %v1646 = vadd.s32 %v1645, %v1643
        %vm1647 = vcmp.lt.s32.totalorder %v1461, %v1462
        %v1648 = vsel %vm1647, %v1461, %v1462
        %v1649 = vand.u32 %v1648, 65535
        %v1650 = vshra.s32 %v1648, 16
        %v1651 = vcvt.s32.f32 %v1649
        %v1652 = vcvt.s32.f32 %v1650
        %1653 = vmin.xlane.f32.xlu0 %v1652
        %v1654 = vpop.xlane.xlu0 %1653
        %vm1655 = vcmp.eq.f32.partialorder %v1652, %v1654
        %v1656 = vsel %vm1655, %v1651, inf
        %1657 = vmin.xlane.f32.xlu0 %v1656
        %v1658 = vpop.xlane.xlu0 %1657
        %v1659 = vcvt.f32.s32 %v1658
        %v1660 = vcvt.f32.s32 %v1654
        %v1661 = vshll.u32 %v1660, 16
        %v1662 = vadd.s32 %v1661, %v1659
        %vm1663 = vcmp.lt.s32.totalorder %v1463, %v1464
        %v1664 = vsel %vm1663, %v1463, %v1464
        %v1665 = vand.u32 %v1664, 65535
        %v1666 = vshra.s32 %v1664, 16
        %v1667 = vcvt.s32.f32 %v1665
        %v1668 = vcvt.s32.f32 %v1666
        %1669 = vmin.xlane.f32.xlu0 %v1668
        %v1670 = vpop.xlane.xlu0 %1669
        %vm1671 = vcmp.eq.f32.partialorder %v1668, %v1670
        %v1672 = vsel %vm1671, %v1667, inf
        %1673 = vmin.xlane.f32.xlu0 %v1672
        %v1674 = vpop.xlane.xlu0 %1673
        %v1675 = vcvt.f32.s32 %v1674
        %v1676 = vcvt.f32.s32 %v1670
        %v1677 = vshll.u32 %v1676, 16
        %v1678 = vadd.s32 %v1677, %v1675
        %vm1679 = vcmp.lt.s32.totalorder %v1465, %v1466
        %v1680 = vsel %vm1679, %v1465, %v1466
        %v1681 = vand.u32 %v1680, 65535
        %v1682 = vshra.s32 %v1680, 16
        %v1683 = vcvt.s32.f32 %v1681
        %v1684 = vcvt.s32.f32 %v1682
        %1685 = vmin.xlane.f32.xlu0 %v1684
        %v1686 = vpop.xlane.xlu0 %1685
        %vm1687 = vcmp.eq.f32.partialorder %v1684, %v1686
        %v1688 = vsel %vm1687, %v1683, inf
        %1689 = vmin.xlane.f32.xlu0 %v1688
        %v1690 = vpop.xlane.xlu0 %1689
        %v1691 = vcvt.f32.s32 %v1690
        %v1692 = vcvt.f32.s32 %v1686
        %v1693 = vshll.u32 %v1692, 16
        %v1694 = vadd.s32 %v1693, %v1691
        %vm1695 = vcmp.lt.s32.totalorder %v1467, %v1468
        %v1696 = vsel %vm1695, %v1467, %v1468
        %v1697 = vand.u32 %v1696, 65535
        %v1698 = vshra.s32 %v1696, 16
        %v1699 = vcvt.s32.f32 %v1697
        %v1700 = vcvt.s32.f32 %v1698
        %1701 = vmin.xlane.f32.xlu0 %v1700
        %v1702 = vpop.xlane.xlu0 %1701
        %vm1703 = vcmp.eq.f32.partialorder %v1700, %v1702
        %v1704 = vsel %vm1703, %v1699, inf
        %1705 = vmin.xlane.f32.xlu0 %v1704
        %v1706 = vpop.xlane.xlu0 %1705
        %v1707 = vcvt.f32.s32 %v1706
        %v1708 = vcvt.f32.s32 %v1702
        %v1709 = vshll.u32 %v1708, 16
        %v1710 = vadd.s32 %v1709, %v1707
        %vm1711 = vcmp.lt.s32.totalorder %v1469, %v1470
        %v1712 = vsel %vm1711, %v1469, %v1470
        %v1713 = vand.u32 %v1712, 65535
        %v1714 = vshra.s32 %v1712, 16
        %v1715 = vcvt.s32.f32 %v1713
        %v1716 = vcvt.s32.f32 %v1714
        %1717 = vmin.xlane.f32.xlu0 %v1716
        %v1718 = vpop.xlane.xlu0 %1717
        %vm1719 = vcmp.eq.f32.partialorder %v1716, %v1718
        %v1720 = vsel %vm1719, %v1715, inf
        %1721 = vmin.xlane.f32.xlu0 %v1720
        %v1722 = vpop.xlane.xlu0 %1721
        %v1723 = vcvt.f32.s32 %v1722
        %v1724 = vcvt.f32.s32 %v1718
        %v1725 = vshll.u32 %v1724, 16
        %v1726 = vadd.s32 %v1725, %v1723
        %vm1727 = vcmp.eq.s32.totalorder %v826, %v1486
        %vm1728 = vcmp.eq.s32.totalorder %v827, %v1486
        %vm1729 = vcmp.eq.s32.totalorder %v826, %v1502
        %vm1730 = vcmp.eq.s32.totalorder %v827, %v1502
        %vm1731 = vcmp.eq.s32.totalorder %v826, %v1518
        %vm1732 = vcmp.eq.s32.totalorder %v827, %v1518
        %vm1733 = vcmp.eq.s32.totalorder %v826, %v1534
        %vm1734 = vcmp.eq.s32.totalorder %v827, %v1534
        %vm1735 = vcmp.eq.s32.totalorder %v826, %v1550
        %vm1736 = vcmp.eq.s32.totalorder %v827, %v1550
        %vm1737 = vcmp.eq.s32.totalorder %v826, %v1566
        %vm1738 = vcmp.eq.s32.totalorder %v827, %v1566
        %vm1739 = vcmp.eq.s32.totalorder %v826, %v1582
        %vm1740 = vcmp.eq.s32.totalorder %v827, %v1582
        %vm1741 = vcmp.eq.s32.totalorder %v826, %v1598
        %vm1742 = vcmp.eq.s32.totalorder %v827, %v1598
        %vm1743 = vcmp.eq.s32.totalorder %v826, %v1614
        %vm1744 = vcmp.eq.s32.totalorder %v827, %v1614
        %vm1745 = vcmp.eq.s32.totalorder %v826, %v1630
        %vm1746 = vcmp.eq.s32.totalorder %v827, %v1630
        %vm1747 = vcmp.eq.s32.totalorder %v826, %v1646
        %vm1748 = vcmp.eq.s32.totalorder %v827, %v1646
        %vm1749 = vcmp.eq.s32.totalorder %v826, %v1662
        %vm1750 = vcmp.eq.s32.totalorder %v827, %v1662
        %vm1751 = vcmp.eq.s32.totalorder %v826, %v1678
        %vm1752 = vcmp.eq.s32.totalorder %v827, %v1678
        %vm1753 = vcmp.eq.s32.totalorder %v826, %v1694
        %vm1754 = vcmp.eq.s32.totalorder %v827, %v1694
        %vm1755 = vcmp.eq.s32.totalorder %v826, %v1710
        %vm1756 = vcmp.eq.s32.totalorder %v827, %v1710
        %vm1757 = vcmp.eq.s32.totalorder %v826, %v1726
        %vm1758 = vcmp.eq.s32.totalorder %v827, %v1726
        %v1759 = vsel %vm1727, inf, %v1327
        %v1760 = vsel %vm1728, inf, %v1328
        %v1761 = vsel %vm1729, inf, %v1329
        %v1762 = vsel %vm1730, inf, %v1330
        %v1763 = vsel %vm1731, inf, %v1331
        %v1764 = vsel %vm1732, inf, %v1332
        %v1765 = vsel %vm1733, inf, %v1333
        %v1766 = vsel %vm1734, inf, %v1334
        %v1767 = vsel %vm1735, inf, %v1335
        %v1768 = vsel %vm1736, inf, %v1336
        %v1769 = vsel %vm1737, inf, %v1337
        %v1770 = vsel %vm1738, inf, %v1338
        %v1771 = vsel %vm1739, inf, %v1339
        %v1772 = vsel %vm1740, inf, %v1340
        %v1773 = vsel %vm1741, inf, %v1341
        %v1774 = vsel %vm1742, inf, %v1342
        %v1775 = vsel %vm1743, inf, %v1343
        %v1776 = vsel %vm1744, inf, %v1344
        %v1777 = vsel %vm1745, inf, %v1345
        %v1778 = vsel %vm1746, inf, %v1346
        %v1779 = vsel %vm1747, inf, %v1347
        %v1780 = vsel %vm1748, inf, %v1348
        %v1781 = vsel %vm1749, inf, %v1349
        %v1782 = vsel %vm1750, inf, %v1350
        %v1783 = vsel %vm1751, inf, %v1351
        %v1784 = vsel %vm1752, inf, %v1352
        %v1785 = vsel %vm1753, inf, %v1353
        %v1786 = vsel %vm1754, inf, %v1354
        %v1787 = vsel %vm1755, inf, %v1355
        %v1788 = vsel %vm1756, inf, %v1356
        %v1789 = vsel %vm1757, inf, %v1357
        %v1790 = vsel %vm1758, inf, %v1358
        %v1791 = vmin.f32 %v1759, %v1760
        %1792 = vmin.xlane.f32.xlu0 %v1791
        %v1793 = vpop.xlane.xlu0 %1792
        %v1794 = vmin.f32 %v1761, %v1762
        %1795 = vmin.xlane.f32.xlu0 %v1794
        %v1796 = vpop.xlane.xlu0 %1795
        %v1797 = vmin.f32 %v1763, %v1764
        %1798 = vmin.xlane.f32.xlu0 %v1797
        %v1799 = vpop.xlane.xlu0 %1798
        %v1800 = vmin.f32 %v1765, %v1766
        %1801 = vmin.xlane.f32.xlu0 %v1800
        %v1802 = vpop.xlane.xlu0 %1801
        %v1803 = vmin.f32 %v1767, %v1768
        %1804 = vmin.xlane.f32.xlu0 %v1803
        %v1805 = vpop.xlane.xlu0 %1804
        %v1806 = vmin.f32 %v1769, %v1770
        %1807 = vmin.xlane.f32.xlu0 %v1806
        %v1808 = vpop.xlane.xlu0 %1807
        %v1809 = vmin.f32 %v1771, %v1772
        %1810 = vmin.xlane.f32.xlu0 %v1809
        %v1811 = vpop.xlane.xlu0 %1810
        %v1812 = vmin.f32 %v1773, %v1774
        %1813 = vmin.xlane.f32.xlu0 %v1812
        %v1814 = vpop.xlane.xlu0 %1813
        %v1815 = vmin.f32 %v1775, %v1776
        %1816 = vmin.xlane.f32.xlu0 %v1815
        %v1817 = vpop.xlane.xlu0 %1816
        %v1818 = vmin.f32 %v1777, %v1778
        %1819 = vmin.xlane.f32.xlu0 %v1818
        %v1820 = vpop.xlane.xlu0 %1819
        %v1821 = vmin.f32 %v1779, %v1780
        %1822 = vmin.xlane.f32.xlu0 %v1821
        %v1823 = vpop.xlane.xlu0 %1822
        %v1824 = vmin.f32 %v1781, %v1782
        %1825 = vmin.xlane.f32.xlu0 %v1824
        %v1826 = vpop.xlane.xlu0 %1825
        %v1827 = vmin.f32 %v1783, %v1784
        %1828 = vmin.xlane.f32.xlu0 %v1827
        %v1829 = vpop.xlane.xlu0 %1828
        %v1830 = vmin.f32 %v1785, %v1786
        %1831 = vmin.xlane.f32.xlu0 %v1830
        %v1832 = vpop.xlane.xlu0 %1831
        %v1833 = vmin.f32 %v1787, %v1788
        %1834 = vmin.xlane.f32.xlu0 %v1833
        %v1835 = vpop.xlane.xlu0 %1834
        %v1836 = vmin.f32 %v1789, %v1790
        %1837 = vmin.xlane.f32.xlu0 %v1836
        %v1838 = vpop.xlane.xlu0 %1837
        %vm1839 = vcmp.le.f32.partialorder %v1759, %v1793
        %vm1840 = vcmp.le.f32.partialorder %v1760, %v1793
        %vm1841 = vcmp.le.f32.partialorder %v1761, %v1796
        %vm1842 = vcmp.le.f32.partialorder %v1762, %v1796
        %vm1843 = vcmp.le.f32.partialorder %v1763, %v1799
        %vm1844 = vcmp.le.f32.partialorder %v1764, %v1799
        %vm1845 = vcmp.le.f32.partialorder %v1765, %v1802
        %vm1846 = vcmp.le.f32.partialorder %v1766, %v1802
        %vm1847 = vcmp.le.f32.partialorder %v1767, %v1805
        %vm1848 = vcmp.le.f32.partialorder %v1768, %v1805
        %vm1849 = vcmp.le.f32.partialorder %v1769, %v1808
        %vm1850 = vcmp.le.f32.partialorder %v1770, %v1808
        %vm1851 = vcmp.le.f32.partialorder %v1771, %v1811
        %vm1852 = vcmp.le.f32.partialorder %v1772, %v1811
        %vm1853 = vcmp.le.f32.partialorder %v1773, %v1814
        %vm1854 = vcmp.le.f32.partialorder %v1774, %v1814
        %vm1855 = vcmp.le.f32.partialorder %v1775, %v1817
        %vm1856 = vcmp.le.f32.partialorder %v1776, %v1817
        %vm1857 = vcmp.le.f32.partialorder %v1777, %v1820
        %vm1858 = vcmp.le.f32.partialorder %v1778, %v1820
        %vm1859 = vcmp.le.f32.partialorder %v1779, %v1823
        %vm1860 = vcmp.le.f32.partialorder %v1780, %v1823
        %vm1861 = vcmp.le.f32.partialorder %v1781, %v1826
        %vm1862 = vcmp.le.f32.partialorder %v1782, %v1826
        %vm1863 = vcmp.le.f32.partialorder %v1783, %v1829
        %vm1864 = vcmp.le.f32.partialorder %v1784, %v1829
        %vm1865 = vcmp.le.f32.partialorder %v1785, %v1832
        %vm1866 = vcmp.le.f32.partialorder %v1786, %v1832
        %vm1867 = vcmp.le.f32.partialorder %v1787, %v1835
        %vm1868 = vcmp.le.f32.partialorder %v1788, %v1835
        %vm1869 = vcmp.le.f32.partialorder %v1789, %v1838
        %vm1870 = vcmp.le.f32.partialorder %v1790, %v1838
        %v1871 = vsel %vm1839, %v826, 256
        %v1872 = vsel %vm1840, %v827, 256
        %v1873 = vsel %vm1841, %v826, 256
        %v1874 = vsel %vm1842, %v827, 256
        %v1875 = vsel %vm1843, %v826, 256
        %v1876 = vsel %vm1844, %v827, 256
        %v1877 = vsel %vm1845, %v826, 256
        %v1878 = vsel %vm1846, %v827, 256
        %v1879 = vsel %vm1847, %v826, 256
        %v1880 = vsel %vm1848, %v827, 256
        %v1881 = vsel %vm1849, %v826, 256
        %v1882 = vsel %vm1850, %v827, 256
        %v1883 = vsel %vm1851, %v826, 256
        %v1884 = vsel %vm1852, %v827, 256
        %v1885 = vsel %vm1853, %v826, 256
        %v1886 = vsel %vm1854, %v827, 256
        %v1887 = vsel %vm1855, %v826, 256
        %v1888 = vsel %vm1856, %v827, 256
        %v1889 = vsel %vm1857, %v826, 256
        %v1890 = vsel %vm1858, %v827, 256
        %v1891 = vsel %vm1859, %v826, 256
        %v1892 = vsel %vm1860, %v827, 256
        %v1893 = vsel %vm1861, %v826, 256
        %v1894 = vsel %vm1862, %v827, 256
        %v1895 = vsel %vm1863, %v826, 256
        %v1896 = vsel %vm1864, %v827, 256
        %v1897 = vsel %vm1865, %v826, 256
        %v1898 = vsel %vm1866, %v827, 256
        %v1899 = vsel %vm1867, %v826, 256
        %v1900 = vsel %vm1868, %v827, 256
        %v1901 = vsel %vm1869, %v826, 256
        %v1902 = vsel %vm1870, %v827, 256
        %vm1903 = vcmp.lt.s32.totalorder %v1871, %v1872
        %v1904 = vsel %vm1903, %v1871, %v1872
        %v1905 = vand.u32 %v1904, 65535
        %v1906 = vshra.s32 %v1904, 16
        %v1907 = vcvt.s32.f32 %v1905
        %v1908 = vcvt.s32.f32 %v1906
        %1909 = vmin.xlane.f32.xlu0 %v1908
        %v1910 = vpop.xlane.xlu0 %1909
        %vm1911 = vcmp.eq.f32.partialorder %v1908, %v1910
        %v1912 = vsel %vm1911, %v1907, inf
        %1913 = vmin.xlane.f32.xlu0 %v1912
        %v1914 = vpop.xlane.xlu0 %1913
        %v1915 = vcvt.f32.s32 %v1914
        %v1916 = vcvt.f32.s32 %v1910
        %v1917 = vshll.u32 %v1916, 16
        %v1918 = vadd.s32 %v1917, %v1915
        %vm1919 = vcmp.lt.s32.totalorder %v1873, %v1874
        %v1920 = vsel %vm1919, %v1873, %v1874
        %v1921 = vand.u32 %v1920, 65535
        %v1922 = vshra.s32 %v1920, 16
        %v1923 = vcvt.s32.f32 %v1921
        %v1924 = vcvt.s32.f32 %v1922
        %1925 = vmin.xlane.f32.xlu0 %v1924
        %v1926 = vpop.xlane.xlu0 %1925
        %vm1927 = vcmp.eq.f32.partialorder %v1924, %v1926
        %v1928 = vsel %vm1927, %v1923, inf
        %1929 = vmin.xlane.f32.xlu0 %v1928
        %v1930 = vpop.xlane.xlu0 %1929
        %v1931 = vcvt.f32.s32 %v1930
        %v1932 = vcvt.f32.s32 %v1926
        %v1933 = vshll.u32 %v1932, 16
        %v1934 = vadd.s32 %v1933, %v1931
        %vm1935 = vcmp.lt.s32.totalorder %v1875, %v1876
        %v1936 = vsel %vm1935, %v1875, %v1876
        %v1937 = vand.u32 %v1936, 65535
        %v1938 = vshra.s32 %v1936, 16
        %v1939 = vcvt.s32.f32 %v1937
        %v1940 = vcvt.s32.f32 %v1938
        %1941 = vmin.xlane.f32.xlu0 %v1940
        %v1942 = vpop.xlane.xlu0 %1941
        %vm1943 = vcmp.eq.f32.partialorder %v1940, %v1942
        %v1944 = vsel %vm1943, %v1939, inf
        %1945 = vmin.xlane.f32.xlu0 %v1944
        %v1946 = vpop.xlane.xlu0 %1945
        %v1947 = vcvt.f32.s32 %v1946
        %v1948 = vcvt.f32.s32 %v1942
        %v1949 = vshll.u32 %v1948, 16
        %v1950 = vadd.s32 %v1949, %v1947
        %vm1951 = vcmp.lt.s32.totalorder %v1877, %v1878
        %v1952 = vsel %vm1951, %v1877, %v1878
        %v1953 = vand.u32 %v1952, 65535
        %v1954 = vshra.s32 %v1952, 16
        %v1955 = vcvt.s32.f32 %v1953
        %v1956 = vcvt.s32.f32 %v1954
        %1957 = vmin.xlane.f32.xlu0 %v1956
        %v1958 = vpop.xlane.xlu0 %1957
        %vm1959 = vcmp.eq.f32.partialorder %v1956, %v1958
        %v1960 = vsel %vm1959, %v1955, inf
        %1961 = vmin.xlane.f32.xlu0 %v1960
        %v1962 = vpop.xlane.xlu0 %1961
        %v1963 = vcvt.f32.s32 %v1962
        %v1964 = vcvt.f32.s32 %v1958
        %v1965 = vshll.u32 %v1964, 16
        %v1966 = vadd.s32 %v1965, %v1963
        %vm1967 = vcmp.lt.s32.totalorder %v1879, %v1880
        %v1968 = vsel %vm1967, %v1879, %v1880
        %v1969 = vand.u32 %v1968, 65535
        %v1970 = vshra.s32 %v1968, 16
        %v1971 = vcvt.s32.f32 %v1969
        %v1972 = vcvt.s32.f32 %v1970
        %1973 = vmin.xlane.f32.xlu0 %v1972
        %v1974 = vpop.xlane.xlu0 %1973
        %vm1975 = vcmp.eq.f32.partialorder %v1972, %v1974
        %v1976 = vsel %vm1975, %v1971, inf
        %1977 = vmin.xlane.f32.xlu0 %v1976
        %v1978 = vpop.xlane.xlu0 %1977
        %v1979 = vcvt.f32.s32 %v1978
        %v1980 = vcvt.f32.s32 %v1974
        %v1981 = vshll.u32 %v1980, 16
        %v1982 = vadd.s32 %v1981, %v1979
        %vm1983 = vcmp.lt.s32.totalorder %v1881, %v1882
        %v1984 = vsel %vm1983, %v1881, %v1882
        %v1985 = vand.u32 %v1984, 65535
        %v1986 = vshra.s32 %v1984, 16
        %v1987 = vcvt.s32.f32 %v1985
        %v1988 = vcvt.s32.f32 %v1986
        %1989 = vmin.xlane.f32.xlu0 %v1988
        %v1990 = vpop.xlane.xlu0 %1989
        %vm1991 = vcmp.eq.f32.partialorder %v1988, %v1990
        %v1992 = vsel %vm1991, %v1987, inf
        %1993 = vmin.xlane.f32.xlu0 %v1992
        %v1994 = vpop.xlane.xlu0 %1993
        %v1995 = vcvt.f32.s32 %v1994
        %v1996 = vcvt.f32.s32 %v1990
        %v1997 = vshll.u32 %v1996, 16
        %v1998 = vadd.s32 %v1997, %v1995
        %vm1999 = vcmp.lt.s32.totalorder %v1883, %v1884
        %v2000 = vsel %vm1999, %v1883, %v1884
        %v2001 = vand.u32 %v2000, 65535
        %v2002 = vshra.s32 %v2000, 16
        %v2003 = vcvt.s32.f32 %v2001
        %v2004 = vcvt.s32.f32 %v2002
        %2005 = vmin.xlane.f32.xlu0 %v2004
        %v2006 = vpop.xlane.xlu0 %2005
        %vm2007 = vcmp.eq.f32.partialorder %v2004, %v2006
        %v2008 = vsel %vm2007, %v2003, inf
        %2009 = vmin.xlane.f32.xlu0 %v2008
        %v2010 = vpop.xlane.xlu0 %2009
        %v2011 = vcvt.f32.s32 %v2010
        %v2012 = vcvt.f32.s32 %v2006
        %v2013 = vshll.u32 %v2012, 16
        %v2014 = vadd.s32 %v2013, %v2011
        %vm2015 = vcmp.lt.s32.totalorder %v1885, %v1886
        %v2016 = vsel %vm2015, %v1885, %v1886
        %v2017 = vand.u32 %v2016, 65535
        %v2018 = vshra.s32 %v2016, 16
        %v2019 = vcvt.s32.f32 %v2017
        %v2020 = vcvt.s32.f32 %v2018
        %2021 = vmin.xlane.f32.xlu0 %v2020
        %v2022 = vpop.xlane.xlu0 %2021
        %vm2023 = vcmp.eq.f32.partialorder %v2020, %v2022
        %v2024 = vsel %vm2023, %v2019, inf
        %2025 = vmin.xlane.f32.xlu0 %v2024
        %v2026 = vpop.xlane.xlu0 %2025
        %v2027 = vcvt.f32.s32 %v2026
        %v2028 = vcvt.f32.s32 %v2022
        %v2029 = vshll.u32 %v2028, 16
        %v2030 = vadd.s32 %v2029, %v2027
        %vm2031 = vcmp.lt.s32.totalorder %v1887, %v1888
        %v2032 = vsel %vm2031, %v1887, %v1888
        %v2033 = vand.u32 %v2032, 65535
        %v2034 = vshra.s32 %v2032, 16
        %v2035 = vcvt.s32.f32 %v2033
        %v2036 = vcvt.s32.f32 %v2034
        %2037 = vmin.xlane.f32.xlu0 %v2036
        %v2038 = vpop.xlane.xlu0 %2037
        %vm2039 = vcmp.eq.f32.partialorder %v2036, %v2038
        %v2040 = vsel %vm2039, %v2035, inf
        %2041 = vmin.xlane.f32.xlu0 %v2040
        %v2042 = vpop.xlane.xlu0 %2041
        %v2043 = vcvt.f32.s32 %v2042
        %v2044 = vcvt.f32.s32 %v2038
        %v2045 = vshll.u32 %v2044, 16
        %v2046 = vadd.s32 %v2045, %v2043
        %vm2047 = vcmp.lt.s32.totalorder %v1889, %v1890
        %v2048 = vsel %vm2047, %v1889, %v1890
        %v2049 = vand.u32 %v2048, 65535
        %v2050 = vshra.s32 %v2048, 16
        %v2051 = vcvt.s32.f32 %v2049
        %v2052 = vcvt.s32.f32 %v2050
        %2053 = vmin.xlane.f32.xlu0 %v2052
        %v2054 = vpop.xlane.xlu0 %2053
        %vm2055 = vcmp.eq.f32.partialorder %v2052, %v2054
        %v2056 = vsel %vm2055, %v2051, inf
        %2057 = vmin.xlane.f32.xlu0 %v2056
        %v2058 = vpop.xlane.xlu0 %2057
        %v2059 = vcvt.f32.s32 %v2058
        %v2060 = vcvt.f32.s32 %v2054
        %v2061 = vshll.u32 %v2060, 16
        %v2062 = vadd.s32 %v2061, %v2059
        %vm2063 = vcmp.lt.s32.totalorder %v1891, %v1892
        %v2064 = vsel %vm2063, %v1891, %v1892
        %v2065 = vand.u32 %v2064, 65535
        %v2066 = vshra.s32 %v2064, 16
        %v2067 = vcvt.s32.f32 %v2065
        %v2068 = vcvt.s32.f32 %v2066
        %2069 = vmin.xlane.f32.xlu0 %v2068
        %v2070 = vpop.xlane.xlu0 %2069
        %vm2071 = vcmp.eq.f32.partialorder %v2068, %v2070
        %v2072 = vsel %vm2071, %v2067, inf
        %2073 = vmin.xlane.f32.xlu0 %v2072
        %v2074 = vpop.xlane.xlu0 %2073
        %v2075 = vcvt.f32.s32 %v2074
        %v2076 = vcvt.f32.s32 %v2070
        %v2077 = vshll.u32 %v2076, 16
        %v2078 = vadd.s32 %v2077, %v2075
        %vm2079 = vcmp.lt.s32.totalorder %v1893, %v1894
        %v2080 = vsel %vm2079, %v1893, %v1894
        %v2081 = vand.u32 %v2080, 65535
        %v2082 = vshra.s32 %v2080, 16
        %v2083 = vcvt.s32.f32 %v2081
        %v2084 = vcvt.s32.f32 %v2082
        %2085 = vmin.xlane.f32.xlu0 %v2084
        %v2086 = vpop.xlane.xlu0 %2085
        %vm2087 = vcmp.eq.f32.partialorder %v2084, %v2086
        %v2088 = vsel %vm2087, %v2083, inf
        %2089 = vmin.xlane.f32.xlu0 %v2088
        %v2090 = vpop.xlane.xlu0 %2089
        %v2091 = vcvt.f32.s32 %v2090
        %v2092 = vcvt.f32.s32 %v2086
        %v2093 = vshll.u32 %v2092, 16
        %v2094 = vadd.s32 %v2093, %v2091
        %vm2095 = vcmp.lt.s32.totalorder %v1895, %v1896
        %v2096 = vsel %vm2095, %v1895, %v1896
        %v2097 = vand.u32 %v2096, 65535
        %v2098 = vshra.s32 %v2096, 16
        %v2099 = vcvt.s32.f32 %v2097
        %v2100 = vcvt.s32.f32 %v2098
        %2101 = vmin.xlane.f32.xlu0 %v2100
        %v2102 = vpop.xlane.xlu0 %2101
        %vm2103 = vcmp.eq.f32.partialorder %v2100, %v2102
        %v2104 = vsel %vm2103, %v2099, inf
        %2105 = vmin.xlane.f32.xlu0 %v2104
        %v2106 = vpop.xlane.xlu0 %2105
        %v2107 = vcvt.f32.s32 %v2106
        %v2108 = vcvt.f32.s32 %v2102
        %v2109 = vshll.u32 %v2108, 16
        %v2110 = vadd.s32 %v2109, %v2107
        %vm2111 = vcmp.lt.s32.totalorder %v1897, %v1898
        %v2112 = vsel %vm2111, %v1897, %v1898
        %v2113 = vand.u32 %v2112, 65535
        %v2114 = vshra.s32 %v2112, 16
        %v2115 = vcvt.s32.f32 %v2113
        %v2116 = vcvt.s32.f32 %v2114
        %2117 = vmin.xlane.f32.xlu0 %v2116
        %v2118 = vpop.xlane.xlu0 %2117
        %vm2119 = vcmp.eq.f32.partialorder %v2116, %v2118
        %v2120 = vsel %vm2119, %v2115, inf
        %2121 = vmin.xlane.f32.xlu0 %v2120
        %v2122 = vpop.xlane.xlu0 %2121
        %v2123 = vcvt.f32.s32 %v2122
        %v2124 = vcvt.f32.s32 %v2118
        %v2125 = vshll.u32 %v2124, 16
        %v2126 = vadd.s32 %v2125, %v2123
        %vm2127 = vcmp.lt.s32.totalorder %v1899, %v1900
        %v2128 = vsel %vm2127, %v1899, %v1900
        %v2129 = vand.u32 %v2128, 65535
        %v2130 = vshra.s32 %v2128, 16
        %v2131 = vcvt.s32.f32 %v2129
        %v2132 = vcvt.s32.f32 %v2130
        %2133 = vmin.xlane.f32.xlu0 %v2132
        %v2134 = vpop.xlane.xlu0 %2133
        %vm2135 = vcmp.eq.f32.partialorder %v2132, %v2134
        %v2136 = vsel %vm2135, %v2131, inf
        %2137 = vmin.xlane.f32.xlu0 %v2136
        %v2138 = vpop.xlane.xlu0 %2137
        %v2139 = vcvt.f32.s32 %v2138
        %v2140 = vcvt.f32.s32 %v2134
        %v2141 = vshll.u32 %v2140, 16
        %v2142 = vadd.s32 %v2141, %v2139
        %vm2143 = vcmp.lt.s32.totalorder %v1901, %v1902
        %v2144 = vsel %vm2143, %v1901, %v1902
        %v2145 = vand.u32 %v2144, 65535
        %v2146 = vshra.s32 %v2144, 16
        %v2147 = vcvt.s32.f32 %v2145
        %v2148 = vcvt.s32.f32 %v2146
        %2149 = vmin.xlane.f32.xlu0 %v2148
        %v2150 = vpop.xlane.xlu0 %2149
        %vm2151 = vcmp.eq.f32.partialorder %v2148, %v2150
        %v2152 = vsel %vm2151, %v2147, inf
        %2153 = vmin.xlane.f32.xlu0 %v2152
        %v2154 = vpop.xlane.xlu0 %2153
        %v2155 = vcvt.f32.s32 %v2154
        %v2156 = vcvt.f32.s32 %v2150
        %v2157 = vshll.u32 %v2156, 16
        %v2158 = vadd.s32 %v2157, %v2155
        %2159 = vset.pattern.permute.xlu0 0
        %2160 = vperm.xlu0 %2159, %v847
        %v2161 = vpop.permute.xlu0 %2160
        %2162 = vset.pattern.permute.xlu0 0
        %2163 = vperm.xlu0 %2162, %v848
        %v2164 = vpop.permute.xlu0 %2163
        %2165 = vset.pattern.permute.xlu0 0
        %2166 = vperm.xlu0 %2165, %v849
        %v2167 = vpop.permute.xlu0 %2166
        %2168 = vset.pattern.permute.xlu0 0
        %2169 = vperm.xlu0 %2168, %v850
        %v2170 = vpop.permute.xlu0 %2169
        %2171 = vset.pattern.permute.xlu0 0
        %2172 = vperm.xlu0 %2171, %v851
        %v2173 = vpop.permute.xlu0 %2172
        %2174 = vset.pattern.permute.xlu0 0
        %2175 = vperm.xlu0 %2174, %v852
        %v2176 = vpop.permute.xlu0 %2175
        %2177 = vset.pattern.permute.xlu0 0
        %2178 = vperm.xlu0 %2177, %v853
        %v2179 = vpop.permute.xlu0 %2178
        %2180 = vset.pattern.permute.xlu0 0
        %2181 = vperm.xlu0 %2180, %v854
        %v2182 = vpop.permute.xlu0 %2181
        %2183 = vset.pattern.permute.xlu0 0
        %2184 = vperm.xlu0 %2183, %v855
        %v2185 = vpop.permute.xlu0 %2184
        %2186 = vset.pattern.permute.xlu0 0
        %2187 = vperm.xlu0 %2186, %v856
        %v2188 = vpop.permute.xlu0 %2187
        %2189 = vset.pattern.permute.xlu0 0
        %2190 = vperm.xlu0 %2189, %v857
        %v2191 = vpop.permute.xlu0 %2190
        %2192 = vset.pattern.permute.xlu0 0
        %2193 = vperm.xlu0 %2192, %v858
        %v2194 = vpop.permute.xlu0 %2193
        %2195 = vset.pattern.permute.xlu0 0
        %2196 = vperm.xlu0 %2195, %v859
        %v2197 = vpop.permute.xlu0 %2196
        %2198 = vset.pattern.permute.xlu0 0
        %2199 = vperm.xlu0 %2198, %v860
        %v2200 = vpop.permute.xlu0 %2199
        %2201 = vset.pattern.permute.xlu0 0
        %2202 = vperm.xlu0 %2201, %v861
        %v2203 = vpop.permute.xlu0 %2202
        %2204 = vset.pattern.permute.xlu0 0
        %2205 = vperm.xlu0 %2204, %v862
        %v2206 = vpop.permute.xlu0 %2205
        %2207 = vset.pattern.permute.xlu0 0
        %2208 = vperm.xlu0 %2207, %v1054
        %v2209 = vpop.permute.xlu0 %2208
        %2210 = vset.pattern.permute.xlu0 0
        %2211 = vperm.xlu0 %2210, %v1070
        %v2212 = vpop.permute.xlu0 %2211
        %2213 = vset.pattern.permute.xlu0 0
        %2214 = vperm.xlu0 %2213, %v1086
        %v2215 = vpop.permute.xlu0 %2214
        %2216 = vset.pattern.permute.xlu0 0
        %2217 = vperm.xlu0 %2216, %v1102
        %v2218 = vpop.permute.xlu0 %2217
        %2219 = vset.pattern.permute.xlu0 0
        %2220 = vperm.xlu0 %2219, %v1118
        %v2221 = vpop.permute.xlu0 %2220
        %2222 = vset.pattern.permute.xlu0 0
        %2223 = vperm.xlu0 %2222, %v1134
        %v2224 = vpop.permute.xlu0 %2223
        %2225 = vset.pattern.permute.xlu0 0
        %2226 = vperm.xlu0 %2225, %v1150
        %v2227 = vpop.permute.xlu0 %2226
        %2228 = vset.pattern.permute.xlu0 0
        %2229 = vperm.xlu0 %2228, %v1166
        %v2230 = vpop.permute.xlu0 %2229
        %2231 = vset.pattern.permute.xlu0 0
        %2232 = vperm.xlu0 %2231, %v1182
        %v2233 = vpop.permute.xlu0 %2232
        %2234 = vset.pattern.permute.xlu0 0
        %2235 = vperm.xlu0 %2234, %v1198
        %v2236 = vpop.permute.xlu0 %2235
        %2237 = vset.pattern.permute.xlu0 0
        %2238 = vperm.xlu0 %2237, %v1214
        %v2239 = vpop.permute.xlu0 %2238
        %2240 = vset.pattern.permute.xlu0 0
        %2241 = vperm.xlu0 %2240, %v1230
        %v2242 = vpop.permute.xlu0 %2241
        %2243 = vset.pattern.permute.xlu0 0
        %2244 = vperm.xlu0 %2243, %v1246
        %v2245 = vpop.permute.xlu0 %2244
        %2246 = vset.pattern.permute.xlu0 0
        %2247 = vperm.xlu0 %2246, %v1262
        %v2248 = vpop.permute.xlu0 %2247
        %2249 = vset.pattern.permute.xlu0 0
        %2250 = vperm.xlu0 %2249, %v1278
        %v2251 = vpop.permute.xlu0 %2250
        %2252 = vset.pattern.permute.xlu0 0
        %2253 = vperm.xlu0 %2252, %v1294
        %v2254 = vpop.permute.xlu0 %2253
        %2255 = vset.pattern.permute.xlu0 0
        %2256 = vperm.xlu0 %2255, %v1486
        %v2257 = vpop.permute.xlu0 %2256
        %2258 = vset.pattern.permute.xlu0 0
        %2259 = vperm.xlu0 %2258, %v1502
        %v2260 = vpop.permute.xlu0 %2259
        %2261 = vset.pattern.permute.xlu0 0
        %2262 = vperm.xlu0 %2261, %v1518
        %v2263 = vpop.permute.xlu0 %2262
        %2264 = vset.pattern.permute.xlu0 0
        %2265 = vperm.xlu0 %2264, %v1534
        %v2266 = vpop.permute.xlu0 %2265
        %2267 = vset.pattern.permute.xlu0 0
        %2268 = vperm.xlu0 %2267, %v1550
        %v2269 = vpop.permute.xlu0 %2268
        %2270 = vset.pattern.permute.xlu0 0
        %2271 = vperm.xlu0 %2270, %v1566
        %v2272 = vpop.permute.xlu0 %2271
        %2273 = vset.pattern.permute.xlu0 0
        %2274 = vperm.xlu0 %2273, %v1582
        %v2275 = vpop.permute.xlu0 %2274
        %2276 = vset.pattern.permute.xlu0 0
        %2277 = vperm.xlu0 %2276, %v1598
        %v2278 = vpop.permute.xlu0 %2277
        %2279 = vset.pattern.permute.xlu0 0
        %2280 = vperm.xlu0 %2279, %v1614
        %v2281 = vpop.permute.xlu0 %2280
        %2282 = vset.pattern.permute.xlu0 0
        %2283 = vperm.xlu0 %2282, %v1630
        %v2284 = vpop.permute.xlu0 %2283
        %2285 = vset.pattern.permute.xlu0 0
        %2286 = vperm.xlu0 %2285, %v1646
        %v2287 = vpop.permute.xlu0 %2286
        %2288 = vset.pattern.permute.xlu0 0
        %2289 = vperm.xlu0 %2288, %v1662
        %v2290 = vpop.permute.xlu0 %2289
        %2291 = vset.pattern.permute.xlu0 0
        %2292 = vperm.xlu0 %2291, %v1678
        %v2293 = vpop.permute.xlu0 %2292
        %2294 = vset.pattern.permute.xlu0 0
        %2295 = vperm.xlu0 %2294, %v1694
        %v2296 = vpop.permute.xlu0 %2295
        %2297 = vset.pattern.permute.xlu0 0
        %2298 = vperm.xlu0 %2297, %v1710
        %v2299 = vpop.permute.xlu0 %2298
        %2300 = vset.pattern.permute.xlu0 0
        %2301 = vperm.xlu0 %2300, %v1726
        %v2302 = vpop.permute.xlu0 %2301
        %2303 = vset.pattern.permute.xlu0 0
        %2304 = vperm.xlu0 %2303, %v1918
        %v2305 = vpop.permute.xlu0 %2304
        %2306 = vset.pattern.permute.xlu0 0
        %2307 = vperm.xlu0 %2306, %v1934
        %v2308 = vpop.permute.xlu0 %2307
        %2309 = vset.pattern.permute.xlu0 0
        %2310 = vperm.xlu0 %2309, %v1950
        %v2311 = vpop.permute.xlu0 %2310
        %2312 = vset.pattern.permute.xlu0 0
        %2313 = vperm.xlu0 %2312, %v1966
        %v2314 = vpop.permute.xlu0 %2313
        %2315 = vset.pattern.permute.xlu0 0
        %2316 = vperm.xlu0 %2315, %v1982
        %v2317 = vpop.permute.xlu0 %2316
        %2318 = vset.pattern.permute.xlu0 0
        %2319 = vperm.xlu0 %2318, %v1998
        %v2320 = vpop.permute.xlu0 %2319
        %2321 = vset.pattern.permute.xlu0 0
        %2322 = vperm.xlu0 %2321, %v2014
        %v2323 = vpop.permute.xlu0 %2322
        %2324 = vset.pattern.permute.xlu0 0
        %2325 = vperm.xlu0 %2324, %v2030
        %v2326 = vpop.permute.xlu0 %2325
        %2327 = vset.pattern.permute.xlu0 0
        %2328 = vperm.xlu0 %2327, %v2046
        %v2329 = vpop.permute.xlu0 %2328
        %2330 = vset.pattern.permute.xlu0 0
        %2331 = vperm.xlu0 %2330, %v2062
        %v2332 = vpop.permute.xlu0 %2331
        %2333 = vset.pattern.permute.xlu0 0
        %2334 = vperm.xlu0 %2333, %v2078
        %v2335 = vpop.permute.xlu0 %2334
        %2336 = vset.pattern.permute.xlu0 0
        %2337 = vperm.xlu0 %2336, %v2094
        %v2338 = vpop.permute.xlu0 %2337
        %2339 = vset.pattern.permute.xlu0 0
        %2340 = vperm.xlu0 %2339, %v2110
        %v2341 = vpop.permute.xlu0 %2340
        %2342 = vset.pattern.permute.xlu0 0
        %2343 = vperm.xlu0 %2342, %v2126
        %v2344 = vpop.permute.xlu0 %2343
        %2345 = vset.pattern.permute.xlu0 0
        %2346 = vperm.xlu0 %2345, %v2142
        %v2347 = vpop.permute.xlu0 %2346
        %2348 = vset.pattern.permute.xlu0 0
        %2349 = vperm.xlu0 %2348, %v2158
        %v2350 = vpop.permute.xlu0 %2349
        %vm2351 = vcmp.eq.s32.totalorder %v826, %v2161
        %vm2352 = vcmp.eq.s32.totalorder %v827, %v2161
        %vm2353 = vcmp.eq.s32.totalorder %v826, %v2164
        %vm2354 = vcmp.eq.s32.totalorder %v827, %v2164
        %vm2355 = vcmp.eq.s32.totalorder %v826, %v2167
        %vm2356 = vcmp.eq.s32.totalorder %v827, %v2167
        %vm2357 = vcmp.eq.s32.totalorder %v826, %v2170
        %vm2358 = vcmp.eq.s32.totalorder %v827, %v2170
        %vm2359 = vcmp.eq.s32.totalorder %v826, %v2173
        %vm2360 = vcmp.eq.s32.totalorder %v827, %v2173
        %vm2361 = vcmp.eq.s32.totalorder %v826, %v2176
        %vm2362 = vcmp.eq.s32.totalorder %v827, %v2176
        %vm2363 = vcmp.eq.s32.totalorder %v826, %v2179
        %vm2364 = vcmp.eq.s32.totalorder %v827, %v2179
        %vm2365 = vcmp.eq.s32.totalorder %v826, %v2182
        %vm2366 = vcmp.eq.s32.totalorder %v827, %v2182
        %vm2367 = vcmp.eq.s32.totalorder %v826, %v2185
        %vm2368 = vcmp.eq.s32.totalorder %v827, %v2185
        %vm2369 = vcmp.eq.s32.totalorder %v826, %v2188
        %vm2370 = vcmp.eq.s32.totalorder %v827, %v2188
        %vm2371 = vcmp.eq.s32.totalorder %v826, %v2191
        %vm2372 = vcmp.eq.s32.totalorder %v827, %v2191
        %vm2373 = vcmp.eq.s32.totalorder %v826, %v2194
        %vm2374 = vcmp.eq.s32.totalorder %v827, %v2194
        %vm2375 = vcmp.eq.s32.totalorder %v826, %v2197
        %vm2376 = vcmp.eq.s32.totalorder %v827, %v2197
        %vm2377 = vcmp.eq.s32.totalorder %v826, %v2200
        %vm2378 = vcmp.eq.s32.totalorder %v827, %v2200
        %vm2379 = vcmp.eq.s32.totalorder %v826, %v2203
        %vm2380 = vcmp.eq.s32.totalorder %v827, %v2203
        %vm2381 = vcmp.eq.s32.totalorder %v826, %v2206
        %vm2382 = vcmp.eq.s32.totalorder %v827, %v2206
        %vm2383 = vcmp.eq.s32.totalorder %v826, %v2209
        %vm2384 = vcmp.eq.s32.totalorder %v827, %v2209
        %vm2385 = vcmp.eq.s32.totalorder %v826, %v2212
        %vm2386 = vcmp.eq.s32.totalorder %v827, %v2212
        %vm2387 = vcmp.eq.s32.totalorder %v826, %v2215
        %vm2388 = vcmp.eq.s32.totalorder %v827, %v2215
        %vm2389 = vcmp.eq.s32.totalorder %v826, %v2218
        %vm2390 = vcmp.eq.s32.totalorder %v827, %v2218
        %vm2391 = vcmp.eq.s32.totalorder %v826, %v2221
        %vm2392 = vcmp.eq.s32.totalorder %v827, %v2221
        %vm2393 = vcmp.eq.s32.totalorder %v826, %v2224
        %vm2394 = vcmp.eq.s32.totalorder %v827, %v2224
        %vm2395 = vcmp.eq.s32.totalorder %v826, %v2227
        %vm2396 = vcmp.eq.s32.totalorder %v827, %v2227
        %vm2397 = vcmp.eq.s32.totalorder %v826, %v2230
        %vm2398 = vcmp.eq.s32.totalorder %v827, %v2230
        %vm2399 = vcmp.eq.s32.totalorder %v826, %v2233
        %vm2400 = vcmp.eq.s32.totalorder %v827, %v2233
        %vm2401 = vcmp.eq.s32.totalorder %v826, %v2236
        %vm2402 = vcmp.eq.s32.totalorder %v827, %v2236
        %vm2403 = vcmp.eq.s32.totalorder %v826, %v2239
        %vm2404 = vcmp.eq.s32.totalorder %v827, %v2239
        %vm2405 = vcmp.eq.s32.totalorder %v826, %v2242
        %vm2406 = vcmp.eq.s32.totalorder %v827, %v2242
        %vm2407 = vcmp.eq.s32.totalorder %v826, %v2245
        %vm2408 = vcmp.eq.s32.totalorder %v827, %v2245
        %vm2409 = vcmp.eq.s32.totalorder %v826, %v2248
        %vm2410 = vcmp.eq.s32.totalorder %v827, %v2248
        %vm2411 = vcmp.eq.s32.totalorder %v826, %v2251
        %vm2412 = vcmp.eq.s32.totalorder %v827, %v2251
        %vm2413 = vcmp.eq.s32.totalorder %v826, %v2254
        %vm2414 = vcmp.eq.s32.totalorder %v827, %v2254
        %vm2415 = vcmp.eq.s32.totalorder %v826, %v2257
        %vm2416 = vcmp.eq.s32.totalorder %v827, %v2257
        %vm2417 = vcmp.eq.s32.totalorder %v826, %v2260
        %vm2418 = vcmp.eq.s32.totalorder %v827, %v2260
        %vm2419 = vcmp.eq.s32.totalorder %v826, %v2263
        %vm2420 = vcmp.eq.s32.totalorder %v827, %v2263
        %vm2421 = vcmp.eq.s32.totalorder %v826, %v2266
        %vm2422 = vcmp.eq.s32.totalorder %v827, %v2266
        %vm2423 = vcmp.eq.s32.totalorder %v826, %v2269
        %vm2424 = vcmp.eq.s32.totalorder %v827, %v2269
        %vm2425 = vcmp.eq.s32.totalorder %v826, %v2272
        %vm2426 = vcmp.eq.s32.totalorder %v827, %v2272
        %vm2427 = vcmp.eq.s32.totalorder %v826, %v2275
        %vm2428 = vcmp.eq.s32.totalorder %v827, %v2275
        %vm2429 = vcmp.eq.s32.totalorder %v826, %v2278
        %vm2430 = vcmp.eq.s32.totalorder %v827, %v2278
        %vm2431 = vcmp.eq.s32.totalorder %v826, %v2281
        %vm2432 = vcmp.eq.s32.totalorder %v827, %v2281
        %vm2433 = vcmp.eq.s32.totalorder %v826, %v2284
        %vm2434 = vcmp.eq.s32.totalorder %v827, %v2284
        %vm2435 = vcmp.eq.s32.totalorder %v826, %v2287
        %vm2436 = vcmp.eq.s32.totalorder %v827, %v2287
        %vm2437 = vcmp.eq.s32.totalorder %v826, %v2290
        %vm2438 = vcmp.eq.s32.totalorder %v827, %v2290
        %vm2439 = vcmp.eq.s32.totalorder %v826, %v2293
        %vm2440 = vcmp.eq.s32.totalorder %v827, %v2293
        %vm2441 = vcmp.eq.s32.totalorder %v826, %v2296
        %vm2442 = vcmp.eq.s32.totalorder %v827, %v2296
        %vm2443 = vcmp.eq.s32.totalorder %v826, %v2299
        %vm2444 = vcmp.eq.s32.totalorder %v827, %v2299
        %vm2445 = vcmp.eq.s32.totalorder %v826, %v2302
        %vm2446 = vcmp.eq.s32.totalorder %v827, %v2302
        %vm2447 = vcmp.eq.s32.totalorder %v826, %v2305
        %vm2448 = vcmp.eq.s32.totalorder %v827, %v2305
        %vm2449 = vcmp.eq.s32.totalorder %v826, %v2308
        %vm2450 = vcmp.eq.s32.totalorder %v827, %v2308
        %vm2451 = vcmp.eq.s32.totalorder %v826, %v2311
        %vm2452 = vcmp.eq.s32.totalorder %v827, %v2311
        %vm2453 = vcmp.eq.s32.totalorder %v826, %v2314
        %vm2454 = vcmp.eq.s32.totalorder %v827, %v2314
        %vm2455 = vcmp.eq.s32.totalorder %v826, %v2317
        %vm2456 = vcmp.eq.s32.totalorder %v827, %v2317
        %vm2457 = vcmp.eq.s32.totalorder %v826, %v2320
        %vm2458 = vcmp.eq.s32.totalorder %v827, %v2320
        %vm2459 = vcmp.eq.s32.totalorder %v826, %v2323
        %vm2460 = vcmp.eq.s32.totalorder %v827, %v2323
        %vm2461 = vcmp.eq.s32.totalorder %v826, %v2326
        %vm2462 = vcmp.eq.s32.totalorder %v827, %v2326
        %vm2463 = vcmp.eq.s32.totalorder %v826, %v2329
        %vm2464 = vcmp.eq.s32.totalorder %v827, %v2329
        %vm2465 = vcmp.eq.s32.totalorder %v826, %v2332
        %vm2466 = vcmp.eq.s32.totalorder %v827, %v2332
        %vm2467 = vcmp.eq.s32.totalorder %v826, %v2335
        %vm2468 = vcmp.eq.s32.totalorder %v827, %v2335
        %vm2469 = vcmp.eq.s32.totalorder %v826, %v2338
        %vm2470 = vcmp.eq.s32.totalorder %v827, %v2338
        %vm2471 = vcmp.eq.s32.totalorder %v826, %v2341
        %vm2472 = vcmp.eq.s32.totalorder %v827, %v2341
        %vm2473 = vcmp.eq.s32.totalorder %v826, %v2344
        %vm2474 = vcmp.eq.s32.totalorder %v827, %v2344
        %vm2475 = vcmp.eq.s32.totalorder %v826, %v2347
        %vm2476 = vcmp.eq.s32.totalorder %v827, %v2347
        %vm2477 = vcmp.eq.s32.totalorder %v826, %v2350
        %vm2478 = vcmp.eq.s32.totalorder %v827, %v2350
        %v2479 = vsel %vm2351, 1, 0
        %v2480 = vsel %vm2352, 1, 0
        %v2481 = vsel %vm2353, 1, 0
        %v2482 = vsel %vm2354, 1, 0
        %v2483 = vsel %vm2355, 1, 0
        %v2484 = vsel %vm2356, 1, 0
        %v2485 = vsel %vm2357, 1, 0
        %v2486 = vsel %vm2358, 1, 0
        %v2487 = vsel %vm2359, 1, 0
        %v2488 = vsel %vm2360, 1, 0
        %v2489 = vsel %vm2361, 1, 0
        %v2490 = vsel %vm2362, 1, 0
        %v2491 = vsel %vm2363, 1, 0
        %v2492 = vsel %vm2364, 1, 0
        %v2493 = vsel %vm2365, 1, 0
        %v2494 = vsel %vm2366, 1, 0
        %v2495 = vsel %vm2367, 1, 0
        %v2496 = vsel %vm2368, 1, 0
        %v2497 = vsel %vm2369, 1, 0
        %v2498 = vsel %vm2370, 1, 0
        %v2499 = vsel %vm2371, 1, 0
        %v2500 = vsel %vm2372, 1, 0
        %v2501 = vsel %vm2373, 1, 0
        %v2502 = vsel %vm2374, 1, 0
        %v2503 = vsel %vm2375, 1, 0
        %v2504 = vsel %vm2376, 1, 0
        %v2505 = vsel %vm2377, 1, 0
        %v2506 = vsel %vm2378, 1, 0
        %v2507 = vsel %vm2379, 1, 0
        %v2508 = vsel %vm2380, 1, 0
        %v2509 = vsel %vm2381, 1, 0
        %v2510 = vsel %vm2382, 1, 0
        %v2511 = vsel %vm2383, 1, 0
        %v2512 = vsel %vm2384, 1, 0
        %v2513 = vsel %vm2385, 1, 0
        %v2514 = vsel %vm2386, 1, 0
        %v2515 = vsel %vm2387, 1, 0
        %v2516 = vsel %vm2388, 1, 0
        %v2517 = vsel %vm2389, 1, 0
        %v2518 = vsel %vm2390, 1, 0
        %v2519 = vsel %vm2391, 1, 0
        %v2520 = vsel %vm2392, 1, 0
        %v2521 = vsel %vm2393, 1, 0
        %v2522 = vsel %vm2394, 1, 0
        %v2523 = vsel %vm2395, 1, 0
        %v2524 = vsel %vm2396, 1, 0
        %v2525 = vsel %vm2397, 1, 0
        %v2526 = vsel %vm2398, 1, 0
        %v2527 = vsel %vm2399, 1, 0
        %v2528 = vsel %vm2400, 1, 0
        %v2529 = vsel %vm2401, 1, 0
        %v2530 = vsel %vm2402, 1, 0
        %v2531 = vsel %vm2403, 1, 0
        %v2532 = vsel %vm2404, 1, 0
        %v2533 = vsel %vm2405, 1, 0
        %v2534 = vsel %vm2406, 1, 0
        %v2535 = vsel %vm2407, 1, 0
        %v2536 = vsel %vm2408, 1, 0
        %v2537 = vsel %vm2409, 1, 0
        %v2538 = vsel %vm2410, 1, 0
        %v2539 = vsel %vm2411, 1, 0
        %v2540 = vsel %vm2412, 1, 0
        %v2541 = vsel %vm2413, 1, 0
        %v2542 = vsel %vm2414, 1, 0
        %v2543 = vsel %vm2415, 1, 0
        %v2544 = vsel %vm2416, 1, 0
        %v2545 = vsel %vm2417, 1, 0
        %v2546 = vsel %vm2418, 1, 0
        %v2547 = vsel %vm2419, 1, 0
        %v2548 = vsel %vm2420, 1, 0
        %v2549 = vsel %vm2421, 1, 0
        %v2550 = vsel %vm2422, 1, 0
        %v2551 = vsel %vm2423, 1, 0
        %v2552 = vsel %vm2424, 1, 0
        %v2553 = vsel %vm2425, 1, 0
        %v2554 = vsel %vm2426, 1, 0
        %v2555 = vsel %vm2427, 1, 0
        %v2556 = vsel %vm2428, 1, 0
        %v2557 = vsel %vm2429, 1, 0
        %v2558 = vsel %vm2430, 1, 0
        %v2559 = vsel %vm2431, 1, 0
        %v2560 = vsel %vm2432, 1, 0
        %v2561 = vsel %vm2433, 1, 0
        %v2562 = vsel %vm2434, 1, 0
        %v2563 = vsel %vm2435, 1, 0
        %v2564 = vsel %vm2436, 1, 0
        %v2565 = vsel %vm2437, 1, 0
        %v2566 = vsel %vm2438, 1, 0
        %v2567 = vsel %vm2439, 1, 0
        %v2568 = vsel %vm2440, 1, 0
        %v2569 = vsel %vm2441, 1, 0
        %v2570 = vsel %vm2442, 1, 0
        %v2571 = vsel %vm2443, 1, 0
        %v2572 = vsel %vm2444, 1, 0
        %v2573 = vsel %vm2445, 1, 0
        %v2574 = vsel %vm2446, 1, 0
        %v2575 = vsel %vm2447, 1, 0
        %v2576 = vsel %vm2448, 1, 0
        %v2577 = vsel %vm2449, 1, 0
        %v2578 = vsel %vm2450, 1, 0
        %v2579 = vsel %vm2451, 1, 0
        %v2580 = vsel %vm2452, 1, 0
        %v2581 = vsel %vm2453, 1, 0
        %v2582 = vsel %vm2454, 1, 0
        %v2583 = vsel %vm2455, 1, 0
        %v2584 = vsel %vm2456, 1, 0
        %v2585 = vsel %vm2457, 1, 0
        %v2586 = vsel %vm2458, 1, 0
        %v2587 = vsel %vm2459, 1, 0
        %v2588 = vsel %vm2460, 1, 0
        %v2589 = vsel %vm2461, 1, 0
        %v2590 = vsel %vm2462, 1, 0
        %v2591 = vsel %vm2463, 1, 0
        %v2592 = vsel %vm2464, 1, 0
        %v2593 = vsel %vm2465, 1, 0
        %v2594 = vsel %vm2466, 1, 0
        %v2595 = vsel %vm2467, 1, 0
        %v2596 = vsel %vm2468, 1, 0
        %v2597 = vsel %vm2469, 1, 0
        %v2598 = vsel %vm2470, 1, 0
        %v2599 = vsel %vm2471, 1, 0
        %v2600 = vsel %vm2472, 1, 0
        %v2601 = vsel %vm2473, 1, 0
        %v2602 = vsel %vm2474, 1, 0
        %v2603 = vsel %vm2475, 1, 0
        %v2604 = vsel %vm2476, 1, 0
        %v2605 = vsel %vm2477, 1, 0
        %v2606 = vsel %vm2478, 1, 0
        %v2607 = vcvt.s32.f32 %v2479
        %v2608 = vcvt.s32.f32 %v2480
        %v2609 = vcvt.s32.f32 %v2481
        %v2610 = vcvt.s32.f32 %v2482
        %v2611 = vcvt.s32.f32 %v2483
        %v2612 = vcvt.s32.f32 %v2484
        %v2613 = vcvt.s32.f32 %v2485
        %v2614 = vcvt.s32.f32 %v2486
        %v2615 = vcvt.s32.f32 %v2487
        %v2616 = vcvt.s32.f32 %v2488
        %v2617 = vcvt.s32.f32 %v2489
        %v2618 = vcvt.s32.f32 %v2490
        %v2619 = vcvt.s32.f32 %v2491
        %v2620 = vcvt.s32.f32 %v2492
        %v2621 = vcvt.s32.f32 %v2493
        %v2622 = vcvt.s32.f32 %v2494
        %v2623 = vcvt.s32.f32 %v2495
        %v2624 = vcvt.s32.f32 %v2496
        %v2625 = vcvt.s32.f32 %v2497
        %v2626 = vcvt.s32.f32 %v2498
        %v2627 = vcvt.s32.f32 %v2499
        %v2628 = vcvt.s32.f32 %v2500
        %v2629 = vcvt.s32.f32 %v2501
        %v2630 = vcvt.s32.f32 %v2502
        %v2631 = vcvt.s32.f32 %v2503
        %v2632 = vcvt.s32.f32 %v2504
        %v2633 = vcvt.s32.f32 %v2505
        %v2634 = vcvt.s32.f32 %v2506
        %v2635 = vcvt.s32.f32 %v2507
        %v2636 = vcvt.s32.f32 %v2508
        %v2637 = vcvt.s32.f32 %v2509
        %v2638 = vcvt.s32.f32 %v2510
        %v2639 = vcvt.s32.f32 %v2511
        %v2640 = vcvt.s32.f32 %v2512
        %v2641 = vcvt.s32.f32 %v2513
        %v2642 = vcvt.s32.f32 %v2514
        %v2643 = vcvt.s32.f32 %v2515
        %v2644 = vcvt.s32.f32 %v2516
        %v2645 = vcvt.s32.f32 %v2517
        %v2646 = vcvt.s32.f32 %v2518
        %v2647 = vcvt.s32.f32 %v2519
        %v2648 = vcvt.s32.f32 %v2520
        %v2649 = vcvt.s32.f32 %v2521
        %v2650 = vcvt.s32.f32 %v2522
        %v2651 = vcvt.s32.f32 %v2523
        %v2652 = vcvt.s32.f32 %v2524
        %v2653 = vcvt.s32.f32 %v2525
        %v2654 = vcvt.s32.f32 %v2526
        %v2655 = vcvt.s32.f32 %v2527
        %v2656 = vcvt.s32.f32 %v2528
        %v2657 = vcvt.s32.f32 %v2529
        %v2658 = vcvt.s32.f32 %v2530
        %v2659 = vcvt.s32.f32 %v2531
        %v2660 = vcvt.s32.f32 %v2532
        %v2661 = vcvt.s32.f32 %v2533
        %v2662 = vcvt.s32.f32 %v2534
        %v2663 = vcvt.s32.f32 %v2535
        %v2664 = vcvt.s32.f32 %v2536
        %v2665 = vcvt.s32.f32 %v2537
        %v2666 = vcvt.s32.f32 %v2538
        %v2667 = vcvt.s32.f32 %v2539
        %v2668 = vcvt.s32.f32 %v2540
        %v2669 = vcvt.s32.f32 %v2541
        %v2670 = vcvt.s32.f32 %v2542
        %v2671 = vcvt.s32.f32 %v2543
        %v2672 = vcvt.s32.f32 %v2544
        %v2673 = vcvt.s32.f32 %v2545
        %v2674 = vcvt.s32.f32 %v2546
        %v2675 = vcvt.s32.f32 %v2547
        %v2676 = vcvt.s32.f32 %v2548
        %v2677 = vcvt.s32.f32 %v2549
        %v2678 = vcvt.s32.f32 %v2550
        %v2679 = vcvt.s32.f32 %v2551
        %v2680 = vcvt.s32.f32 %v2552
        %v2681 = vcvt.s32.f32 %v2553
        %v2682 = vcvt.s32.f32 %v2554
        %v2683 = vcvt.s32.f32 %v2555
        %v2684 = vcvt.s32.f32 %v2556
        %v2685 = vcvt.s32.f32 %v2557
        %v2686 = vcvt.s32.f32 %v2558
        %v2687 = vcvt.s32.f32 %v2559
        %v2688 = vcvt.s32.f32 %v2560
        %v2689 = vcvt.s32.f32 %v2561
        %v2690 = vcvt.s32.f32 %v2562
        %v2691 = vcvt.s32.f32 %v2563
        %v2692 = vcvt.s32.f32 %v2564
        %v2693 = vcvt.s32.f32 %v2565
        %v2694 = vcvt.s32.f32 %v2566
        %v2695 = vcvt.s32.f32 %v2567
        %v2696 = vcvt.s32.f32 %v2568
        %v2697 = vcvt.s32.f32 %v2569
        %v2698 = vcvt.s32.f32 %v2570
        %v2699 = vcvt.s32.f32 %v2571
        %v2700 = vcvt.s32.f32 %v2572
        %v2701 = vcvt.s32.f32 %v2573
        %v2702 = vcvt.s32.f32 %v2574
        %v2703 = vcvt.s32.f32 %v2575
        %v2704 = vcvt.s32.f32 %v2576
        %v2705 = vcvt.s32.f32 %v2577
        %v2706 = vcvt.s32.f32 %v2578
        %v2707 = vcvt.s32.f32 %v2579
        %v2708 = vcvt.s32.f32 %v2580
        %v2709 = vcvt.s32.f32 %v2581
        %v2710 = vcvt.s32.f32 %v2582
        %v2711 = vcvt.s32.f32 %v2583
        %v2712 = vcvt.s32.f32 %v2584
        %v2713 = vcvt.s32.f32 %v2585
        %v2714 = vcvt.s32.f32 %v2586
        %v2715 = vcvt.s32.f32 %v2587
        %v2716 = vcvt.s32.f32 %v2588
        %v2717 = vcvt.s32.f32 %v2589
        %v2718 = vcvt.s32.f32 %v2590
        %v2719 = vcvt.s32.f32 %v2591
        %v2720 = vcvt.s32.f32 %v2592
        %v2721 = vcvt.s32.f32 %v2593
        %v2722 = vcvt.s32.f32 %v2594
        %v2723 = vcvt.s32.f32 %v2595
        %v2724 = vcvt.s32.f32 %v2596
        %v2725 = vcvt.s32.f32 %v2597
        %v2726 = vcvt.s32.f32 %v2598
        %v2727 = vcvt.s32.f32 %v2599
        %v2728 = vcvt.s32.f32 %v2600
        %v2729 = vcvt.s32.f32 %v2601
        %v2730 = vcvt.s32.f32 %v2602
        %v2731 = vcvt.s32.f32 %v2603
        %v2732 = vcvt.s32.f32 %v2604
        %v2733 = vcvt.s32.f32 %v2605
        %v2734 = vcvt.s32.f32 %v2606
        %2735 = vmatpush.xpose.msra.mxu0 %v2637
        %2736 = vmatpush.xpose.msra.mxu0 %v2635
        %2737 = vmatpush.xpose.msra.mxu0 %v2633
        %2738 = vmatpush.xpose.msra.mxu0 %v2631
        %2739 = vmatpush.xpose.msra.mxu0 %v2629
        %2740 = vmatpush.xpose.msra.mxu0 %v2627
        %2741 = vmatpush.xpose.msra.mxu0 %v2625
        %2742 = vmatpush.xpose.msra.mxu0 %v2623
        %2743 = vmatpush.xpose.msra.mxu0 %v2621
        %2744 = vmatpush.xpose.msra.mxu0 %v2619
        %2745 = vmatpush.xpose.msra.mxu0 %v2617
        %2746 = vmatpush.xpose.msra.mxu0 %v2615
        %2747 = vmatpush.xpose.msra.mxu0 %v2613
        %2748 = vmatpush.xpose.msra.mxu0 %v2611
        %2749 = vmatpush.xpose.msra.mxu0 %v2609
        %2750 = vmatpush.xpose.msra.mxu0 %v2607
        %2751 = vmatmul.f32.gmra.mxu0 %v432
        %v2752 = vpop.f32.mrf.mxu0
        %v2753 = vadd.f32 0.0, %v2752
        %2754 = vmatmul.f32.gmra.mxu0 %v435
        %v2755 = vpop.f32.mrf.mxu0
        %v2756 = vadd.f32 0.0, %v2755
        %2757 = vmatmul.f32.gmra.mxu0 %v438
        %v2758 = vpop.f32.mrf.mxu0
        %v2759 = vadd.f32 0.0, %v2758
        %2760 = vmatmul.f32.gmra.mxu0 %v441
        %v2761 = vpop.f32.mrf.mxu0
        %v2762 = vadd.f32 0.0, %v2761
        %2763 = vmatmul.f32.gmra.mxu0 %v444
        %v2764 = vpop.f32.mrf.mxu0
        %v2765 = vadd.f32 0.0, %v2764
        %2766 = vmatmul.f32.gmra.mxu0 %v447
        %v2767 = vpop.f32.mrf.mxu0
        %v2768 = vadd.f32 0.0, %v2767
        %2769 = vmatmul.f32.gmra.mxu0 %v450
        %v2770 = vpop.f32.mrf.mxu0
        %v2771 = vadd.f32 0.0, %v2770
        %2772 = vmatmul.f32.gmra.mxu0 %v453
        %v2773 = vpop.f32.mrf.mxu0
        %v2774 = vadd.f32 0.0, %v2773
        %2775 = vdwg.mxu0
        %2776 = vmatpush.xpose.msra.mxu0 %v2638
        %2777 = vmatpush.xpose.msra.mxu0 %v2636
        %2778 = vmatpush.xpose.msra.mxu0 %v2634
        %2779 = vmatpush.xpose.msra.mxu0 %v2632
        %2780 = vmatpush.xpose.msra.mxu0 %v2630
        %2781 = vmatpush.xpose.msra.mxu0 %v2628
        %2782 = vmatpush.xpose.msra.mxu0 %v2626
        %2783 = vmatpush.xpose.msra.mxu0 %v2624
        %2784 = vmatpush.xpose.msra.mxu0 %v2622
        %2785 = vmatpush.xpose.msra.mxu0 %v2620
        %2786 = vmatpush.xpose.msra.mxu0 %v2618
        %2787 = vmatpush.xpose.msra.mxu0 %v2616
        %2788 = vmatpush.xpose.msra.mxu0 %v2614
        %2789 = vmatpush.xpose.msra.mxu0 %v2612
        %2790 = vmatpush.xpose.msra.mxu0 %v2610
        %2791 = vmatpush.xpose.msra.mxu0 %v2608
        %2792 = vmatmul.f32.gmra.mxu0 %v473
        %v2793 = vpop.f32.mrf.mxu0
        %v2794 = vadd.f32 %v2753, %v2793
        %2795 = vmatmul.f32.gmra.mxu0 %v476
        %v2796 = vpop.f32.mrf.mxu0
        %v2797 = vadd.f32 %v2756, %v2796
        %2798 = vmatmul.f32.gmra.mxu0 %v479
        %v2799 = vpop.f32.mrf.mxu0
        %v2800 = vadd.f32 %v2759, %v2799
        %2801 = vmatmul.f32.gmra.mxu0 %v482
        %v2802 = vpop.f32.mrf.mxu0
        %v2803 = vadd.f32 %v2762, %v2802
        %2804 = vmatmul.f32.gmra.mxu0 %v485
        %v2805 = vpop.f32.mrf.mxu0
        %v2806 = vadd.f32 %v2765, %v2805
        %2807 = vmatmul.f32.gmra.mxu0 %v488
        %v2808 = vpop.f32.mrf.mxu0
        %v2809 = vadd.f32 %v2768, %v2808
        %2810 = vmatmul.f32.gmra.mxu0 %v491
        %v2811 = vpop.f32.mrf.mxu0
        %v2812 = vadd.f32 %v2771, %v2811
        %2813 = vmatmul.f32.gmra.mxu0 %v494
        %v2814 = vpop.f32.mrf.mxu0
        %v2815 = vadd.f32 %v2774, %v2814
        %2816 = vdwg.mxu0
        %2817 = vmatpush.xpose.msra.mxu0 %v2669
        %2818 = vmatpush.xpose.msra.mxu0 %v2667
        %2819 = vmatpush.xpose.msra.mxu0 %v2665
        %2820 = vmatpush.xpose.msra.mxu0 %v2663
        %2821 = vmatpush.xpose.msra.mxu0 %v2661
        %2822 = vmatpush.xpose.msra.mxu0 %v2659
        %2823 = vmatpush.xpose.msra.mxu0 %v2657
        %2824 = vmatpush.xpose.msra.mxu0 %v2655
        %2825 = vmatpush.xpose.msra.mxu0 %v2653
        %2826 = vmatpush.xpose.msra.mxu0 %v2651
        %2827 = vmatpush.xpose.msra.mxu0 %v2649
        %2828 = vmatpush.xpose.msra.mxu0 %v2647
        %2829 = vmatpush.xpose.msra.mxu0 %v2645
        %2830 = vmatpush.xpose.msra.mxu0 %v2643
        %2831 = vmatpush.xpose.msra.mxu0 %v2641
        %2832 = vmatpush.xpose.msra.mxu0 %v2639
        %2833 = vmatmul.f32.gmra.mxu0 %v432
        %v2834 = vpop.f32.mrf.mxu0
        %v2835 = vadd.f32 0.0, %v2834
        %2836 = vmatmul.f32.gmra.mxu0 %v435
        %v2837 = vpop.f32.mrf.mxu0
        %v2838 = vadd.f32 0.0, %v2837
        %2839 = vmatmul.f32.gmra.mxu0 %v438
        %v2840 = vpop.f32.mrf.mxu0
        %v2841 = vadd.f32 0.0, %v2840
        %2842 = vmatmul.f32.gmra.mxu0 %v441
        %v2843 = vpop.f32.mrf.mxu0
        %v2844 = vadd.f32 0.0, %v2843
        %2845 = vmatmul.f32.gmra.mxu0 %v444
        %v2846 = vpop.f32.mrf.mxu0
        %v2847 = vadd.f32 0.0, %v2846
        %2848 = vmatmul.f32.gmra.mxu0 %v447
        %v2849 = vpop.f32.mrf.mxu0
        %v2850 = vadd.f32 0.0, %v2849
        %2851 = vmatmul.f32.gmra.mxu0 %v450
        %v2852 = vpop.f32.mrf.mxu0
        %v2853 = vadd.f32 0.0, %v2852
        %2854 = vmatmul.f32.gmra.mxu0 %v453
        %v2855 = vpop.f32.mrf.mxu0
        %v2856 = vadd.f32 0.0, %v2855
        %2857 = vdwg.mxu0
        %2858 = vmatpush.xpose.msra.mxu0 %v2670
        %2859 = vmatpush.xpose.msra.mxu0 %v2668
        %2860 = vmatpush.xpose.msra.mxu0 %v2666
        %2861 = vmatpush.xpose.msra.mxu0 %v2664
        %2862 = vmatpush.xpose.msra.mxu0 %v2662
        %2863 = vmatpush.xpose.msra.mxu0 %v2660
        %2864 = vmatpush.xpose.msra.mxu0 %v2658
        %2865 = vmatpush.xpose.msra.mxu0 %v2656
        %2866 = vmatpush.xpose.msra.mxu0 %v2654
        %2867 = vmatpush.xpose.msra.mxu0 %v2652
        %2868 = vmatpush.xpose.msra.mxu0 %v2650
        %2869 = vmatpush.xpose.msra.mxu0 %v2648
        %2870 = vmatpush.xpose.msra.mxu0 %v2646
        %2871 = vmatpush.xpose.msra.mxu0 %v2644
        %2872 = vmatpush.xpose.msra.mxu0 %v2642
        %2873 = vmatpush.xpose.msra.mxu0 %v2640
        %2874 = vmatmul.f32.gmra.mxu0 %v473
        %v2875 = vpop.f32.mrf.mxu0
        %v2876 = vadd.f32 %v2835, %v2875
        %2877 = vmatmul.f32.gmra.mxu0 %v476
        %v2878 = vpop.f32.mrf.mxu0
        %v2879 = vadd.f32 %v2838, %v2878
        %2880 = vmatmul.f32.gmra.mxu0 %v479
        %v2881 = vpop.f32.mrf.mxu0
        %v2882 = vadd.f32 %v2841, %v2881
        %2883 = vmatmul.f32.gmra.mxu0 %v482
        %v2884 = vpop.f32.mrf.mxu0
        %v2885 = vadd.f32 %v2844, %v2884
        %2886 = vmatmul.f32.gmra.mxu0 %v485
        %v2887 = vpop.f32.mrf.mxu0
        %v2888 = vadd.f32 %v2847, %v2887
        %2889 = vmatmul.f32.gmra.mxu0 %v488
        %v2890 = vpop.f32.mrf.mxu0
        %v2891 = vadd.f32 %v2850, %v2890
        %2892 = vmatmul.f32.gmra.mxu0 %v491
        %v2893 = vpop.f32.mrf.mxu0
        %v2894 = vadd.f32 %v2853, %v2893
        %2895 = vmatmul.f32.gmra.mxu0 %v494
        %v2896 = vpop.f32.mrf.mxu0
        %v2897 = vadd.f32 %v2856, %v2896
        %2898 = vdwg.mxu0
        %2899 = vmatpush.xpose.msra.mxu0 %v2701
        %2900 = vmatpush.xpose.msra.mxu0 %v2699
        %2901 = vmatpush.xpose.msra.mxu0 %v2697
        %2902 = vmatpush.xpose.msra.mxu0 %v2695
        %2903 = vmatpush.xpose.msra.mxu0 %v2693
        %2904 = vmatpush.xpose.msra.mxu0 %v2691
        %2905 = vmatpush.xpose.msra.mxu0 %v2689
        %2906 = vmatpush.xpose.msra.mxu0 %v2687
        %2907 = vmatpush.xpose.msra.mxu0 %v2685
        %2908 = vmatpush.xpose.msra.mxu0 %v2683
        %2909 = vmatpush.xpose.msra.mxu0 %v2681
        %2910 = vmatpush.xpose.msra.mxu0 %v2679
        %2911 = vmatpush.xpose.msra.mxu0 %v2677
        %2912 = vmatpush.xpose.msra.mxu0 %v2675
        %2913 = vmatpush.xpose.msra.mxu0 %v2673
        %2914 = vmatpush.xpose.msra.mxu0 %v2671
        %2915 = vmatmul.f32.gmra.mxu0 %v432
        %v2916 = vpop.f32.mrf.mxu0
        %v2917 = vadd.f32 0.0, %v2916
        %2918 = vmatmul.f32.gmra.mxu0 %v435
        %v2919 = vpop.f32.mrf.mxu0
        %v2920 = vadd.f32 0.0, %v2919
        %2921 = vmatmul.f32.gmra.mxu0 %v438
        %v2922 = vpop.f32.mrf.mxu0
        %v2923 = vadd.f32 0.0, %v2922
        %2924 = vmatmul.f32.gmra.mxu0 %v441
        %v2925 = vpop.f32.mrf.mxu0
        %v2926 = vadd.f32 0.0, %v2925
        %2927 = vmatmul.f32.gmra.mxu0 %v444
        %v2928 = vpop.f32.mrf.mxu0
        %v2929 = vadd.f32 0.0, %v2928
        %2930 = vmatmul.f32.gmra.mxu0 %v447
        %v2931 = vpop.f32.mrf.mxu0
        %v2932 = vadd.f32 0.0, %v2931
        %2933 = vmatmul.f32.gmra.mxu0 %v450
        %v2934 = vpop.f32.mrf.mxu0
        %v2935 = vadd.f32 0.0, %v2934
        %2936 = vmatmul.f32.gmra.mxu0 %v453
        %v2937 = vpop.f32.mrf.mxu0
        %v2938 = vadd.f32 0.0, %v2937
        %2939 = vdwg.mxu0
        %2940 = vmatpush.xpose.msra.mxu0 %v2702
        %2941 = vmatpush.xpose.msra.mxu0 %v2700
        %2942 = vmatpush.xpose.msra.mxu0 %v2698
        %2943 = vmatpush.xpose.msra.mxu0 %v2696
        %2944 = vmatpush.xpose.msra.mxu0 %v2694
        %2945 = vmatpush.xpose.msra.mxu0 %v2692
        %2946 = vmatpush.xpose.msra.mxu0 %v2690
        %2947 = vmatpush.xpose.msra.mxu0 %v2688
        %2948 = vmatpush.xpose.msra.mxu0 %v2686
        %2949 = vmatpush.xpose.msra.mxu0 %v2684
        %2950 = vmatpush.xpose.msra.mxu0 %v2682
        %2951 = vmatpush.xpose.msra.mxu0 %v2680
        %2952 = vmatpush.xpose.msra.mxu0 %v2678
        %2953 = vmatpush.xpose.msra.mxu0 %v2676
        %2954 = vmatpush.xpose.msra.mxu0 %v2674
        %2955 = vmatpush.xpose.msra.mxu0 %v2672
        %2956 = vmatmul.f32.gmra.mxu0 %v473
        %v2957 = vpop.f32.mrf.mxu0
        %v2958 = vadd.f32 %v2917, %v2957
        %2959 = vmatmul.f32.gmra.mxu0 %v476
        %v2960 = vpop.f32.mrf.mxu0
        %v2961 = vadd.f32 %v2920, %v2960
        %2962 = vmatmul.f32.gmra.mxu0 %v479
        %v2963 = vpop.f32.mrf.mxu0
        %v2964 = vadd.f32 %v2923, %v2963
        %2965 = vmatmul.f32.gmra.mxu0 %v482
        %v2966 = vpop.f32.mrf.mxu0
        %v2967 = vadd.f32 %v2926, %v2966
        %2968 = vmatmul.f32.gmra.mxu0 %v485
        %v2969 = vpop.f32.mrf.mxu0
        %v2970 = vadd.f32 %v2929, %v2969
        %2971 = vmatmul.f32.gmra.mxu0 %v488
        %v2972 = vpop.f32.mrf.mxu0
        %v2973 = vadd.f32 %v2932, %v2972
        %2974 = vmatmul.f32.gmra.mxu0 %v491
        %v2975 = vpop.f32.mrf.mxu0
        %v2976 = vadd.f32 %v2935, %v2975
        %2977 = vmatmul.f32.gmra.mxu0 %v494
        %v2978 = vpop.f32.mrf.mxu0
        %v2979 = vadd.f32 %v2938, %v2978
        %2980 = vdwg.mxu0
        %2981 = vmatpush.xpose.msra.mxu0 %v2733
        %2982 = vmatpush.xpose.msra.mxu0 %v2731
        %2983 = vmatpush.xpose.msra.mxu0 %v2729
        %2984 = vmatpush.xpose.msra.mxu0 %v2727
        %2985 = vmatpush.xpose.msra.mxu0 %v2725
        %2986 = vmatpush.xpose.msra.mxu0 %v2723
        %2987 = vmatpush.xpose.msra.mxu0 %v2721
        %2988 = vmatpush.xpose.msra.mxu0 %v2719
        %2989 = vmatpush.xpose.msra.mxu0 %v2717
        %2990 = vmatpush.xpose.msra.mxu0 %v2715
        %2991 = vmatpush.xpose.msra.mxu0 %v2713
        %2992 = vmatpush.xpose.msra.mxu0 %v2711
        %2993 = vmatpush.xpose.msra.mxu0 %v2709
        %2994 = vmatpush.xpose.msra.mxu0 %v2707
        %2995 = vmatpush.xpose.msra.mxu0 %v2705
        %2996 = vmatpush.xpose.msra.mxu0 %v2703
        %2997 = vmatmul.f32.gmra.mxu0 %v432
        %v2998 = vpop.f32.mrf.mxu0
        %v2999 = vadd.f32 0.0, %v2998
        %3000 = vmatmul.f32.gmra.mxu0 %v435
        %v3001 = vpop.f32.mrf.mxu0
        %v3002 = vadd.f32 0.0, %v3001
        %3003 = vmatmul.f32.gmra.mxu0 %v438
        %v3004 = vpop.f32.mrf.mxu0
        %v3005 = vadd.f32 0.0, %v3004
        %3006 = vmatmul.f32.gmra.mxu0 %v441
        %v3007 = vpop.f32.mrf.mxu0
        %v3008 = vadd.f32 0.0, %v3007
        %3009 = vmatmul.f32.gmra.mxu0 %v444
        %v3010 = vpop.f32.mrf.mxu0
        %v3011 = vadd.f32 0.0, %v3010
        %3012 = vmatmul.f32.gmra.mxu0 %v447
        %v3013 = vpop.f32.mrf.mxu0
        %v3014 = vadd.f32 0.0, %v3013
        %3015 = vmatmul.f32.gmra.mxu0 %v450
        %v3016 = vpop.f32.mrf.mxu0
        %v3017 = vadd.f32 0.0, %v3016
        %3018 = vmatmul.f32.gmra.mxu0 %v453
        %v3019 = vpop.f32.mrf.mxu0
        %v3020 = vadd.f32 0.0, %v3019
        %3021 = vdwg.mxu0
        %3022 = vmatpush.xpose.msra.mxu0 %v2734
        %3023 = vmatpush.xpose.msra.mxu0 %v2732
        %3024 = vmatpush.xpose.msra.mxu0 %v2730
        %3025 = vmatpush.xpose.msra.mxu0 %v2728
        %3026 = vmatpush.xpose.msra.mxu0 %v2726
        %3027 = vmatpush.xpose.msra.mxu0 %v2724
        %3028 = vmatpush.xpose.msra.mxu0 %v2722
        %3029 = vmatpush.xpose.msra.mxu0 %v2720
        %3030 = vmatpush.xpose.msra.mxu0 %v2718
        %3031 = vmatpush.xpose.msra.mxu0 %v2716
        %3032 = vmatpush.xpose.msra.mxu0 %v2714
        %3033 = vmatpush.xpose.msra.mxu0 %v2712
        %3034 = vmatpush.xpose.msra.mxu0 %v2710
        %3035 = vmatpush.xpose.msra.mxu0 %v2708
        %3036 = vmatpush.xpose.msra.mxu0 %v2706
        %3037 = vmatpush.xpose.msra.mxu0 %v2704
        %3038 = vmatmul.f32.gmra.mxu0 %v473
        %v3039 = vpop.f32.mrf.mxu0
        %v3040 = vadd.f32 %v2999, %v3039
        %3041 = vmatmul.f32.gmra.mxu0 %v476
        %v3042 = vpop.f32.mrf.mxu0
        %v3043 = vadd.f32 %v3002, %v3042
        %3044 = vmatmul.f32.gmra.mxu0 %v479
        %v3045 = vpop.f32.mrf.mxu0
        %v3046 = vadd.f32 %v3005, %v3045
        %3047 = vmatmul.f32.gmra.mxu0 %v482
        %v3048 = vpop.f32.mrf.mxu0
        %v3049 = vadd.f32 %v3008, %v3048
        %3050 = vmatmul.f32.gmra.mxu0 %v485
        %v3051 = vpop.f32.mrf.mxu0
        %v3052 = vadd.f32 %v3011, %v3051
        %3053 = vmatmul.f32.gmra.mxu0 %v488
        %v3054 = vpop.f32.mrf.mxu0
        %v3055 = vadd.f32 %v3014, %v3054
        %3056 = vmatmul.f32.gmra.mxu0 %v491
        %v3057 = vpop.f32.mrf.mxu0
        %v3058 = vadd.f32 %v3017, %v3057
        %3059 = vmatmul.f32.gmra.mxu0 %v494
        %v3060 = vpop.f32.mrf.mxu0
        %v3061 = vadd.f32 %v3020, %v3060
        %3062 = vdwg.mxu0
        %v3063 = vmax.f32 %v2794, %v2876
        %v3064 = vmax.f32 %v2797, %v2879
        %v3065 = vmax.f32 %v2800, %v2882
        %v3066 = vmax.f32 %v2803, %v2885
        %v3067 = vmax.f32 %v2806, %v2888
        %v3068 = vmax.f32 %v2809, %v2891
        %v3069 = vmax.f32 %v2812, %v2894
        %v3070 = vmax.f32 %v2815, %v2897
        %v3071 = vmax.f32 %v2958, %v3040
        %v3072 = vmax.f32 %v2961, %v3043
        %v3073 = vmax.f32 %v2964, %v3046
        %v3074 = vmax.f32 %v2967, %v3049
        %v3075 = vmax.f32 %v2970, %v3052
        %v3076 = vmax.f32 %v2973, %v3055
        %v3077 = vmax.f32 %v2976, %v3058
        %v3078 = vmax.f32 %v2979, %v3061
        %v3079 = vmax.f32 %v3063, %v3071
        %v3080 = vmax.f32 %v3064, %v3072
        %v3081 = vmax.f32 %v3065, %v3073
        %v3082 = vmax.f32 %v3066, %v3074
        %v3083 = vmax.f32 %v3067, %v3075
        %v3084 = vmax.f32 %v3068, %v3076
        %v3085 = vmax.f32 %v3069, %v3077
        %v3086 = vmax.f32 %v3070, %v3078
        %v3087 = vsub.f32 %v3079, %v587
        %v3088 = vsub.f32 %v3080, %v590
        %v3089 = vsub.f32 %v3081, %v593
        %v3090 = vsub.f32 %v3082, %v596
        %v3091 = vsub.f32 %v3083, %v599
        %v3092 = vsub.f32 %v3084, %v602
        %v3093 = vsub.f32 %v3085, %v605
        %v3094 = vsub.f32 %v3086, %v608
        %v3095 = vxor.u32 %v3087, 2147483648
        %v3096 = vxor.u32 %v3088, 2147483648
        %v3097 = vxor.u32 %v3089, 2147483648
        %v3098 = vxor.u32 %v3090, 2147483648
        %v3099 = vmul.f32 %v3095, 1.442695
        %v3100 = vpow.pop %v3099
        %v3101 = vmul.f32 %v3096, 1.442695
        %v3102 = vpow.pop %v3101
        %v3103 = vmul.f32 %v3097, 1.442695
        %v3104 = vpow.pop %v3103
        %v3105 = vmul.f32 %v3098, 1.442695
        %v3106 = vpow.pop %v3105
        %v3107 = vadd.f32 %v3100, 1.0
        %v3108 = vadd.f32 %v3102, 1.0
        %v3109 = vadd.f32 %v3104, 1.0
        %v3110 = vadd.f32 %v3106, 1.0
        %v3111 = vrcp.pop %v3107
        %v3112 = vmul.f32 %v3107, %v3111
        %v3113 = vsub.f32 1.0, %v3112
        %v3114 = vmul.f32 %v3111, %v3113
        %v3115 = vadd.f32 %v3111, %v3114
        %vm3116 = vweird.f32 %v3107
        %vm3117 = vweird.f32 %v3111
        %vm3118 = vmor %vm3116, %vm3117
        %v3119 = vsel %vm3118, %v3111, %v3115
        %v3120 = vand.u32 2147483647, %v3107
        %vm3121 = vcmp.eq.f32.partialorder %v3120, 8.507059e+37
        %v3122 = vand.u32 %v3107, 2147483648
        %v3123 = vor.u32 1.1754944e-38, %v3122
        %v3124 = vsel %vm3121, %v3123, %v3119
        %v3125 = vmul.f32 1.0, %v3124
        %v3126 = vrcp.pop %v3108
        %v3127 = vmul.f32 %v3108, %v3126
        %v3128 = vsub.f32 1.0, %v3127
        %v3129 = vmul.f32 %v3126, %v3128
        %v3130 = vadd.f32 %v3126, %v3129
        %vm3131 = vweird.f32 %v3108
        %vm3132 = vweird.f32 %v3126
        %vm3133 = vmor %vm3131, %vm3132
        %v3134 = vsel %vm3133, %v3126, %v3130
        %v3135 = vand.u32 2147483647, %v3108
        %vm3136 = vcmp.eq.f32.partialorder %v3135, 8.507059e+37
        %v3137 = vand.u32 %v3108, 2147483648
        %v3138 = vor.u32 1.1754944e-38, %v3137
        %v3139 = vsel %vm3136, %v3138, %v3134
        %v3140 = vmul.f32 1.0, %v3139
        %v3141 = vrcp.pop %v3109
        %v3142 = vmul.f32 %v3109, %v3141
        %v3143 = vsub.f32 1.0, %v3142
        %v3144 = vmul.f32 %v3141, %v3143
        %v3145 = vadd.f32 %v3141, %v3144
        %vm3146 = vweird.f32 %v3109
        %vm3147 = vweird.f32 %v3141
        %vm3148 = vmor %vm3146, %vm3147
        %v3149 = vsel %vm3148, %v3141, %v3145
        %v3150 = vand.u32 2147483647, %v3109
        %vm3151 = vcmp.eq.f32.partialorder %v3150, 8.507059e+37
        %v3152 = vand.u32 %v3109, 2147483648
        %v3153 = vor.u32 1.1754944e-38, %v3152
        %v3154 = vsel %vm3151, %v3153, %v3149
        %v3155 = vmul.f32 1.0, %v3154
        %v3156 = vrcp.pop %v3110
        %v3157 = vmul.f32 %v3110, %v3156
        %v3158 = vsub.f32 1.0, %v3157
        %v3159 = vmul.f32 %v3156, %v3158
        %v3160 = vadd.f32 %v3156, %v3159
        %vm3161 = vweird.f32 %v3110
        %vm3162 = vweird.f32 %v3156
        %vm3163 = vmor %vm3161, %vm3162
        %v3164 = vsel %vm3163, %v3156, %v3160
        %v3165 = vand.u32 2147483647, %v3110
        %vm3166 = vcmp.eq.f32.partialorder %v3165, 8.507059e+37
        %v3167 = vand.u32 %v3110, 2147483648
        %v3168 = vor.u32 1.1754944e-38, %v3167
        %v3169 = vsel %vm3166, %v3168, %v3164
        %v3170 = vmul.f32 1.0, %v3169
        %3171 = vst [vmem:[%s292] sm:$0xff] %v3125
        %3172 = vst [vmem:[%s292 + $0x8] sm:$0xff] %v3140
        %3173 = vst [vmem:[%s292 + $0x10] sm:$0xff] %v3155
        %3174 = vst [vmem:[%s292 + $0x18] sm:$0xff] %v3170
        %v3175 = vxor.u32 %v3091, 2147483648
        %v3176 = vxor.u32 %v3092, 2147483648
        %v3177 = vxor.u32 %v3093, 2147483648
        %v3178 = vxor.u32 %v3094, 2147483648
        %v3179 = vmul.f32 %v3175, 1.442695
        %v3180 = vpow.pop %v3179
        %v3181 = vmul.f32 %v3176, 1.442695
        %v3182 = vpow.pop %v3181
        %v3183 = vmul.f32 %v3177, 1.442695
        %v3184 = vpow.pop %v3183
        %v3185 = vmul.f32 %v3178, 1.442695
        %v3186 = vpow.pop %v3185
        %v3187 = vadd.f32 %v3180, 1.0
        %v3188 = vadd.f32 %v3182, 1.0
        %v3189 = vadd.f32 %v3184, 1.0
        %v3190 = vadd.f32 %v3186, 1.0
        %v3191 = vrcp.pop %v3187
        %v3192 = vmul.f32 %v3187, %v3191
        %v3193 = vsub.f32 1.0, %v3192
        %v3194 = vmul.f32 %v3191, %v3193
        %v3195 = vadd.f32 %v3191, %v3194
        %vm3196 = vweird.f32 %v3187
        %vm3197 = vweird.f32 %v3191
        %vm3198 = vmor %vm3196, %vm3197
        %v3199 = vsel %vm3198, %v3191, %v3195
        %v3200 = vand.u32 2147483647, %v3187
        %vm3201 = vcmp.eq.f32.partialorder %v3200, 8.507059e+37
        %v3202 = vand.u32 %v3187, 2147483648
        %v3203 = vor.u32 1.1754944e-38, %v3202
        %v3204 = vsel %vm3201, %v3203, %v3199
        %v3205 = vmul.f32 1.0, %v3204
        %v3206 = vrcp.pop %v3188
        %v3207 = vmul.f32 %v3188, %v3206
        %v3208 = vsub.f32 1.0, %v3207
        %v3209 = vmul.f32 %v3206, %v3208
        %v3210 = vadd.f32 %v3206, %v3209
        %vm3211 = vweird.f32 %v3188
        %vm3212 = vweird.f32 %v3206
        %vm3213 = vmor %vm3211, %vm3212
        %v3214 = vsel %vm3213, %v3206, %v3210
        %v3215 = vand.u32 2147483647, %v3188
        %vm3216 = vcmp.eq.f32.partialorder %v3215, 8.507059e+37
        %v3217 = vand.u32 %v3188, 2147483648
        %v3218 = vor.u32 1.1754944e-38, %v3217
        %v3219 = vsel %vm3216, %v3218, %v3214
        %v3220 = vmul.f32 1.0, %v3219
        %v3221 = vrcp.pop %v3189
        %v3222 = vmul.f32 %v3189, %v3221
        %v3223 = vsub.f32 1.0, %v3222
        %v3224 = vmul.f32 %v3221, %v3223
        %v3225 = vadd.f32 %v3221, %v3224
        %vm3226 = vweird.f32 %v3189
        %vm3227 = vweird.f32 %v3221
        %vm3228 = vmor %vm3226, %vm3227
        %v3229 = vsel %vm3228, %v3221, %v3225
        %v3230 = vand.u32 2147483647, %v3189
        %vm3231 = vcmp.eq.f32.partialorder %v3230, 8.507059e+37
        %v3232 = vand.u32 %v3189, 2147483648
        %v3233 = vor.u32 1.1754944e-38, %v3232
        %v3234 = vsel %vm3231, %v3233, %v3229
        %v3235 = vmul.f32 1.0, %v3234
        %v3236 = vrcp.pop %v3190
        %v3237 = vmul.f32 %v3190, %v3236
        %v3238 = vsub.f32 1.0, %v3237
        %v3239 = vmul.f32 %v3236, %v3238
        %v3240 = vadd.f32 %v3236, %v3239
        %vm3241 = vweird.f32 %v3190
        %vm3242 = vweird.f32 %v3236
        %vm3243 = vmor %vm3241, %vm3242
        %v3244 = vsel %vm3243, %v3236, %v3240
        %v3245 = vand.u32 2147483647, %v3190
        %vm3246 = vcmp.eq.f32.partialorder %v3245, 8.507059e+37
        %v3247 = vand.u32 %v3190, 2147483648
        %v3248 = vor.u32 1.1754944e-38, %v3247
        %v3249 = vsel %vm3246, %v3248, %v3244
        %v3250 = vmul.f32 1.0, %v3249
        %3251 = vst [vmem:[%s299] sm:$0xff] %v3205
        %3252 = vst [vmem:[%s299 + $0x8] sm:$0xff] %v3220
        %3253 = vst [vmem:[%s299 + $0x10] sm:$0xff] %v3235
        %3254 = vst [vmem:[%s299 + $0x18] sm:$0xff] %v3250
        %vm3255 = vcmask 7168
        %v3256 = vsel %vm3255, %v1054, %v1486
        %v3257 = vsel %vm3255, %v1070, %v1502
        %v3258 = vsel %vm3255, %v1086, %v1518
        %v3259 = vsel %vm3255, %v1102, %v1534
        %v3260 = vsel %vm3255, %v1118, %v1550
        %v3261 = vsel %vm3255, %v1134, %v1566
        %v3262 = vsel %vm3255, %v1150, %v1582
        %v3263 = vsel %vm3255, %v1166, %v1598
        %v3264 = vsel %vm3255, %v1182, %v1614
        %v3265 = vsel %vm3255, %v1198, %v1630
        %v3266 = vsel %vm3255, %v1214, %v1646
        %v3267 = vsel %vm3255, %v1230, %v1662
        %v3268 = vsel %vm3255, %v1246, %v1678
        %v3269 = vsel %vm3255, %v1262, %v1694
        %v3270 = vsel %vm3255, %v1278, %v1710
        %v3271 = vsel %vm3255, %v1294, %v1726
        %vm3272 = vcmask 15360
        %v3273 = vsel %vm3272, %v3256, %v1918
        %v3274 = vsel %vm3272, %v3257, %v1934
        %v3275 = vsel %vm3272, %v3258, %v1950
        %v3276 = vsel %vm3272, %v3259, %v1966
        %v3277 = vsel %vm3272, %v3260, %v1982
        %v3278 = vsel %vm3272, %v3261, %v1998
        %v3279 = vsel %vm3272, %v3262, %v2014
        %v3280 = vsel %vm3272, %v3263, %v2030
        %v3281 = vsel %vm3272, %v3264, %v2046
        %v3282 = vsel %vm3272, %v3265, %v2062
        %v3283 = vsel %vm3272, %v3266, %v2078
        %v3284 = vsel %vm3272, %v3267, %v2094
        %v3285 = vsel %vm3272, %v3268, %v2110
        %v3286 = vsel %vm3272, %v3269, %v2126
        %v3287 = vsel %vm3272, %v3270, %v2142
        %v3288 = vsel %vm3272, %v3271, %v2158
        %3289 = vst.msk [vmem:[%s334] sm:$0xff] %vm496, %v3273
        %3290 = vst.msk [vmem:[%s334 + $0x8] sm:$0xff] %vm496, %v3274
        %3291 = vst.msk [vmem:[%s334 + $0x10] sm:$0xff] %vm496, %v3275
        %3292 = vst.msk [vmem:[%s334 + $0x18] sm:$0xff] %vm496, %v3276
        %3293 = vst.msk [vmem:[%s334 + $0x20] sm:$0xff] %vm496, %v3277
        %3294 = vst.msk [vmem:[%s334 + $0x28] sm:$0xff] %vm496, %v3278
        %3295 = vst.msk [vmem:[%s334 + $0x30] sm:$0xff] %vm496, %v3279
        %3296 = vst.msk [vmem:[%s334 + $0x38] sm:$0xff] %vm496, %v3280
        %3297 = vst.msk [vmem:[%s334 + $0x40] sm:$0xff] %vm496, %v3281
        %3298 = vst.msk [vmem:[%s334 + $0x48] sm:$0xff] %vm496, %v3282
        %3299 = vst.msk [vmem:[%s334 + $0x50] sm:$0xff] %vm496, %v3283
        %3300 = vst.msk [vmem:[%s334 + $0x58] sm:$0xff] %vm496, %v3284
        %3301 = vst.msk [vmem:[%s334 + $0x60] sm:$0xff] %vm496, %v3285
        %3302 = vst.msk [vmem:[%s334 + $0x68] sm:$0xff] %vm496, %v3286
        %3303 = vst.msk [vmem:[%s334 + $0x70] sm:$0xff] %vm496, %v3287
        %3304 = vst.msk [vmem:[%s334 + $0x78] sm:$0xff] %vm496, %v3288
        %s3305 = sand.u32 %s142, 1
        %s3306 = scalar_lea.sflag [#allocation3], %s3305
        %s3307 = sand.u32 %s142, 1
        %s3308 = smul.addr %s3307, 32
        %s3309 = scalar_lea.vmem [#allocation2], %s3308
        %s3310 = sand.u32 %s170, 1
        %s3311 = scalar_lea.sflag [#allocation5], %s3310
        %s3312 = sand.u32 %s170, 1
        %s3313 = smul.addr %s3312, 32
        %s3314 = scalar_lea.vmem [#allocation4], %s3313
        %s3315 = smul.u32 16, %s29
        %p3316 = scmp.lt.s32.totalorder %s28, 1
        %s3317 = scalar_select %p3316, %s28, 1
        %p3318 = scmp.lt.s32.totalorder %s3315, 31
        %s3319 = scalar_select %p3318, %s3315, 31
        %s3320 = smul.addr %s3317, 32
        %s3321 = sadd.s32 %s3319, %s3320
        %s3322 = smul.addr %s3321, 8
        %s3323 = scalar_lea.vmem %s6, %s3322
        // Predicated region
        $region37: #{tpu_custom_call.1} parent=35 // pred_check
          %p3324 = pneg %p152
        $region38: #{tpu_custom_call.1} parent=35 // pred_check_branch
          %3326 = sbr.rel (%p3324) target = $region40
        $region39: #{tpu_custom_call.1} parent=35 // pred_region
          %3328 = vsyncadd %s3306, 0
          %s3329 = smul.addr %s28, 8
          %s3330 = sadd.s32 %s29, %s3329
          %s3331 = smul.addr %s3330, 8
          %s3332 = scalar_lea.hbm %s4, %s3331
          %s3333 = sshll.u32 %s3309, 4
          %s3334 = int_to_ptr.vmem [resolvable:$true] %s3333
          %s3335 = sshll.u32 %s3332, 4
          %s3336 = int_to_ptr.hbm [resolvable:$true] %s3335
          %3341 = dma.vmem_to_hbm [thread:$0]  %s3334, 512, %s3336, %s3306, 128, 256, 8
        $region40: #{tpu_custom_call.1} parent=35 // pred_fallthru
          _
        // Predicated region
        $region41: #{tpu_custom_call.1} parent=35 // pred_check
          %p3342 = pneg %p180
        $region42: #{tpu_custom_call.1} parent=35 // pred_check_branch
          %3344 = sbr.rel (%p3342) target = $region44
        $region43: #{tpu_custom_call.1} parent=35 // pred_region
          %3346 = vsyncadd %s3311, 0
          %s3347 = smul.addr %s28, 8
          %s3348 = sadd.s32 %s29, %s3347
          %s3349 = smul.addr %s3348, 8
          %s3350 = scalar_lea.hbm %s5, %s3349
          %s3351 = sshll.u32 %s3314, 4
          %s3352 = int_to_ptr.vmem [resolvable:$true] %s3351
          %s3353 = sshll.u32 %s3350, 4
          %s3354 = int_to_ptr.hbm [resolvable:$true] %s3353
          %3359 = dma.vmem_to_hbm [thread:$0]  %s3352, 512, %s3354, %s3311, 128, 256, 8
        $region44: #{tpu_custom_call.1} parent=35 // pred_fallthru
          _
        // Predicated region
        $region45: #{tpu_custom_call.1} parent=35 // pred_check
          %p3360 = pneg %p208
        $region46: #{tpu_custom_call.1} parent=35 // pred_check_branch
          %3362 = sbr.rel (%p3360) target = $region48
        $region47: #{tpu_custom_call.1} parent=35 // pred_region
          %s3363 = smul.u32 16, %s29
        $region48: #{tpu_custom_call.1} parent=35 // pred_fallthru
          _
      $region36: #{tpu_custom_call.1} parent=5 // pred_fallthru
        _
      %p3364 = scmp.le.s32.totalorder 2, %s19
      // Predicated region
      $region49: #{tpu_custom_call.1} parent=5 // pred_check
        %p3365 = pneg %p3364
      $region50: #{tpu_custom_call.1} parent=5 // pred_check_branch
        %3367 = sbr.rel (%p3365) target = $region52
      $region51: #{tpu_custom_call.1} parent=5 // pred_region
        %s3368 = ssub.s32 %s19, 2
        // Predicated region
        $region53: #{tpu_custom_call.1} parent=51 // pred_check
          %p3369 = pneg %p158
        $region54: #{tpu_custom_call.1} parent=51 // pred_check_branch
          %3371 = sbr.rel (%p3369) target = $region56
        $region55: #{tpu_custom_call.1} parent=51 // pred_region
          %s3372 = sand.u32 %s143, 1
          %s3373 = scalar_lea.sflag [#allocation3], %s3372
          %s3374 = sand.u32 %s143, 1
          %s3375 = smul.addr %s3374, 32
          %s3376 = scalar_lea.vmem [#allocation2], %s3375
          %3378 = dma.done %s3373, 512
        $region56: #{tpu_custom_call.1} parent=51 // pred_fallthru
          _
        // Predicated region
        $region57: #{tpu_custom_call.1} parent=51 // pred_check
          %p3379 = pneg %p186
        $region58: #{tpu_custom_call.1} parent=51 // pred_check_branch
          %3381 = sbr.rel (%p3379) target = $region60
        $region59: #{tpu_custom_call.1} parent=51 // pred_region
          %s3382 = sand.u32 %s171, 1
          %s3383 = scalar_lea.sflag [#allocation5], %s3382
          %s3384 = sand.u32 %s171, 1
          %s3385 = smul.addr %s3384, 32
          %s3386 = scalar_lea.vmem [#allocation4], %s3385
          %3388 = dma.done %s3383, 512
        $region60: #{tpu_custom_call.1} parent=51 // pred_fallthru
          _
        // Predicated region
        $region61: #{tpu_custom_call.1} parent=51 // pred_check
          %p3389 = pneg %p214
        $region62: #{tpu_custom_call.1} parent=51 // pred_check_branch
          %3391 = sbr.rel (%p3389) target = $region64
        $region63: #{tpu_custom_call.1} parent=51 // pred_region
          %s3392 = smul.u32 16, %s31
          %p3393 = scmp.lt.s32.totalorder %s30, 1
          %s3394 = scalar_select %p3393, %s30, 1
          %p3395 = scmp.lt.s32.totalorder %s3392, 31
          %s3396 = scalar_select %p3395, %s3392, 31
          %s3397 = smul.addr %s3394, 32
          %s3398 = sadd.s32 %s3396, %s3397
          %s3399 = smul.addr %s3398, 8
          %s3400 = scalar_lea.vmem %s6, %s3399
        $region64: #{tpu_custom_call.1} parent=51 // pred_fallthru
          _
      $region52: #{tpu_custom_call.1} parent=5 // pred_fallthru
        _
    $region6: #{tpu_custom_call.1} parent=1 // loop_footer
      %s23 = sadd.s32 1, %s19
    $region7: #{tpu_custom_call.1} parent=1 // loop_footer_branch
      %18 = sbr.rel target = $region3
    $region8: #{tpu_custom_call.1} parent=1 // loop_exit
      _
    %3401 = vsyncpa [#allocation3], 1
    %s3402 = scalar_lea.sflag [#allocation3], 1
    %3403 = vsyncpa %s3402, 1
    %3404 = vsyncpa [#allocation5], 1
    %s3405 = scalar_lea.sflag [#allocation5], 1
    %3406 = vsyncpa %s3405, 1

</llo_original>
